<compile_context>
chip_gen: v5e
topology: v5e:2x2
jax: 0.10.0
libtpu: 0.0.40
codegen_flags: <defaults>
</compile_context>

<pallas_src>
import functools
import math

import jax
import jax.numpy as jnp
from jax.experimental import pallas as pl
from jax.experimental.pallas import tpu as pltpu

_VMEM_LIMIT = 64 * 1024 * 1024


# ----------------------------- tiled linear ---------------------------------

def _pick_tile(dim, cap=1024, align=128):
    """Largest `align`-multiple divisor of `dim` that is <= cap; if dim <= cap
    or no aligned divisor exists, use the full dim (always legal)."""
    if dim <= cap:
        return dim
    best = dim
    for t in range(align, cap + 1, align):
        if dim % t == 0:
            best = t
    return best


def _linear_kernel(x_ref, w_ref, b_ref, o_ref, acc_ref):
    k = pl.program_id(2)

    @pl.when(k == 0)
    def _():
        acc_ref[...] = jnp.zeros_like(acc_ref)

    acc_ref[...] += jnp.dot(x_ref[...].astype(jnp.bfloat16), w_ref[...],
                            preferred_element_type=jnp.float32)

    @pl.when(k == pl.num_programs(2) - 1)
    def _():
        y = acc_ref[...] + b_ref[...].astype(jnp.float32)
        o_ref[...] = y.astype(o_ref.dtype)


def linear(x, w, b):
    """Tiled, pipelined (x @ w + b): bf16 MXU inputs, f32 accumulation."""
    lead = x.shape[:-1]
    K = x.shape[-1]
    N = w.shape[-1]
    M = int(math.prod(lead)) if lead else 1
    x2 = x.reshape(M, K)
    b2 = b.reshape(1, N)

    tm = _pick_tile(M, cap=512, align=8)
    tn = _pick_tile(N, cap=1024, align=128)
    tk = _pick_tile(K, cap=1024, align=128)
    grid = (M // tm, N // tn, K // tk)

    out = pl.pallas_call(
        _linear_kernel,
        out_shape=jax.ShapeDtypeStruct((M, N), x.dtype),
        grid=grid,
        in_specs=[
            pl.BlockSpec((tm, tk), lambda i, j, k: (i, k)),
            pl.BlockSpec((tk, tn), lambda i, j, k: (k, j)),
            pl.BlockSpec((1, tn), lambda i, j, k: (0, j)),
        ],
        out_specs=pl.BlockSpec((tm, tn), lambda i, j, k: (i, j)),
        scratch_shapes=[pltpu.VMEM((tm, tn), jnp.float32)],
        compiler_params=pltpu.CompilerParams(
            dimension_semantics=("parallel", "parallel", "arbitrary"),
            vmem_limit_bytes=_VMEM_LIMIT),
    )(x2, w, b2)
    return out.reshape(*lead, N)


# --------------------- fused TimestepEmbedding MLP ---------------------------

def _time_mlp_kernel(tf_ref, w1_ref, b1_ref, w2_ref, b2_ref, o_ref):
    h = jnp.dot(tf_ref[...].astype(jnp.bfloat16), w1_ref[...],
                preferred_element_type=jnp.float32)
    h = h + b1_ref[...].astype(jnp.float32)
    h = h * jax.nn.sigmoid(h)                       # TimestepEmbedding act (f32)
    h = jnp.dot(h.astype(jnp.bfloat16), w2_ref[...],
                preferred_element_type=jnp.float32)
    h = h + b2_ref[...].astype(jnp.float32)
    h = h * jax.nn.sigmoid(h)                       # SiLU applied by the resampler
    o_ref[...] = h.astype(o_ref.dtype)


def time_mlp(tf, w1, b1, w2, b2):
    B, C = tf.shape
    H = w1.shape[1]
    D = w2.shape[1]
    return pl.pallas_call(
        _time_mlp_kernel,
        out_shape=jax.ShapeDtypeStruct((B, D), tf.dtype),
        grid=(1,),
        in_specs=[
            pl.BlockSpec((B, C), lambda i: (0, 0)),
            pl.BlockSpec((C, H), lambda i: (0, 0)),
            pl.BlockSpec((1, H), lambda i: (0, 0)),
            pl.BlockSpec((H, D), lambda i: (0, 0)),
            pl.BlockSpec((1, D), lambda i: (0, 0)),
        ],
        out_specs=pl.BlockSpec((B, D), lambda i: (0, 0)),
        compiler_params=pltpu.CompilerParams(dimension_semantics=("arbitrary",)),
    )(tf, w1, b1.reshape(1, H), w2, b2.reshape(1, D))


# ------------------ fully fused PerceiverAttentionBlock ----------------------

def _perceiver_block_kernel(cond_ref, x_ref, lat_ref,
                            wqkv_ref, bqkv_ref, wkv_ref, bkv_ref,
                            wo_ref, bo_ref, wfc_ref, bfc_ref,
                            wproj_ref, bproj_ref,
                            o_ref, attn_acc, *, heads, width):
    W = width
    dh = W // heads
    inv_sqrt_dh = 1.0 / math.sqrt(dh)

    lat = lat_ref[0].astype(jnp.float32)        # [Tl, W]
    x = x_ref[0].astype(jnp.float32)            # [S,  W]
    cond = cond_ref[0].astype(jnp.float32)      # [6,  W]  rows: sh1 sc1 sh2 sc2 shf scf

    def adaln(y, r):
        # two-pass f32 layernorm statistics (eps = 1e-6) + FiLM modulation.
        mean = jnp.mean(y, axis=-1, keepdims=True)
        cen = y - mean
        var = jnp.mean(cen * cen, axis=-1, keepdims=True)
        yn = cen * jax.lax.rsqrt(var + 1e-6)
        return yn * (1.0 + cond[r + 1:r + 2, :]) + cond[r:r + 1, :]

    # ---- AdaLN(ln_1) + fused QKV projection of the latents -----------------
    nl = adaln(lat, 0).astype(jnp.bfloat16)
    qkv = jnp.dot(nl, wqkv_ref[...], preferred_element_type=jnp.float32)
    qkv = qkv + bqkv_ref[...].astype(jnp.float32)                 # [Tl, 3W]

    # ---- AdaLN(ln_2) + fused KV projection of the text tokens --------------
    nx = adaln(x, 2).astype(jnp.bfloat16)
    kvx = jnp.dot(nx, wkv_ref[...], preferred_element_type=jnp.float32)
    kvx = kvx + bkv_ref[...].astype(jnp.float32)                  # [S, 2W]

    # ---- multi-head attention: K/V concat hoisted out of the head loop -----
    q_all = qkv[:, :W].astype(jnp.bfloat16)                       # [Tl, W]
    k_full = jnp.concatenate([qkv[:, W:2 * W], kvx[:, :W]],
                             axis=0).astype(jnp.bfloat16)         # [Lk, W]
    v_full = jnp.concatenate([qkv[:, 2 * W:], kvx[:, W:]],
                             axis=0).astype(jnp.bfloat16)         # [Lk, W]
    wo = wo_ref[...]                                              # bf16 [W, W]

    attn_acc[...] = jnp.zeros_like(attn_acc)
    # TODO(synk): on v6e/v7x with dh a sub-128 lane width, process 2 heads per
    # 128-lane-aligned slice (two stacked dots) for better MXU utilization.
    for h in range(heads):
        lo = h * dh
        q_h = q_all[:, lo:lo + dh]
        k_h = k_full[:, lo:lo + dh]
        v_h = v_full[:, lo:lo + dh]
        s = jax.lax.dot_general(q_h, k_h, (((1,), (1,)), ((), ())),
                                preferred_element_type=jnp.float32)
        s = s * inv_sqrt_dh
        s = s - jnp.max(s, axis=-1, keepdims=True)
        p = jnp.exp(s)                                            # f32 softmax
        p = p * pl.reciprocal(jnp.sum(p, axis=-1, keepdims=True), approx=True)
        o_h = jnp.dot(p.astype(jnp.bfloat16), v_h,
                      preferred_element_type=jnp.float32)         # [Tl, dh]
        # fold the head output straight into the out-projection (VMEM scratch acc)
        attn_acc[...] += jnp.dot(o_h.astype(jnp.bfloat16), wo[lo:lo + dh, :],
                                 preferred_element_type=jnp.float32)

    lat2 = lat + attn_acc[...] + bo_ref[...].astype(jnp.float32)  # [Tl, W]

    # ---- AdaLN(ln_ff) + MLP (c_fc -> squared ReLU -> c_proj) + residual ----
    nf = adaln(lat2, 4).astype(jnp.bfloat16)
    h1 = jnp.dot(nf, wfc_ref[...], preferred_element_type=jnp.float32)
    h1 = h1 + bfc_ref[...].astype(jnp.float32)
    h1 = jnp.maximum(h1, 0.0)
    h1 = (h1 * h1).astype(jnp.bfloat16)
    out = jnp.dot(h1, wproj_ref[...], preferred_element_type=jnp.float32)
    out = lat2 + out + bproj_ref[...].astype(jnp.float32)
    o_ref[0] = out.astype(o_ref.dtype)


def perceiver_block(cond_l, x, latents, blk, heads):
    B, Tl, W = latents.shape
    S = x.shape[1]
    kernel = functools.partial(_perceiver_block_kernel, heads=heads, width=W)
    return pl.pallas_call(
        kernel,
        out_shape=jax.ShapeDtypeStruct((B, Tl, W), latents.dtype),
        grid=(B,),
        in_specs=[
            pl.BlockSpec((1, 6, W), lambda b_: (b_, 0, 0)),       # cond rows
            pl.BlockSpec((1, S, W), lambda b_: (b_, 0, 0)),       # x (proj_in out)
            pl.BlockSpec((1, Tl, W), lambda b_: (b_, 0, 0)),      # latents
            pl.BlockSpec((W, 3 * W), lambda b_: (0, 0)),          # wqkv (bf16)
            pl.BlockSpec((1, 3 * W), lambda b_: (0, 0)),
            pl.BlockSpec((W, 2 * W), lambda b_: (0, 0)),          # wkv  (bf16)
            pl.BlockSpec((1, 2 * W), lambda b_: (0, 0)),
            pl.BlockSpec((W, W), lambda b_: (0, 0)),              # wo   (bf16)
            pl.BlockSpec((1, W), lambda b_: (0, 0)),
            pl.BlockSpec((W, 4 * W), lambda b_: (0, 0)),          # c_fc (bf16)
            pl.BlockSpec((1, 4 * W), lambda b_: (0, 0)),
            pl.BlockSpec((4 * W, W), lambda b_: (0, 0)),          # c_proj (bf16)
            pl.BlockSpec((1, W), lambda b_: (0, 0)),
        ],
        out_specs=pl.BlockSpec((1, Tl, W), lambda b_: (b_, 0, 0)),
        scratch_shapes=[pltpu.VMEM((Tl, W), jnp.float32)],        # attn out-proj acc
        compiler_params=pltpu.CompilerParams(
            dimension_semantics=("parallel",),
            vmem_limit_bytes=_VMEM_LIMIT),
    )(cond_l, x, latents,
      blk["wqkv"], blk["bqkv"].reshape(1, -1),
      blk["wkv"], blk["bkv"].reshape(1, -1),
      blk["wo"], blk["bo"].reshape(1, -1),
      blk["mlp_wfc"], blk["mlp_bfc"].reshape(1, -1),
      blk["mlp_wproj"], blk["mlp_bproj"].reshape(1, -1))


# ------------------------------ model glue ----------------------------------

def get_timestep_embedding(timesteps, embedding_dim, flip_sin_to_cos=False,
                           downscale_freq_shift=1.0, scale=1.0, max_period=10000):
    half_dim = embedding_dim // 2
    exponent = -math.log(max_period) * jnp.arange(half_dim, dtype=jnp.float32)
    exponent = exponent / (half_dim - downscale_freq_shift)
    emb = jnp.exp(exponent)
    emb = timesteps.astype(jnp.float32)[:, None] * emb[None, :]
    emb = scale * emb
    emb = jnp.concatenate([jnp.sin(emb), jnp.cos(emb)], axis=-1)
    if flip_sin_to_cos:
        emb = jnp.concatenate([emb[:, half_dim:], emb[:, :half_dim]], axis=-1)
    if embedding_dim % 2 == 1:
        emb = jnp.pad(emb, ((0, 0), (0, 1)))
    return emb


def ella_forward(params, timesteps, t5_embeds, cfg):
    W = cfg["width"]
    L = cfg["layers"]
    heads = cfg["heads"]
    B = t5_embeds.shape[0]

    # Timesteps (flip_sin_to_cos=True, downscale_freq_shift=0) — tiny, plain JAX.
    tf = get_timestep_embedding(timesteps.reshape(-1), cfg["time_channel"],
                                flip_sin_to_cos=True, downscale_freq_shift=0.0)
    tf = tf.astype(t5_embeds.dtype)
    if tf.shape[0] != B:
        tf = jnp.broadcast_to(tf, (B, tf.shape[-1]))

    # TimestepEmbedding MLP fused with the SiLU the resampler applies afterwards.
    silu_te = time_mlp(tf, params["te_w1"], params["te_b1"],
                       params["te_w2"], params["te_b2"])            # [B, Dt]

    c = params["connector"]
    # ONE matmul for time_aware_linear + every per-block AdaLayerNorm linear.
    cond = linear(silu_te, c["cond_w"], c["cond_b"])                # [B, W + 6*W*L]
    latents = c["latents"][None, :, :] + cond[:, None, :W]          # [B, Tl, W]
    cond_blocks = cond[:, W:].reshape(B, L, 6, W)                   # single reshape
    x = linear(t5_embeds, c["in_w"], c["in_b"])                     # proj_in [B,S,W]

    for l, blk in enumerate(c["blocks"]):
        # One fused kernel per PerceiverAttentionBlock.
        latents = perceiver_block(cond_blocks[:, l], x, latents, blk, heads)

    return latents   # output_dim is None in ELLAModel -> no proj_out


# ------------------------- pure-JAX reference --------------------------------
# Matches the kernels' mixed precision: bf16 MXU inputs, f32 accumulation and
# f32 elementwise math.  Remaining difference: approx reciprocal in softmax.

def _silu(x):
    return x * jax.nn.sigmoid(x)


def _mm(a, w, b=None):
    y = jnp.dot(a.astype(jnp.bfloat16), w, preferred_element_type=jnp.float32)
    if b is not None:
        y = y + b.astype(jnp.float32)
    return y


def ella_forward_ref(params, timesteps, t5_embeds, cfg):
    W, L, heads = cfg["width"], cfg["layers"], cfg["heads"]
    B = t5_embeds.shape[0]
    tf = get_timestep_embedding(timesteps.reshape(-1), cfg["time_channel"],
                                flip_sin_to_cos=True, downscale_freq_shift=0.0)
    tf = tf.astype(t5_embeds.dtype)
    if tf.shape[0] != B:
        tf = jnp.broadcast_to(tf, (B, tf.shape[-1]))

    te = _mm(_silu(_mm(tf, params["te_w1"], params["te_b1"])),
             params["te_w2"], params["te_b2"])
    silu_te = _silu(te)
    c = params["connector"]
    cond = _mm(silu_te, c["cond_w"], c["cond_b"])
    latents = c["latents"][None, :, :] + cond[:, None, :W]
    cond_blocks = cond[:, W:].reshape(B, L, 6, W)
    x = _mm(t5_embeds, c["in_w"], c["in_b"])

    def adaln(y, shift, scale):
        mean = jnp.mean(y, axis=-1, keepdims=True)
        cen = y - mean
        var = jnp.mean(cen * cen, axis=-1, keepdims=True)
        yn = cen * jax.lax.rsqrt(var + 1e-6)
        return yn * (1.0 + scale[:, None, :]) + shift[:, None, :]

    for l, blk in enumerate(c["blocks"]):
        cb = cond_blocks[:, l]
        sh1, sc1, sh2, sc2, shf, scf = (cb[:, i] for i in range(6))

        nl = adaln(latents, sh1, sc1)
        nx = adaln(x, sh2, sc2)
        qkv = _mm(nl, blk["wqkv"], blk["bqkv"])
        kvx = _mm(nx, blk["wkv"], blk["bkv"])
        q = qkv[..., :W]
        k = jnp.concatenate([qkv[..., W:2 * W], kvx[..., :W]], axis=1)
        v = jnp.concatenate([qkv[..., 2 * W:], kvx[..., W:]], axis=1)
        Tl, Lk, dh = q.shape[1], k.shape[1], W // heads
        qh = q.reshape(B, Tl, heads, dh).astype(jnp.bfloat16)
        kh = k.reshape(B, Lk, heads, dh).astype(jnp.bfloat16)
        vh = v.reshape(B, Lk, heads, dh).astype(jnp.bfloat16)
        s = jnp.einsum("bqhd,bkhd->bhqk", qh, kh,
                       preferred_element_type=jnp.float32) / math.sqrt(dh)
        p = jax.nn.softmax(s, axis=-1)
        o = jnp.einsum("bhqk,bkhd->bqhd", p.astype(jnp.bfloat16), vh,
                       preferred_element_type=jnp.float32).reshape(B, Tl, W)
        latents = latents + _mm(o, blk["wo"], blk["bo"])
        hh = adaln(latents, shf, scf)
        hh = jnp.square(jnp.maximum(_mm(hh, blk["mlp_wfc"], blk["mlp_bfc"]), 0.0))
        latents = latents + _mm(hh, blk["mlp_wproj"], blk["mlp_bproj"])
    return latents


# ------------------------------- params --------------------------------------

def init_params(key, cfg):
    # Note: the torch module zero-inits the AdaLayerNorm linears; we use small
    # deterministic random values so the kernels are actually exercised.
    # Weights live in HBM as bf16 (MXU inputs); biases / latents stay f32.
    tc, dt = cfg["time_channel"], cfg["time_embed_dim"]
    W, din, nl, L = cfg["width"], cfg["input_dim"], cfg["num_latents"], cfg["layers"]
    counter = [0]

    def dense(shape, std=0.05, dtype=jnp.bfloat16):
        counter[0] += 1
        w = std * jax.random.normal(jax.random.fold_in(key, counter[0]), shape)
        return w.astype(dtype)

    def bias(shape):
        return dense(shape, dtype=jnp.float32)

    params = {
        "te_w1": dense((tc, dt)), "te_b1": bias((dt,)),
        "te_w2": dense((dt, dt)), "te_b2": bias((dt,)),
        "connector": {
            "latents": ((W ** -0.5) * jax.random.normal(
                jax.random.fold_in(key, 10_000), (nl, W))).astype(jnp.float32),
            "in_w": dense((din, W)), "in_b": bias((W,)),
            # fused [time_aware_linear | per block (ln_1 | ln_2 | ln_ff)] weights
            "cond_w": dense((dt, W + 6 * W * L)),
            "cond_b": bias((W + 6 * W * L,)),
            "blocks": [],
        },
    }
    for _ in range(L):
        wqkv = dense((W, 3 * W))
        bqkv = bias((3 * W,))
        blk = {
            "wqkv": wqkv, "bqkv": bqkv,
            # K/V projection shared with the x branch (same torch in_proj weights)
            "wkv": wqkv[:, W:], "bkv": bqkv[W:],
            "wo": dense((W, W)), "bo": bias((W,)),
            "mlp_wfc": dense((W, 4 * W)), "mlp_bfc": bias((4 * W,)),
            "mlp_wproj": dense((4 * W, W)), "mlp_bproj": bias((W,)),
        }
        params["connector"]["blocks"].append(blk)
    return params


if __name__ == "__main__":
    cfg = dict(time_channel=32, time_embed_dim=64, width=64, layers=2,
               heads=4, num_latents=8, input_dim=32)
    B, S = 2, 8

    key = jax.random.PRNGKey(0)
    kp, kx = jax.random.split(key)
    params = init_params(kp, cfg)
    t5_embeds = jax.random.normal(kx, (B, S, cfg["input_dim"]), dtype=jnp.float32)
    timesteps = jnp.array([3.0, 17.0], dtype=jnp.float32)

    fwd = jax.jit(functools.partial(ella_forward, cfg=cfg))
    out = jax.block_until_ready(fwd(params, timesteps, t5_embeds))

    ref = jax.block_until_ready(ella_forward_ref(params, timesteps, t5_embeds, cfg))

    assert out.shape == (B, cfg["num_latents"], cfg["width"]), out.shape
    max_err = float(jnp.max(jnp.abs(out - ref)))
    # bf16 MXU inputs + approx softmax reciprocal -> modest absolute tolerance.
    assert max_err < 1e-2, f"pallas/reference mismatch: max_err={max_err}"
    print("KERNEL_OK")
</pallas_src>

<mosaic_0001>
module attributes {stable_mosaic.version = 11 : i64} {
  func.func @_time_mlp_kernel(%arg0: i32, %arg1: memref<2x32xf32, #tpu.memory_space<vmem>>, %arg2: memref<32x64xbf16, #tpu.memory_space<vmem>>, %arg3: memref<1x64xf32, #tpu.memory_space<vmem>>, %arg4: memref<64x64xbf16, #tpu.memory_space<vmem>>, %arg5: memref<1x64xf32, #tpu.memory_space<vmem>>, %arg6: memref<2x64xf32, #tpu.memory_space<vmem>>) attributes {dimension_semantics = [#tpu.dimension_semantics<arbitrary>], iteration_bounds = array<i64: 1>, scalar_prefetch = 0 : i64, scratch_operands = 0 : i64, tpu.core_type = #tpu.core_type<tc>, window_params = [{pipeline_mode = #tpu.pipeline_mode<synchronous>, transform_indices = @transform_0, window_bounds = array<i64: 2, 32>}, {pipeline_mode = #tpu.pipeline_mode<synchronous>, transform_indices = @transform_1, window_bounds = array<i64: 32, 64>}, {pipeline_mode = #tpu.pipeline_mode<synchronous>, transform_indices = @transform_2, window_bounds = array<i64: 1, 64>}, {pipeline_mode = #tpu.pipeline_mode<synchronous>, transform_indices = @transform_3, window_bounds = array<i64: 64, 64>}, {pipeline_mode = #tpu.pipeline_mode<synchronous>, transform_indices = @transform_4, window_bounds = array<i64: 1, 64>}, {pipeline_mode = #tpu.pipeline_mode<synchronous>, transform_indices = @transform_5, window_bounds = array<i64: 2, 64>}]} {
    %c0 = arith.constant 0 : index
    %c0_0 = arith.constant 0 : index
    %0 = vector.load %arg1[%c0, %c0_0] : memref<2x32xf32, #tpu.memory_space<vmem>>, vector<2x32xf32>
    %1 = arith.truncf %0 : vector<2x32xf32> to vector<2x32xbf16>
    %c0_1 = arith.constant 0 : index
    %c0_2 = arith.constant 0 : index
    %2 = vector.load %arg2[%c0_1, %c0_2] : memref<32x64xbf16, #tpu.memory_space<vmem>>, vector<32x64xbf16>
    %cst = arith.constant dense<0.000000e+00> : vector<2x64xf32>
    %3 = tpu.matmul %1, %2, %cst {dimension_numbers = #tpu.dot_dimension_numbers<[1], [0], [0], [1], [0, 0, 1, 1], [], []>} : vector<2x32xbf16>, vector<32x64xbf16>, vector<2x64xf32> -> vector<2x64xf32>
    %c0_3 = arith.constant 0 : index
    %c0_4 = arith.constant 0 : index
    %4 = vector.load %arg3[%c0_3, %c0_4] : memref<1x64xf32, #tpu.memory_space<vmem>>, vector<1x64xf32>
    %5 = vector.broadcast %4 : vector<1x64xf32> to vector<2x64xf32>
    %6 = arith.addf %3, %5 : vector<2x64xf32>
    %7 = arith.negf %6 : vector<2x64xf32>
    %8 = math.exp %7 : vector<2x64xf32>
    %cst_5 = arith.constant 1.000000e+00 : f32
    %9 = vector.broadcast %cst_5 : f32 to vector<2x64xf32>
    %10 = arith.addf %9, %8 : vector<2x64xf32>
    %11 = arith.divf %9, %10 : vector<2x64xf32>
    %12 = arith.mulf %6, %11 : vector<2x64xf32>
    %13 = arith.truncf %12 : vector<2x64xf32> to vector<2x64xbf16>
    %c0_6 = arith.constant 0 : index
    %c0_7 = arith.constant 0 : index
    %14 = vector.load %arg4[%c0_6, %c0_7] : memref<64x64xbf16, #tpu.memory_space<vmem>>, vector<64x64xbf16>
    %cst_8 = arith.constant dense<0.000000e+00> : vector<2x64xf32>
    %15 = tpu.matmul %13, %14, %cst_8 {dimension_numbers = #tpu.dot_dimension_numbers<[1], [0], [0], [1], [0, 0, 1, 1], [], []>} : vector<2x64xbf16>, vector<64x64xbf16>, vector<2x64xf32> -> vector<2x64xf32>
    %c0_9 = arith.constant 0 : index
    %c0_10 = arith.constant 0 : index
    %16 = vector.load %arg5[%c0_9, %c0_10] : memref<1x64xf32, #tpu.memory_space<vmem>>, vector<1x64xf32>
    %17 = vector.broadcast %16 : vector<1x64xf32> to vector<2x64xf32>
    %18 = arith.addf %15, %17 : vector<2x64xf32>
    %19 = arith.negf %18 : vector<2x64xf32>
    %20 = math.exp %19 : vector<2x64xf32>
    %cst_11 = arith.constant 1.000000e+00 : f32
    %21 = vector.broadcast %cst_11 : f32 to vector<2x64xf32>
    %22 = arith.addf %21, %20 : vector<2x64xf32>
    %23 = arith.divf %21, %22 : vector<2x64xf32>
    %24 = arith.mulf %18, %23 : vector<2x64xf32>
    %c0_12 = arith.constant 0 : index
    %c0_13 = arith.constant 0 : index
    %25 = vector.load %arg6[%c0_12, %c0_13] : memref<2x64xf32, #tpu.memory_space<vmem>>, vector<2x64xf32>
    tpu.vector_store %arg6[%c0_12, %c0_13], %24 {strides = array<i32>} : memref<2x64xf32, #tpu.memory_space<vmem>>, vector<2x64xf32>,
    return
  }
  func.func @transform_0(%arg0: i32) -> (i32, i32) {
    %c0_i32 = arith.constant 0 : i32
    %c0_i32_0 = arith.constant 0 : i32
    %c0_i32_1 = arith.constant 0 : i32
    return %c0_i32, %c0_i32_0 : i32, i32
  }
  func.func @transform_1(%arg0: i32) -> (i32, i32) {
    %c0_i32 = arith.constant 0 : i32
    %c0_i32_0 = arith.constant 0 : i32
    %c0_i32_1 = arith.constant 0 : i32
    return %c0_i32, %c0_i32_0 : i32, i32
  }
  func.func @transform_2(%arg0: i32) -> (i32, i32) {
    %c0_i32 = arith.constant 0 : i32
    %c0_i32_0 = arith.constant 0 : i32
    %c0_i32_1 = arith.constant 0 : i32
    return %c0_i32, %c0_i32_0 : i32, i32
  }
  func.func @transform_3(%arg0: i32) -> (i32, i32) {
    %c0_i32 = arith.constant 0 : i32
    %c0_i32_0 = arith.constant 0 : i32
    %c0_i32_1 = arith.constant 0 : i32
    return %c0_i32, %c0_i32_0 : i32, i32
  }
  func.func @transform_4(%arg0: i32) -> (i32, i32) {
    %c0_i32 = arith.constant 0 : i32
    %c0_i32_0 = arith.constant 0 : i32
    %c0_i32_1 = arith.constant 0 : i32
    return %c0_i32, %c0_i32_0 : i32, i32
  }
  func.func @transform_5(%arg0: i32) -> (i32, i32) {
    %c0_i32 = arith.constant 0 : i32
    %c0_i32_0 = arith.constant 0 : i32
    %c0_i32_1 = arith.constant 0 : i32
    return %c0_i32, %c0_i32_0 : i32, i32
  }
}

module attributes {stable_mosaic.version = 11 : i64} {
  func.func @_linear_kernel(%arg0: i32, %arg1: i32, %arg2: i32, %arg3: memref<2x64xf32, #tpu.memory_space<vmem>>, %arg4: memref<64x832xbf16, #tpu.memory_space<vmem>>, %arg5: memref<1x832xf32, #tpu.memory_space<vmem>>, %arg6: memref<2x832xf32, #tpu.memory_space<vmem>>, %arg7: memref<2x832xf32, #tpu.memory_space<vmem>>) attributes {dimension_semantics = [#tpu.dimension_semantics<parallel>, #tpu.dimension_semantics<parallel>, #tpu.dimension_semantics<arbitrary>], iteration_bounds = array<i64: 1, 1, 1>, scalar_prefetch = 0 : i64, scratch_operands = 1 : i64, tpu.core_type = #tpu.core_type<tc>, window_params = [{transform_indices = @transform_0, window_bounds = array<i64: 2, 64>}, {transform_indices = @transform_1, window_bounds = array<i64: 64, 832>}, {transform_indices = @transform_2, window_bounds = array<i64: 1, 832>}, {transform_indices = @transform_3, window_bounds = array<i64: 2, 832>}]} {
    %c0_i32 = arith.constant 0 : i32
    %0 = arith.cmpi eq, %arg2, %c0_i32 : i32
    %1 = arith.extui %0 : i1 to i32
    %c0_i32_0 = arith.constant 0 : i32
    %2 = arith.cmpi ne, %1, %c0_i32_0 : i32
    scf.if %2 {
      %cst_10 = arith.constant 0.000000e+00 : f32
      %13 = vector.broadcast %cst_10 : f32 to vector<2x832xf32>
      %c0_11 = arith.constant 0 : index
      %c0_12 = arith.constant 0 : index
      %14 = vector.load %arg7[%c0_11, %c0_12] : memref<2x832xf32, #tpu.memory_space<vmem>>, vector<2x832xf32>
      tpu.vector_store %arg7[%c0_11, %c0_12], %13 {strides = array<i32>} : memref<2x832xf32, #tpu.memory_space<vmem>>, vector<2x832xf32>,
    } else {
    }
    %c0 = arith.constant 0 : index
    %c0_1 = arith.constant 0 : index
    %3 = vector.load %arg7[%c0, %c0_1] : memref<2x832xf32, #tpu.memory_space<vmem>>, vector<2x832xf32>
    %c0_2 = arith.constant 0 : index
    %c0_3 = arith.constant 0 : index
    %4 = vector.load %arg3[%c0_2, %c0_3] : memref<2x64xf32, #tpu.memory_space<vmem>>, vector<2x64xf32>
    %5 = arith.truncf %4 : vector<2x64xf32> to vector<2x64xbf16>
    %c0_4 = arith.constant 0 : index
    %c0_5 = arith.constant 0 : index
    %6 = vector.load %arg4[%c0_4, %c0_5] : memref<64x832xbf16, #tpu.memory_space<vmem>>, vector<64x832xbf16>
    %cst = arith.constant dense<0.000000e+00> : vector<2x832xf32>
    %7 = tpu.matmul %5, %6, %cst {dimension_numbers = #tpu.dot_dimension_numbers<[1], [0], [0], [1], [0, 0, 1, 1], [], []>} : vector<2x64xbf16>, vector<64x832xbf16>, vector<2x832xf32> -> vector<2x832xf32>
    %8 = arith.addf %3, %7 : vector<2x832xf32>
    %c0_6 = arith.constant 0 : index
    %c0_7 = arith.constant 0 : index
    %9 = vector.load %arg7[%c0_6, %c0_7] : memref<2x832xf32, #tpu.memory_space<vmem>>, vector<2x832xf32>
    tpu.vector_store %arg7[%c0_6, %c0_7], %8 {strides = array<i32>} : memref<2x832xf32, #tpu.memory_space<vmem>>, vector<2x832xf32>,
    %c0_i32_8 = arith.constant 0 : i32
    %10 = arith.cmpi eq, %arg2, %c0_i32_8 : i32
    %11 = arith.extui %10 : i1 to i32
    %c0_i32_9 = arith.constant 0 : i32
    %12 = arith.cmpi ne, %11, %c0_i32_9 : i32
    scf.if %12 {
      %c0_10 = arith.constant 0 : index
      %c0_11 = arith.constant 0 : index
      %13 = vector.load %arg7[%c0_10, %c0_11] : memref<2x832xf32, #tpu.memory_space<vmem>>, vector<2x832xf32>
      %c0_12 = arith.constant 0 : index
      %c0_13 = arith.constant 0 : index
      %14 = vector.load %arg5[%c0_12, %c0_13] : memref<1x832xf32, #tpu.memory_space<vmem>>, vector<1x832xf32>
      %15 = vector.broadcast %14 : vector<1x832xf32> to vector<2x832xf32>
      %16 = arith.addf %13, %15 : vector<2x832xf32>
      %c0_14 = arith.constant 0 : index
      %c0_15 = arith.constant 0 : index
      %17 = vector.load %arg6[%c0_14, %c0_15] : memref<2x832xf32, #tpu.memory_space<vmem>>, vector<2x832xf32>
      tpu.vector_store %arg6[%c0_14, %c0_15], %16 {strides = array<i32>} : memref<2x832xf32, #tpu.memory_space<vmem>>, vector<2x832xf32>,
    } else {
    }
    return
  }
  func.func @transform_0(%arg0: i32, %arg1: i32, %arg2: i32) -> (i32, i32) {
    %c0_i32 = arith.constant 0 : i32
    return %arg0, %arg2 : i32, i32
  }
  func.func @transform_1(%arg0: i32, %arg1: i32, %arg2: i32) -> (i32, i32) {
    %c0_i32 = arith.constant 0 : i32
    return %arg2, %arg1 : i32, i32
  }
  func.func @transform_2(%arg0: i32, %arg1: i32, %arg2: i32) -> (i32, i32) {
    %c0_i32 = arith.constant 0 : i32
    %c0_i32_0 = arith.constant 0 : i32
    return %c0_i32, %arg1 : i32, i32
  }
  func.func @transform_3(%arg0: i32, %arg1: i32, %arg2: i32) -> (i32, i32) {
    %c0_i32 = arith.constant 0 : i32
    return %arg0, %arg1 : i32, i32
  }
}

module attributes {stable_mosaic.version = 11 : i64} {
  func.func @_linear_kernel(%arg0: i32, %arg1: i32, %arg2: i32, %arg3: memref<16x32xf32, #tpu.memory_space<vmem>>, %arg4: memref<32x64xbf16, #tpu.memory_space<vmem>>, %arg5: memref<1x64xf32, #tpu.memory_space<vmem>>, %arg6: memref<16x64xf32, #tpu.memory_space<vmem>>, %arg7: memref<16x64xf32, #tpu.memory_space<vmem>>) attributes {dimension_semantics = [#tpu.dimension_semantics<parallel>, #tpu.dimension_semantics<parallel>, #tpu.dimension_semantics<arbitrary>], iteration_bounds = array<i64: 1, 1, 1>, scalar_prefetch = 0 : i64, scratch_operands = 1 : i64, tpu.core_type = #tpu.core_type<tc>, window_params = [{transform_indices = @transform_0, window_bounds = array<i64: 16, 32>}, {transform_indices = @transform_1, window_bounds = array<i64: 32, 64>}, {transform_indices = @transform_2, window_bounds = array<i64: 1, 64>}, {transform_indices = @transform_3, window_bounds = array<i64: 16, 64>}]} {
    %c0_i32 = arith.constant 0 : i32
    %0 = arith.cmpi eq, %arg2, %c0_i32 : i32
    %1 = arith.extui %0 : i1 to i32
    %c0_i32_0 = arith.constant 0 : i32
    %2 = arith.cmpi ne, %1, %c0_i32_0 : i32
    scf.if %2 {
      %cst_10 = arith.constant 0.000000e+00 : f32
      %13 = vector.broadcast %cst_10 : f32 to vector<16x64xf32>
      %c0_11 = arith.constant 0 : index
      %c0_12 = arith.constant 0 : index
      %14 = vector.load %arg7[%c0_11, %c0_12] : memref<16x64xf32, #tpu.memory_space<vmem>>, vector<16x64xf32>
      tpu.vector_store %arg7[%c0_11, %c0_12], %13 {strides = array<i32>} : memref<16x64xf32, #tpu.memory_space<vmem>>, vector<16x64xf32>,
    } else {
    }
    %c0 = arith.constant 0 : index
    %c0_1 = arith.constant 0 : index
    %3 = vector.load %arg7[%c0, %c0_1] : memref<16x64xf32, #tpu.memory_space<vmem>>, vector<16x64xf32>
    %c0_2 = arith.constant 0 : index
    %c0_3 = arith.constant 0 : index
    %4 = vector.load %arg3[%c0_2, %c0_3] : memref<16x32xf32, #tpu.memory_space<vmem>>, vector<16x32xf32>
    %5 = arith.truncf %4 : vector<16x32xf32> to vector<16x32xbf16>
    %c0_4 = arith.constant 0 : index
    %c0_5 = arith.constant 0 : index
    %6 = vector.load %arg4[%c0_4, %c0_5] : memref<32x64xbf16, #tpu.memory_space<vmem>>, vector<32x64xbf16>
    %cst = arith.constant dense<0.000000e+00> : vector<16x64xf32>
    %7 = tpu.matmul %5, %6, %cst {dimension_numbers = #tpu.dot_dimension_numbers<[1], [0], [0], [1], [0, 0, 1, 1], [], []>} : vector<16x32xbf16>, vector<32x64xbf16>, vector<16x64xf32> -> vector<16x64xf32>
    %8 = arith.addf %3, %7 : vector<16x64xf32>
    %c0_6 = arith.constant 0 : index
    %c0_7 = arith.constant 0 : index
    %9 = vector.load %arg7[%c0_6, %c0_7] : memref<16x64xf32, #tpu.memory_space<vmem>>, vector<16x64xf32>
    tpu.vector_store %arg7[%c0_6, %c0_7], %8 {strides = array<i32>} : memref<16x64xf32, #tpu.memory_space<vmem>>, vector<16x64xf32>,
    %c0_i32_8 = arith.constant 0 : i32
    %10 = arith.cmpi eq, %arg2, %c0_i32_8 : i32
    %11 = arith.extui %10 : i1 to i32
    %c0_i32_9 = arith.constant 0 : i32
    %12 = arith.cmpi ne, %11, %c0_i32_9 : i32
    scf.if %12 {
      %c0_10 = arith.constant 0 : index
      %c0_11 = arith.constant 0 : index
      %13 = vector.load %arg7[%c0_10, %c0_11] : memref<16x64xf32, #tpu.memory_space<vmem>>, vector<16x64xf32>
      %c0_12 = arith.constant 0 : index
      %c0_13 = arith.constant 0 : index
      %14 = vector.load %arg5[%c0_12, %c0_13] : memref<1x64xf32, #tpu.memory_space<vmem>>, vector<1x64xf32>
      %15 = vector.broadcast %14 : vector<1x64xf32> to vector<16x64xf32>
      %16 = arith.addf %13, %15 : vector<16x64xf32>
      %c0_14 = arith.constant 0 : index
      %c0_15 = arith.constant 0 : index
      %17 = vector.load %arg6[%c0_14, %c0_15] : memref<16x64xf32, #tpu.memory_space<vmem>>, vector<16x64xf32>
      tpu.vector_store %arg6[%c0_14, %c0_15], %16 {strides = array<i32>} : memref<16x64xf32, #tpu.memory_space<vmem>>, vector<16x64xf32>,
    } else {
    }
    return
  }
  func.func @transform_0(%arg0: i32, %arg1: i32, %arg2: i32) -> (i32, i32) {
    %c0_i32 = arith.constant 0 : i32
    return %arg0, %arg2 : i32, i32
  }
  func.func @transform_1(%arg0: i32, %arg1: i32, %arg2: i32) -> (i32, i32) {
    %c0_i32 = arith.constant 0 : i32
    return %arg2, %arg1 : i32, i32
  }
  func.func @transform_2(%arg0: i32, %arg1: i32, %arg2: i32) -> (i32, i32) {
    %c0_i32 = arith.constant 0 : i32
    %c0_i32_0 = arith.constant 0 : i32
    return %c0_i32, %arg1 : i32, i32
  }
  func.func @transform_3(%arg0: i32, %arg1: i32, %arg2: i32) -> (i32, i32) {
    %c0_i32 = arith.constant 0 : i32
    return %arg0, %arg1 : i32, i32
  }
}

module attributes {stable_mosaic.version = 11 : i64} {
  func.func @_perceiver_block_kernel(%arg0: i32, %arg1: memref<1x6x64xf32, #tpu.memory_space<vmem>>, %arg2: memref<1x8x64xf32, #tpu.memory_space<vmem>>, %arg3: memref<1x8x64xf32, #tpu.memory_space<vmem>>, %arg4: memref<64x192xbf16, #tpu.memory_space<vmem>>, %arg5: memref<1x192xf32, #tpu.memory_space<vmem>>, %arg6: memref<64x128xbf16, #tpu.memory_space<vmem>>, %arg7: memref<1x128xf32, #tpu.memory_space<vmem>>, %arg8: memref<64x64xbf16, #tpu.memory_space<vmem>>, %arg9: memref<1x64xf32, #tpu.memory_space<vmem>>, %arg10: memref<64x256xbf16, #tpu.memory_space<vmem>>, %arg11: memref<1x256xf32, #tpu.memory_space<vmem>>, %arg12: memref<256x64xbf16, #tpu.memory_space<vmem>>, %arg13: memref<1x64xf32, #tpu.memory_space<vmem>>, %arg14: memref<1x8x64xf32, #tpu.memory_space<vmem>>, %arg15: memref<8x64xf32, #tpu.memory_space<vmem>>) attributes {dimension_semantics = [#tpu.dimension_semantics<parallel>], iteration_bounds = array<i64: 2>, scalar_prefetch = 0 : i64, scratch_operands = 1 : i64, tpu.core_type = #tpu.core_type<tc>, window_params = [{transform_indices = @transform_0, window_bounds = array<i64: 1, 6, 64>}, {transform_indices = @transform_1, window_bounds = array<i64: 1, 8, 64>}, {transform_indices = @transform_2, window_bounds = array<i64: 1, 8, 64>}, {pipeline_mode = #tpu.pipeline_mode<synchronous>, transform_indices = @transform_3, window_bounds = array<i64: 64, 192>}, {pipeline_mode = #tpu.pipeline_mode<synchronous>, transform_indices = @transform_4, window_bounds = array<i64: 1, 192>}, {pipeline_mode = #tpu.pipeline_mode<synchronous>, transform_indices = @transform_5, window_bounds = array<i64: 64, 128>}, {pipeline_mode = #tpu.pipeline_mode<synchronous>, transform_indices = @transform_6, window_bounds = array<i64: 1, 128>}, {pipeline_mode = #tpu.pipeline_mode<synchronous>, transform_indices = @transform_7, window_bounds = array<i64: 64, 64>}, {pipeline_mode = #tpu.pipeline_mode<synchronous>, transform_indices = @transform_8, window_bounds = array<i64: 1, 64>}, {pipeline_mode = #tpu.pipeline_mode<synchronous>, transform_indices = @transform_9, window_bounds = array<i64: 64, 256>}, {pipeline_mode = #tpu.pipeline_mode<synchronous>, transform_indices = @transform_10, window_bounds = array<i64: 1, 256>}, {pipeline_mode = #tpu.pipeline_mode<synchronous>, transform_indices = @transform_11, window_bounds = array<i64: 256, 64>}, {pipeline_mode = #tpu.pipeline_mode<synchronous>, transform_indices = @transform_12, window_bounds = array<i64: 1, 64>}, {transform_indices = @transform_13, window_bounds = array<i64: 1, 8, 64>}]} {
    %c0 = arith.constant 0 : index
    %c0_0 = arith.constant 0 : index
    %c0_1 = arith.constant 0 : index
    %0 = vector.load %arg3[%c0, %c0_0, %c0_1] : memref<1x8x64xf32, #tpu.memory_space<vmem>>, vector<1x8x64xf32>
    %1 = vector.shape_cast %0 : vector<1x8x64xf32> to vector<8x64xf32>
    %c0_2 = arith.constant 0 : index
    %c0_3 = arith.constant 0 : index
    %c0_4 = arith.constant 0 : index
    %2 = vector.load %arg2[%c0_2, %c0_3, %c0_4] : memref<1x8x64xf32, #tpu.memory_space<vmem>>, vector<1x8x64xf32>
    %3 = vector.shape_cast %2 : vector<1x8x64xf32> to vector<8x64xf32>
    %c0_5 = arith.constant 0 : index
    %c0_6 = arith.constant 0 : index
    %c0_7 = arith.constant 0 : index
    %4 = vector.load %arg1[%c0_5, %c0_6, %c0_7] : memref<1x6x64xf32, #tpu.memory_space<vmem>>, vector<1x6x64xf32>
    %5 = vector.shape_cast %4 : vector<1x6x64xf32> to vector<6x64xf32>
    %cst = arith.constant dense<0.000000e+00> : vector<8xf32>
    %6 = vector.multi_reduction <add>, %1, %cst [1] : vector<8x64xf32> to vector<8xf32>
    %7 = vector.shape_cast %6 : vector<8xf32> to vector<8x1xf32>
    %cst_8 = arith.constant 6.400000e+01 : f32
    %8 = vector.broadcast %cst_8 : f32 to vector<8x1xf32>
    %9 = arith.divf %7, %8 : vector<8x1xf32>
    %10 = vector.broadcast %9 : vector<8x1xf32> to vector<8x64xf32>
    %11 = arith.subf %1, %10 : vector<8x64xf32>
    %12 = arith.mulf %11, %11 : vector<8x64xf32>
    %cst_9 = arith.constant dense<0.000000e+00> : vector<8xf32>
    %13 = vector.multi_reduction <add>, %12, %cst_9 [1] : vector<8x64xf32> to vector<8xf32>
    %14 = vector.shape_cast %13 : vector<8xf32> to vector<8x1xf32>
    %cst_10 = arith.constant 6.400000e+01 : f32
    %15 = vector.broadcast %cst_10 : f32 to vector<8x1xf32>
    %16 = arith.divf %14, %15 : vector<8x1xf32>
    %cst_11 = arith.constant 9.99999997E-7 : f32
    %17 = vector.broadcast %cst_11 : f32 to vector<8x1xf32>
    %18 = arith.addf %16, %17 : vector<8x1xf32>
    %19 = math.rsqrt %18 : vector<8x1xf32>
    %20 = vector.broadcast %19 : vector<8x1xf32> to vector<8x64xf32>
    %21 = arith.mulf %11, %20 : vector<8x64xf32>
    %22 = vector.extract_strided_slice %5 {offsets = [1, 0], sizes = [1, 64], strides = [1, 1]} : vector<6x64xf32> to vector<1x64xf32>
    %cst_12 = arith.constant 1.000000e+00 : f32
    %23 = vector.broadcast %cst_12 : f32 to vector<1x64xf32>
    %24 = arith.addf %23, %22 : vector<1x64xf32>
    %25 = vector.broadcast %24 : vector<1x64xf32> to vector<8x64xf32>
    %26 = arith.mulf %21, %25 : vector<8x64xf32>
    %27 = vector.extract_strided_slice %5 {offsets = [0, 0], sizes = [1, 64], strides = [1, 1]} : vector<6x64xf32> to vector<1x64xf32>
    %28 = vector.broadcast %27 : vector<1x64xf32> to vector<8x64xf32>
    %29 = arith.addf %26, %28 : vector<8x64xf32>
    %30 = arith.truncf %29 : vector<8x64xf32> to vector<8x64xbf16>
    %c0_13 = arith.constant 0 : index
    %c0_14 = arith.constant 0 : index
    %31 = vector.load %arg4[%c0_13, %c0_14] : memref<64x192xbf16, #tpu.memory_space<vmem>>, vector<64x192xbf16>
    %cst_15 = arith.constant dense<0.000000e+00> : vector<8x192xf32>
    %32 = tpu.matmul %30, %31, %cst_15 {dimension_numbers = #tpu.dot_dimension_numbers<[1], [0], [0], [1], [0, 0, 1, 1], [], []>} : vector<8x64xbf16>, vector<64x192xbf16>, vector<8x192xf32> -> vector<8x192xf32>
    %c0_16 = arith.constant 0 : index
    %c0_17 = arith.constant 0 : index
    %33 = vector.load %arg5[%c0_16, %c0_17] : memref<1x192xf32, #tpu.memory_space<vmem>>, vector<1x192xf32>
    %34 = vector.broadcast %33 : vector<1x192xf32> to vector<8x192xf32>
    %35 = arith.addf %32, %34 : vector<8x192xf32>
    %cst_18 = arith.constant dense<0.000000e+00> : vector<8xf32>
    %36 = vector.multi_reduction <add>, %3, %cst_18 [1] : vector<8x64xf32> to vector<8xf32>
    %37 = vector.shape_cast %36 : vector<8xf32> to vector<8x1xf32>
    %cst_19 = arith.constant 6.400000e+01 : f32
    %38 = vector.broadcast %cst_19 : f32 to vector<8x1xf32>
    %39 = arith.divf %37, %38 : vector<8x1xf32>
    %40 = vector.broadcast %39 : vector<8x1xf32> to vector<8x64xf32>
    %41 = arith.subf %3, %40 : vector<8x64xf32>
    %42 = arith.mulf %41, %41 : vector<8x64xf32>
    %cst_20 = arith.constant dense<0.000000e+00> : vector<8xf32>
    %43 = vector.multi_reduction <add>, %42, %cst_20 [1] : vector<8x64xf32> to vector<8xf32>
    %44 = vector.shape_cast %43 : vector<8xf32> to vector<8x1xf32>
    %cst_21 = arith.constant 6.400000e+01 : f32
    %45 = vector.broadcast %cst_21 : f32 to vector<8x1xf32>
    %46 = arith.divf %44, %45 : vector<8x1xf32>
    %cst_22 = arith.constant 9.99999997E-7 : f32
    %47 = vector.broadcast %cst_22 : f32 to vector<8x1xf32>
    %48 = arith.addf %46, %47 : vector<8x1xf32>
    %49 = math.rsqrt %48 : vector<8x1xf32>
    %50 = vector.broadcast %49 : vector<8x1xf32> to vector<8x64xf32>
    %51 = arith.mulf %41, %50 : vector<8x64xf32>
    %52 = vector.extract_strided_slice %5 {offsets = [3, 0], sizes = [1, 64], strides = [1, 1]} : vector<6x64xf32> to vector<1x64xf32>
    %cst_23 = arith.constant 1.000000e+00 : f32
    %53 = vector.broadcast %cst_23 : f32 to vector<1x64xf32>
    %54 = arith.addf %53, %52 : vector<1x64xf32>
    %55 = vector.broadcast %54 : vector<1x64xf32> to vector<8x64xf32>
    %56 = arith.mulf %51, %55 : vector<8x64xf32>
    %57 = vector.extract_strided_slice %5 {offsets = [2, 0], sizes = [1, 64], strides = [1, 1]} : vector<6x64xf32> to vector<1x64xf32>
    %58 = vector.broadcast %57 : vector<1x64xf32> to vector<8x64xf32>
    %59 = arith.addf %56, %58 : vector<8x64xf32>
    %60 = arith.truncf %59 : vector<8x64xf32> to vector<8x64xbf16>
    %c0_24 = arith.constant 0 : index
    %c0_25 = arith.constant 0 : index
    %61 = vector.load %arg6[%c0_24, %c0_25] : memref<64x128xbf16, #tpu.memory_space<vmem>>, vector<64x128xbf16>
    %cst_26 = arith.constant dense<0.000000e+00> : vector<8x128xf32>
    %62 = tpu.matmul %60, %61, %cst_26 {dimension_numbers = #tpu.dot_dimension_numbers<[1], [0], [0], [1], [0, 0, 1, 1], [], []>} : vector<8x64xbf16>, vector<64x128xbf16>, vector<8x128xf32> -> vector<8x128xf32>
    %c0_27 = arith.constant 0 : index
    %c0_28 = arith.constant 0 : index
    %63 = vector.load %arg7[%c0_27, %c0_28] : memref<1x128xf32, #tpu.memory_space<vmem>>, vector<1x128xf32>
    %64 = vector.broadcast %63 : vector<1x128xf32> to vector<8x128xf32>
    %65 = arith.addf %62, %64 : vector<8x128xf32>
    %66 = vector.extract_strided_slice %35 {offsets = [0, 0], sizes = [8, 64], strides = [1, 1]} : vector<8x192xf32> to vector<8x64xf32>
    %67 = arith.truncf %66 : vector<8x64xf32> to vector<8x64xbf16>
    %68 = vector.extract_strided_slice %35 {offsets = [0, 64], sizes = [8, 64], strides = [1, 1]} : vector<8x192xf32> to vector<8x64xf32>
    %69 = vector.extract_strided_slice %65 {offsets = [0, 0], sizes = [8, 64], strides = [1, 1]} : vector<8x128xf32> to vector<8x64xf32>
    %70 = tpu.concatenate %68, %69 in 0 : vector<8x64xf32>, vector<8x64xf32> -> vector<16x64xf32>
    %71 = arith.truncf %70 : vector<16x64xf32> to vector<16x64xbf16>
    %72 = vector.extract_strided_slice %35 {offsets = [0, 128], sizes = [8, 64], strides = [1, 1]} : vector<8x192xf32> to vector<8x64xf32>
    %73 = vector.extract_strided_slice %65 {offsets = [0, 64], sizes = [8, 64], strides = [1, 1]} : vector<8x128xf32> to vector<8x64xf32>
    %74 = tpu.concatenate %72, %73 in 0 : vector<8x64xf32>, vector<8x64xf32> -> vector<16x64xf32>
    %75 = arith.truncf %74 : vector<16x64xf32> to vector<16x64xbf16>
    %c0_29 = arith.constant 0 : index
    %c0_30 = arith.constant 0 : index
    %76 = vector.load %arg8[%c0_29, %c0_30] : memref<64x64xbf16, #tpu.memory_space<vmem>>, vector<64x64xbf16>
    %cst_31 = arith.constant 0.000000e+00 : f32
    %77 = vector.broadcast %cst_31 : f32 to vector<8x64xf32>
    %c0_32 = arith.constant 0 : index
    %c0_33 = arith.constant 0 : index
    %78 = vector.load %arg15[%c0_32, %c0_33] : memref<8x64xf32, #tpu.memory_space<vmem>>, vector<8x64xf32>
    tpu.vector_store %arg15[%c0_32, %c0_33], %77 {strides = array<i32>} : memref<8x64xf32, #tpu.memory_space<vmem>>, vector<8x64xf32>,
    %79 = vector.extract_strided_slice %67 {offsets = [0, 0], sizes = [8, 16], strides = [1, 1]} : vector<8x64xbf16> to vector<8x16xbf16>
    %80 = vector.extract_strided_slice %71 {offsets = [0, 0], sizes = [16, 16], strides = [1, 1]} : vector<16x64xbf16> to vector<16x16xbf16>
    %81 = vector.extract_strided_slice %75 {offsets = [0, 0], sizes = [16, 16], strides = [1, 1]} : vector<16x64xbf16> to vector<16x16xbf16>
    %cst_34 = arith.constant dense<0.000000e+00> : vector<8x16xf32>
    %82 = tpu.matmul %79, %80, %cst_34 {dimension_numbers = #tpu.dot_dimension_numbers<[1], [1], [0], [0], [0, 0, 1, 0], [], []>} : vector<8x16xbf16>, vector<16x16xbf16>, vector<8x16xf32> -> vector<8x16xf32>
    %cst_35 = arith.constant 2.500000e-01 : f32
    %83 = vector.broadcast %cst_35 : f32 to vector<8x16xf32>
    %84 = arith.mulf %82, %83 : vector<8x16xf32>
    %cst_36 = arith.constant dense<0xFF800000> : vector<8xf32>
    %85 = vector.multi_reduction <maximumf>, %84, %cst_36 [1] : vector<8x16xf32> to vector<8xf32>
    %86 = vector.shape_cast %85 : vector<8xf32> to vector<8x1xf32>
    %87 = vector.broadcast %86 : vector<8x1xf32> to vector<8x16xf32>
    %88 = arith.subf %84, %87 : vector<8x16xf32>
    %89 = math.exp %88 : vector<8x16xf32>
    %cst_37 = arith.constant dense<0.000000e+00> : vector<8xf32>
    %90 = vector.multi_reduction <add>, %89, %cst_37 [1] : vector<8x16xf32> to vector<8xf32>
    %91 = vector.shape_cast %90 : vector<8xf32> to vector<8x1xf32>
    %92 = tpu.reciprocal %91 {approx = true} : vector<8x1xf32> -> vector<8x1xf32>
    %93 = vector.broadcast %92 : vector<8x1xf32> to vector<8x16xf32>
    %94 = arith.mulf %89, %93 : vector<8x16xf32>
    %95 = arith.truncf %94 : vector<8x16xf32> to vector<8x16xbf16>
    %cst_38 = arith.constant dense<0.000000e+00> : vector<8x16xf32>
    %96 = tpu.matmul %95, %81, %cst_38 {dimension_numbers = #tpu.dot_dimension_numbers<[1], [0], [0], [1], [0, 0, 1, 1], [], []>} : vector<8x16xbf16>, vector<16x16xbf16>, vector<8x16xf32> -> vector<8x16xf32>
    %c0_39 = arith.constant 0 : index
    %c0_40 = arith.constant 0 : index
    %97 = vector.load %arg15[%c0_39, %c0_40] : memref<8x64xf32, #tpu.memory_space<vmem>>, vector<8x64xf32>
    %98 = arith.truncf %96 : vector<8x16xf32> to vector<8x16xbf16>
    %99 = vector.extract_strided_slice %76 {offsets = [0, 0], sizes = [16, 64], strides = [1, 1]} : vector<64x64xbf16> to vector<16x64xbf16>
    %cst_41 = arith.constant dense<0.000000e+00> : vector<8x64xf32>
    %100 = tpu.matmul %98, %99, %cst_41 {dimension_numbers = #tpu.dot_dimension_numbers<[1], [0], [0], [1], [0, 0, 1, 1], [], []>} : vector<8x16xbf16>, vector<16x64xbf16>, vector<8x64xf32> -> vector<8x64xf32>
    %101 = arith.addf %97, %100 : vector<8x64xf32>
    %c0_42 = arith.constant 0 : index
    %c0_43 = arith.constant 0 : index
    %102 = vector.load %arg15[%c0_42, %c0_43] : memref<8x64xf32, #tpu.memory_space<vmem>>, vector<8x64xf32>
    tpu.vector_store %arg15[%c0_42, %c0_43], %101 {strides = array<i32>} : memref<8x64xf32, #tpu.memory_space<vmem>>, vector<8x64xf32>,
    %103 = vector.extract_strided_slice %67 {offsets = [0, 16], sizes = [8, 16], strides = [1, 1]} : vector<8x64xbf16> to vector<8x16xbf16>
    %104 = vector.extract_strided_slice %71 {offsets = [0, 16], sizes = [16, 16], strides = [1, 1]} : vector<16x64xbf16> to vector<16x16xbf16>
    %105 = vector.extract_strided_slice %75 {offsets = [0, 16], sizes = [16, 16], strides = [1, 1]} : vector<16x64xbf16> to vector<16x16xbf16>
    %cst_44 = arith.constant dense<0.000000e+00> : vector<8x16xf32>
    %106 = tpu.matmul %103, %104, %cst_44 {dimension_numbers = #tpu.dot_dimension_numbers<[1], [1], [0], [0], [0, 0, 1, 0], [], []>} : vector<8x16xbf16>, vector<16x16xbf16>, vector<8x16xf32> -> vector<8x16xf32>
    %cst_45 = arith.constant 2.500000e-01 : f32
    %107 = vector.broadcast %cst_45 : f32 to vector<8x16xf32>
    %108 = arith.mulf %106, %107 : vector<8x16xf32>
    %cst_46 = arith.constant dense<0xFF800000> : vector<8xf32>
    %109 = vector.multi_reduction <maximumf>, %108, %cst_46 [1] : vector<8x16xf32> to vector<8xf32>
    %110 = vector.shape_cast %109 : vector<8xf32> to vector<8x1xf32>
    %111 = vector.broadcast %110 : vector<8x1xf32> to vector<8x16xf32>
    %112 = arith.subf %108, %111 : vector<8x16xf32>
    %113 = math.exp %112 : vector<8x16xf32>
    %cst_47 = arith.constant dense<0.000000e+00> : vector<8xf32>
    %114 = vector.multi_reduction <add>, %113, %cst_47 [1] : vector<8x16xf32> to vector<8xf32>
    %115 = vector.shape_cast %114 : vector<8xf32> to vector<8x1xf32>
    %116 = tpu.reciprocal %115 {approx = true} : vector<8x1xf32> -> vector<8x1xf32>
    %117 = vector.broadcast %116 : vector<8x1xf32> to vector<8x16xf32>
    %118 = arith.mulf %113, %117 : vector<8x16xf32>
    %119 = arith.truncf %118 : vector<8x16xf32> to vector<8x16xbf16>
    %cst_48 = arith.constant dense<0.000000e+00> : vector<8x16xf32>
    %120 = tpu.matmul %119, %105, %cst_48 {dimension_numbers = #tpu.dot_dimension_numbers<[1], [0], [0], [1], [0, 0, 1, 1], [], []>} : vector<8x16xbf16>, vector<16x16xbf16>, vector<8x16xf32> -> vector<8x16xf32>
    %c0_49 = arith.constant 0 : index
    %c0_50 = arith.constant 0 : index
    %121 = vector.load %arg15[%c0_49, %c0_50] : memref<8x64xf32, #tpu.memory_space<vmem>>, vector<8x64xf32>
    %122 = arith.truncf %120 : vector<8x16xf32> to vector<8x16xbf16>
    %123 = vector.extract_strided_slice %76 {offsets = [16, 0], sizes = [16, 64], strides = [1, 1]} : vector<64x64xbf16> to vector<16x64xbf16>
    %cst_51 = arith.constant dense<0.000000e+00> : vector<8x64xf32>
    %124 = tpu.matmul %122, %123, %cst_51 {dimension_numbers = #tpu.dot_dimension_numbers<[1], [0], [0], [1], [0, 0, 1, 1], [], []>} : vector<8x16xbf16>, vector<16x64xbf16>, vector<8x64xf32> -> vector<8x64xf32>
    %125 = arith.addf %121, %124 : vector<8x64xf32>
    %c0_52 = arith.constant 0 : index
    %c0_53 = arith.constant 0 : index
    %126 = vector.load %arg15[%c0_52, %c0_53] : memref<8x64xf32, #tpu.memory_space<vmem>>, vector<8x64xf32>
    tpu.vector_store %arg15[%c0_52, %c0_53], %125 {strides = array<i32>} : memref<8x64xf32, #tpu.memory_space<vmem>>, vector<8x64xf32>,
    %127 = vector.extract_strided_slice %67 {offsets = [0, 32], sizes = [8, 16], strides = [1, 1]} : vector<8x64xbf16> to vector<8x16xbf16>
    %128 = vector.extract_strided_slice %71 {offsets = [0, 32], sizes = [16, 16], strides = [1, 1]} : vector<16x64xbf16> to vector<16x16xbf16>
    %129 = vector.extract_strided_slice %75 {offsets = [0, 32], sizes = [16, 16], strides = [1, 1]} : vector<16x64xbf16> to vector<16x16xbf16>
    %cst_54 = arith.constant dense<0.000000e+00> : vector<8x16xf32>
    %130 = tpu.matmul %127, %128, %cst_54 {dimension_numbers = #tpu.dot_dimension_numbers<[1], [1], [0], [0], [0, 0, 1, 0], [], []>} : vector<8x16xbf16>, vector<16x16xbf16>, vector<8x16xf32> -> vector<8x16xf32>
    %cst_55 = arith.constant 2.500000e-01 : f32
    %131 = vector.broadcast %cst_55 : f32 to vector<8x16xf32>
    %132 = arith.mulf %130, %131 : vector<8x16xf32>
    %cst_56 = arith.constant dense<0xFF800000> : vector<8xf32>
    %133 = vector.multi_reduction <maximumf>, %132, %cst_56 [1] : vector<8x16xf32> to vector<8xf32>
    %134 = vector.shape_cast %133 : vector<8xf32> to vector<8x1xf32>
    %135 = vector.broadcast %134 : vector<8x1xf32> to vector<8x16xf32>
    %136 = arith.subf %132, %135 : vector<8x16xf32>
    %137 = math.exp %136 : vector<8x16xf32>
    %cst_57 = arith.constant dense<0.000000e+00> : vector<8xf32>
    %138 = vector.multi_reduction <add>, %137, %cst_57 [1] : vector<8x16xf32> to vector<8xf32>
    %139 = vector.shape_cast %138 : vector<8xf32> to vector<8x1xf32>
    %140 = tpu.reciprocal %139 {approx = true} : vector<8x1xf32> -> vector<8x1xf32>
    %141 = vector.broadcast %140 : vector<8x1xf32> to vector<8x16xf32>
    %142 = arith.mulf %137, %141 : vector<8x16xf32>
    %143 = arith.truncf %142 : vector<8x16xf32> to vector<8x16xbf16>
    %cst_58 = arith.constant dense<0.000000e+00> : vector<8x16xf32>
    %144 = tpu.matmul %143, %129, %cst_58 {dimension_numbers = #tpu.dot_dimension_numbers<[1], [0], [0], [1], [0, 0, 1, 1], [], []>} : vector<8x16xbf16>, vector<16x16xbf16>, vector<8x16xf32> -> vector<8x16xf32>
    %c0_59 = arith.constant 0 : index
    %c0_60 = arith.constant 0 : index
    %145 = vector.load %arg15[%c0_59, %c0_60] : memref<8x64xf32, #tpu.memory_space<vmem>>, vector<8x64xf32>
    %146 = arith.truncf %144 : vector<8x16xf32> to vector<8x16xbf16>
    %147 = vector.extract_strided_slice %76 {offsets = [32, 0], sizes = [16, 64], strides = [1, 1]} : vector<64x64xbf16> to vector<16x64xbf16>
    %cst_61 = arith.constant dense<0.000000e+00> : vector<8x64xf32>
    %148 = tpu.matmul %146, %147, %cst_61 {dimension_numbers = #tpu.dot_dimension_numbers<[1], [0], [0], [1], [0, 0, 1, 1], [], []>} : vector<8x16xbf16>, vector<16x64xbf16>, vector<8x64xf32> -> vector<8x64xf32>
    %149 = arith.addf %145, %148 : vector<8x64xf32>
    %c0_62 = arith.constant 0 : index
    %c0_63 = arith.constant 0 : index
    %150 = vector.load %arg15[%c0_62, %c0_63] : memref<8x64xf32, #tpu.memory_space<vmem>>, vector<8x64xf32>
    tpu.vector_store %arg15[%c0_62, %c0_63], %149 {strides = array<i32>} : memref<8x64xf32, #tpu.memory_space<vmem>>, vector<8x64xf32>,
    %151 = vector.extract_strided_slice %67 {offsets = [0, 48], sizes = [8, 16], strides = [1, 1]} : vector<8x64xbf16> to vector<8x16xbf16>
    %152 = vector.extract_strided_slice %71 {offsets = [0, 48], sizes = [16, 16], strides = [1, 1]} : vector<16x64xbf16> to vector<16x16xbf16>
    %153 = vector.extract_strided_slice %75 {offsets = [0, 48], sizes = [16, 16], strides = [1, 1]} : vector<16x64xbf16> to vector<16x16xbf16>
    %cst_64 = arith.constant dense<0.000000e+00> : vector<8x16xf32>
    %154 = tpu.matmul %151, %152, %cst_64 {dimension_numbers = #tpu.dot_dimension_numbers<[1], [1], [0], [0], [0, 0, 1, 0], [], []>} : vector<8x16xbf16>, vector<16x16xbf16>, vector<8x16xf32> -> vector<8x16xf32>
    %cst_65 = arith.constant 2.500000e-01 : f32
    %155 = vector.broadcast %cst_65 : f32 to vector<8x16xf32>
    %156 = arith.mulf %154, %155 : vector<8x16xf32>
    %cst_66 = arith.constant dense<0xFF800000> : vector<8xf32>
    %157 = vector.multi_reduction <maximumf>, %156, %cst_66 [1] : vector<8x16xf32> to vector<8xf32>
    %158 = vector.shape_cast %157 : vector<8xf32> to vector<8x1xf32>
    %159 = vector.broadcast %158 : vector<8x1xf32> to vector<8x16xf32>
    %160 = arith.subf %156, %159 : vector<8x16xf32>
    %161 = math.exp %160 : vector<8x16xf32>
    %cst_67 = arith.constant dense<0.000000e+00> : vector<8xf32>
    %162 = vector.multi_reduction <add>, %161, %cst_67 [1] : vector<8x16xf32> to vector<8xf32>
    %163 = vector.shape_cast %162 : vector<8xf32> to vector<8x1xf32>
    %164 = tpu.reciprocal %163 {approx = true} : vector<8x1xf32> -> vector<8x1xf32>
    %165 = vector.broadcast %164 : vector<8x1xf32> to vector<8x16xf32>
    %166 = arith.mulf %161, %165 : vector<8x16xf32>
    %167 = arith.truncf %166 : vector<8x16xf32> to vector<8x16xbf16>
    %cst_68 = arith.constant dense<0.000000e+00> : vector<8x16xf32>
    %168 = tpu.matmul %167, %153, %cst_68 {dimension_numbers = #tpu.dot_dimension_numbers<[1], [0], [0], [1], [0, 0, 1, 1], [], []>} : vector<8x16xbf16>, vector<16x16xbf16>, vector<8x16xf32> -> vector<8x16xf32>
    %c0_69 = arith.constant 0 : index
    %c0_70 = arith.constant 0 : index
    %169 = vector.load %arg15[%c0_69, %c0_70] : memref<8x64xf32, #tpu.memory_space<vmem>>, vector<8x64xf32>
    %170 = arith.truncf %168 : vector<8x16xf32> to vector<8x16xbf16>
    %171 = vector.extract_strided_slice %76 {offsets = [48, 0], sizes = [16, 64], strides = [1, 1]} : vector<64x64xbf16> to vector<16x64xbf16>
    %cst_71 = arith.constant dense<0.000000e+00> : vector<8x64xf32>
    %172 = tpu.matmul %170, %171, %cst_71 {dimension_numbers = #tpu.dot_dimension_numbers<[1], [0], [0], [1], [0, 0, 1, 1], [], []>} : vector<8x16xbf16>, vector<16x64xbf16>, vector<8x64xf32> -> vector<8x64xf32>
    %173 = arith.addf %169, %172 : vector<8x64xf32>
    %c0_72 = arith.constant 0 : index
    %c0_73 = arith.constant 0 : index
    %174 = vector.load %arg15[%c0_72, %c0_73] : memref<8x64xf32, #tpu.memory_space<vmem>>, vector<8x64xf32>
    tpu.vector_store %arg15[%c0_72, %c0_73], %173 {strides = array<i32>} : memref<8x64xf32, #tpu.memory_space<vmem>>, vector<8x64xf32>,
    %c0_74 = arith.constant 0 : index
    %c0_75 = arith.constant 0 : index
    %175 = vector.load %arg15[%c0_74, %c0_75] : memref<8x64xf32, #tpu.memory_space<vmem>>, vector<8x64xf32>
    %176 = arith.addf %1, %175 : vector<8x64xf32>
    %c0_76 = arith.constant 0 : index
    %c0_77 = arith.constant 0 : index
    %177 = vector.load %arg9[%c0_76, %c0_77] : memref<1x64xf32, #tpu.memory_space<vmem>>, vector<1x64xf32>
    %178 = vector.broadcast %177 : vector<1x64xf32> to vector<8x64xf32>
    %179 = arith.addf %176, %178 : vector<8x64xf32>
    %cst_78 = arith.constant dense<0.000000e+00> : vector<8xf32>
    %180 = vector.multi_reduction <add>, %179, %cst_78 [1] : vector<8x64xf32> to vector<8xf32>
    %181 = vector.shape_cast %180 : vector<8xf32> to vector<8x1xf32>
    %cst_79 = arith.constant 6.400000e+01 : f32
    %182 = vector.broadcast %cst_79 : f32 to vector<8x1xf32>
    %183 = arith.divf %181, %182 : vector<8x1xf32>
    %184 = vector.broadcast %183 : vector<8x1xf32> to vector<8x64xf32>
    %185 = arith.subf %179, %184 : vector<8x64xf32>
    %186 = arith.mulf %185, %185 : vector<8x64xf32>
    %cst_80 = arith.constant dense<0.000000e+00> : vector<8xf32>
    %187 = vector.multi_reduction <add>, %186, %cst_80 [1] : vector<8x64xf32> to vector<8xf32>
    %188 = vector.shape_cast %187 : vector<8xf32> to vector<8x1xf32>
    %cst_81 = arith.constant 6.400000e+01 : f32
    %189 = vector.broadcast %cst_81 : f32 to vector<8x1xf32>
    %190 = arith.divf %188, %189 : vector<8x1xf32>
    %cst_82 = arith.constant 9.99999997E-7 : f32
    %191 = vector.broadcast %cst_82 : f32 to vector<8x1xf32>
    %192 = arith.addf %190, %191 : vector<8x1xf32>
    %193 = math.rsqrt %192 : vector<8x1xf32>
    %194 = vector.broadcast %193 : vector<8x1xf32> to vector<8x64xf32>
    %195 = arith.mulf %185, %194 : vector<8x64xf32>
    %196 = vector.extract_strided_slice %5 {offsets = [5, 0], sizes = [1, 64], strides = [1, 1]} : vector<6x64xf32> to vector<1x64xf32>
    %cst_83 = arith.constant 1.000000e+00 : f32
    %197 = vector.broadcast %cst_83 : f32 to vector<1x64xf32>
    %198 = arith.addf %197, %196 : vector<1x64xf32>
    %199 = vector.broadcast %198 : vector<1x64xf32> to vector<8x64xf32>
    %200 = arith.mulf %195, %199 : vector<8x64xf32>
    %201 = vector.extract_strided_slice %5 {offsets = [4, 0], sizes = [1, 64], strides = [1, 1]} : vector<6x64xf32> to vector<1x64xf32>
    %202 = vector.broadcast %201 : vector<1x64xf32> to vector<8x64xf32>
    %203 = arith.addf %200, %202 : vector<8x64xf32>
    %204 = arith.truncf %203 : vector<8x64xf32> to vector<8x64xbf16>
    %c0_84 = arith.constant 0 : index
    %c0_85 = arith.constant 0 : index
    %205 = vector.load %arg10[%c0_84, %c0_85] : memref<64x256xbf16, #tpu.memory_space<vmem>>, vector<64x256xbf16>
    %cst_86 = arith.constant dense<0.000000e+00> : vector<8x256xf32>
    %206 = tpu.matmul %204, %205, %cst_86 {dimension_numbers = #tpu.dot_dimension_numbers<[1], [0], [0], [1], [0, 0, 1, 1], [], []>} : vector<8x64xbf16>, vector<64x256xbf16>, vector<8x256xf32> -> vector<8x256xf32>
    %c0_87 = arith.constant 0 : index
    %c0_88 = arith.constant 0 : index
    %207 = vector.load %arg11[%c0_87, %c0_88] : memref<1x256xf32, #tpu.memory_space<vmem>>, vector<1x256xf32>
    %208 = vector.broadcast %207 : vector<1x256xf32> to vector<8x256xf32>
    %209 = arith.addf %206, %208 : vector<8x256xf32>
    %cst_89 = arith.constant 0.000000e+00 : f32
    %210 = vector.broadcast %cst_89 : f32 to vector<8x256xf32>
    %211 = arith.maximumf %209, %210 : vector<8x256xf32>
    %212 = arith.mulf %211, %211 : vector<8x256xf32>
    %213 = arith.truncf %212 : vector<8x256xf32> to vector<8x256xbf16>
    %c0_90 = arith.constant 0 : index
    %c0_91 = arith.constant 0 : index
    %214 = vector.load %arg12[%c0_90, %c0_91] : memref<256x64xbf16, #tpu.memory_space<vmem>>, vector<256x64xbf16>
    %cst_92 = arith.constant dense<0.000000e+00> : vector<8x64xf32>
    %215 = tpu.matmul %213, %214, %cst_92 {dimension_numbers = #tpu.dot_dimension_numbers<[1], [0], [0], [1], [0, 0, 1, 1], [], []>} : vector<8x256xbf16>, vector<256x64xbf16>, vector<8x64xf32> -> vector<8x64xf32>
    %216 = arith.addf %179, %215 : vector<8x64xf32>
    %c0_93 = arith.constant 0 : index
    %c0_94 = arith.constant 0 : index
    %217 = vector.load %arg13[%c0_93, %c0_94] : memref<1x64xf32, #tpu.memory_space<vmem>>, vector<1x64xf32>
    %218 = vector.broadcast %217 : vector<1x64xf32> to vector<8x64xf32>
    %219 = arith.addf %216, %218 : vector<8x64xf32>
    %c0_95 = arith.constant 0 : index
    %c0_96 = arith.constant 0 : index
    %c0_97 = arith.constant 0 : index
    %220 = vector.load %arg14[%c0_95, %c0_96, %c0_97] : memref<1x8x64xf32, #tpu.memory_space<vmem>>, vector<1x8x64xf32>
    %221 = vector.shape_cast %220 : vector<1x8x64xf32> to vector<8x64xf32>
    %222 = vector.shape_cast %219 : vector<8x64xf32> to vector<1x8x64xf32>
    tpu.vector_store %arg14[%c0_95, %c0_96, %c0_97], %222 {strides = array<i32>} : memref<1x8x64xf32, #tpu.memory_space<vmem>>, vector<1x8x64xf32>,
    return
  }
  func.func @transform_0(%arg0: i32) -> (i32, i32, i32) {
    %c0_i32 = arith.constant 0 : i32
    %c0_i32_0 = arith.constant 0 : i32
    %c0_i32_1 = arith.constant 0 : i32
    return %arg0, %c0_i32, %c0_i32_0 : i32, i32, i32
  }
  func.func @transform_1(%arg0: i32) -> (i32, i32, i32) {
    %c0_i32 = arith.constant 0 : i32
    %c0_i32_0 = arith.constant 0 : i32
    %c0_i32_1 = arith.constant 0 : i32
    return %arg0, %c0_i32, %c0_i32_0 : i32, i32, i32
  }
  func.func @transform_2(%arg0: i32) -> (i32, i32, i32) {
    %c0_i32 = arith.constant 0 : i32
    %c0_i32_0 = arith.constant 0 : i32
    %c0_i32_1 = arith.constant 0 : i32
    return %arg0, %c0_i32, %c0_i32_0 : i32, i32, i32
  }
  func.func @transform_3(%arg0: i32) -> (i32, i32) {
    %c0_i32 = arith.constant 0 : i32
    %c0_i32_0 = arith.constant 0 : i32
    %c0_i32_1 = arith.constant 0 : i32
    return %c0_i32, %c0_i32_0 : i32, i32
  }
  func.func @transform_4(%arg0: i32) -> (i32, i32) {
    %c0_i32 = arith.constant 0 : i32
    %c0_i32_0 = arith.constant 0 : i32
    %c0_i32_1 = arith.constant 0 : i32
    return %c0_i32, %c0_i32_0 : i32, i32
  }
  func.func @transform_5(%arg0: i32) -> (i32, i32) {
    %c0_i32 = arith.constant 0 : i32
    %c0_i32_0 = arith.constant 0 : i32
    %c0_i32_1 = arith.constant 0 : i32
    return %c0_i32, %c0_i32_0 : i32, i32
  }
  func.func @transform_6(%arg0: i32) -> (i32, i32) {
    %c0_i32 = arith.constant 0 : i32
    %c0_i32_0 = arith.constant 0 : i32
    %c0_i32_1 = arith.constant 0 : i32
    return %c0_i32, %c0_i32_0 : i32, i32
  }
  func.func @transform_7(%arg0: i32) -> (i32, i32) {
    %c0_i32 = arith.constant 0 : i32
    %c0_i32_0 = arith.constant 0 : i32
    %c0_i32_1 = arith.constant 0 : i32
    return %c0_i32, %c0_i32_0 : i32, i32
  }
  func.func @transform_8(%arg0: i32) -> (i32, i32) {
    %c0_i32 = arith.constant 0 : i32
    %c0_i32_0 = arith.constant 0 : i32
    %c0_i32_1 = arith.constant 0 : i32
    return %c0_i32, %c0_i32_0 : i32, i32
  }
  func.func @transform_9(%arg0: i32) -> (i32, i32) {
    %c0_i32 = arith.constant 0 : i32
    %c0_i32_0 = arith.constant 0 : i32
    %c0_i32_1 = arith.constant 0 : i32
    return %c0_i32, %c0_i32_0 : i32, i32
  }
  func.func @transform_10(%arg0: i32) -> (i32, i32) {
    %c0_i32 = arith.constant 0 : i32
    %c0_i32_0 = arith.constant 0 : i32
    %c0_i32_1 = arith.constant 0 : i32
    return %c0_i32, %c0_i32_0 : i32, i32
  }
  func.func @transform_11(%arg0: i32) -> (i32, i32) {
    %c0_i32 = arith.constant 0 : i32
    %c0_i32_0 = arith.constant 0 : i32
    %c0_i32_1 = arith.constant 0 : i32
    return %c0_i32, %c0_i32_0 : i32, i32
  }
  func.func @transform_12(%arg0: i32) -> (i32, i32) {
    %c0_i32 = arith.constant 0 : i32
    %c0_i32_0 = arith.constant 0 : i32
    %c0_i32_1 = arith.constant 0 : i32
    return %c0_i32, %c0_i32_0 : i32, i32
  }
  func.func @transform_13(%arg0: i32) -> (i32, i32, i32) {
    %c0_i32 = arith.constant 0 : i32
    %c0_i32_0 = arith.constant 0 : i32
    %c0_i32_1 = arith.constant 0 : i32
    return %arg0, %c0_i32, %c0_i32_0 : i32, i32, i32
  }
}

module attributes {stable_mosaic.version = 11 : i64} {
  func.func @_perceiver_block_kernel(%arg0: i32, %arg1: memref<1x6x64xf32, #tpu.memory_space<vmem>>, %arg2: memref<1x8x64xf32, #tpu.memory_space<vmem>>, %arg3: memref<1x8x64xf32, #tpu.memory_space<vmem>>, %arg4: memref<64x192xbf16, #tpu.memory_space<vmem>>, %arg5: memref<1x192xf32, #tpu.memory_space<vmem>>, %arg6: memref<64x128xbf16, #tpu.memory_space<vmem>>, %arg7: memref<1x128xf32, #tpu.memory_space<vmem>>, %arg8: memref<64x64xbf16, #tpu.memory_space<vmem>>, %arg9: memref<1x64xf32, #tpu.memory_space<vmem>>, %arg10: memref<64x256xbf16, #tpu.memory_space<vmem>>, %arg11: memref<1x256xf32, #tpu.memory_space<vmem>>, %arg12: memref<256x64xbf16, #tpu.memory_space<vmem>>, %arg13: memref<1x64xf32, #tpu.memory_space<vmem>>, %arg14: memref<1x8x64xf32, #tpu.memory_space<vmem>>, %arg15: memref<8x64xf32, #tpu.memory_space<vmem>>) attributes {dimension_semantics = [#tpu.dimension_semantics<parallel>], iteration_bounds = array<i64: 2>, scalar_prefetch = 0 : i64, scratch_operands = 1 : i64, tpu.core_type = #tpu.core_type<tc>, window_params = [{transform_indices = @transform_0, window_bounds = array<i64: 1, 6, 64>}, {transform_indices = @transform_1, window_bounds = array<i64: 1, 8, 64>}, {transform_indices = @transform_2, window_bounds = array<i64: 1, 8, 64>}, {pipeline_mode = #tpu.pipeline_mode<synchronous>, transform_indices = @transform_3, window_bounds = array<i64: 64, 192>}, {pipeline_mode = #tpu.pipeline_mode<synchronous>, transform_indices = @transform_4, window_bounds = array<i64: 1, 192>}, {pipeline_mode = #tpu.pipeline_mode<synchronous>, transform_indices = @transform_5, window_bounds = array<i64: 64, 128>}, {pipeline_mode = #tpu.pipeline_mode<synchronous>, transform_indices = @transform_6, window_bounds = array<i64: 1, 128>}, {pipeline_mode = #tpu.pipeline_mode<synchronous>, transform_indices = @transform_7, window_bounds = array<i64: 64, 64>}, {pipeline_mode = #tpu.pipeline_mode<synchronous>, transform_indices = @transform_8, window_bounds = array<i64: 1, 64>}, {pipeline_mode = #tpu.pipeline_mode<synchronous>, transform_indices = @transform_9, window_bounds = array<i64: 64, 256>}, {pipeline_mode = #tpu.pipeline_mode<synchronous>, transform_indices = @transform_10, window_bounds = array<i64: 1, 256>}, {pipeline_mode = #tpu.pipeline_mode<synchronous>, transform_indices = @transform_11, window_bounds = array<i64: 256, 64>}, {pipeline_mode = #tpu.pipeline_mode<synchronous>, transform_indices = @transform_12, window_bounds = array<i64: 1, 64>}, {transform_indices = @transform_13, window_bounds = array<i64: 1, 8, 64>}]} {
    %c0 = arith.constant 0 : index
    %c0_0 = arith.constant 0 : index
    %c0_1 = arith.constant 0 : index
    %0 = vector.load %arg3[%c0, %c0_0, %c0_1] : memref<1x8x64xf32, #tpu.memory_space<vmem>>, vector<1x8x64xf32>
    %1 = vector.shape_cast %0 : vector<1x8x64xf32> to vector<8x64xf32>
    %c0_2 = arith.constant 0 : index
    %c0_3 = arith.constant 0 : index
    %c0_4 = arith.constant 0 : index
    %2 = vector.load %arg2[%c0_2, %c0_3, %c0_4] : memref<1x8x64xf32, #tpu.memory_space<vmem>>, vector<1x8x64xf32>
    %3 = vector.shape_cast %2 : vector<1x8x64xf32> to vector<8x64xf32>
    %c0_5 = arith.constant 0 : index
    %c0_6 = arith.constant 0 : index
    %c0_7 = arith.constant 0 : index
    %4 = vector.load %arg1[%c0_5, %c0_6, %c0_7] : memref<1x6x64xf32, #tpu.memory_space<vmem>>, vector<1x6x64xf32>
    %5 = vector.shape_cast %4 : vector<1x6x64xf32> to vector<6x64xf32>
    %cst = arith.constant dense<0.000000e+00> : vector<8xf32>
    %6 = vector.multi_reduction <add>, %1, %cst [1] : vector<8x64xf32> to vector<8xf32>
    %7 = vector.shape_cast %6 : vector<8xf32> to vector<8x1xf32>
    %cst_8 = arith.constant 6.400000e+01 : f32
    %8 = vector.broadcast %cst_8 : f32 to vector<8x1xf32>
    %9 = arith.divf %7, %8 : vector<8x1xf32>
    %10 = vector.broadcast %9 : vector<8x1xf32> to vector<8x64xf32>
    %11 = arith.subf %1, %10 : vector<8x64xf32>
    %12 = arith.mulf %11, %11 : vector<8x64xf32>
    %cst_9 = arith.constant dense<0.000000e+00> : vector<8xf32>
    %13 = vector.multi_reduction <add>, %12, %cst_9 [1] : vector<8x64xf32> to vector<8xf32>
    %14 = vector.shape_cast %13 : vector<8xf32> to vector<8x1xf32>
    %cst_10 = arith.constant 6.400000e+01 : f32
    %15 = vector.broadcast %cst_10 : f32 to vector<8x1xf32>
    %16 = arith.divf %14, %15 : vector<8x1xf32>
    %cst_11 = arith.constant 9.99999997E-7 : f32
    %17 = vector.broadcast %cst_11 : f32 to vector<8x1xf32>
    %18 = arith.addf %16, %17 : vector<8x1xf32>
    %19 = math.rsqrt %18 : vector<8x1xf32>
    %20 = vector.broadcast %19 : vector<8x1xf32> to vector<8x64xf32>
    %21 = arith.mulf %11, %20 : vector<8x64xf32>
    %22 = vector.extract_strided_slice %5 {offsets = [1, 0], sizes = [1, 64], strides = [1, 1]} : vector<6x64xf32> to vector<1x64xf32>
    %cst_12 = arith.constant 1.000000e+00 : f32
    %23 = vector.broadcast %cst_12 : f32 to vector<1x64xf32>
    %24 = arith.addf %23, %22 : vector<1x64xf32>
    %25 = vector.broadcast %24 : vector<1x64xf32> to vector<8x64xf32>
    %26 = arith.mulf %21, %25 : vector<8x64xf32>
    %27 = vector.extract_strided_slice %5 {offsets = [0, 0], sizes = [1, 64], strides = [1, 1]} : vector<6x64xf32> to vector<1x64xf32>
    %28 = vector.broadcast %27 : vector<1x64xf32> to vector<8x64xf32>
    %29 = arith.addf %26, %28 : vector<8x64xf32>
    %30 = arith.truncf %29 : vector<8x64xf32> to vector<8x64xbf16>
    %c0_13 = arith.constant 0 : index
    %c0_14 = arith.constant 0 : index
    %31 = vector.load %arg4[%c0_13, %c0_14] : memref<64x192xbf16, #tpu.memory_space<vmem>>, vector<64x192xbf16>
    %cst_15 = arith.constant dense<0.000000e+00> : vector<8x192xf32>
    %32 = tpu.matmul %30, %31, %cst_15 {dimension_numbers = #tpu.dot_dimension_numbers<[1], [0], [0], [1], [0, 0, 1, 1], [], []>} : vector<8x64xbf16>, vector<64x192xbf16>, vector<8x192xf32> -> vector<8x192xf32>
    %c0_16 = arith.constant 0 : index
    %c0_17 = arith.constant 0 : index
    %33 = vector.load %arg5[%c0_16, %c0_17] : memref<1x192xf32, #tpu.memory_space<vmem>>, vector<1x192xf32>
    %34 = vector.broadcast %33 : vector<1x192xf32> to vector<8x192xf32>
    %35 = arith.addf %32, %34 : vector<8x192xf32>
    %cst_18 = arith.constant dense<0.000000e+00> : vector<8xf32>
    %36 = vector.multi_reduction <add>, %3, %cst_18 [1] : vector<8x64xf32> to vector<8xf32>
    %37 = vector.shape_cast %36 : vector<8xf32> to vector<8x1xf32>
    %cst_19 = arith.constant 6.400000e+01 : f32
    %38 = vector.broadcast %cst_19 : f32 to vector<8x1xf32>
    %39 = arith.divf %37, %38 : vector<8x1xf32>
    %40 = vector.broadcast %39 : vector<8x1xf32> to vector<8x64xf32>
    %41 = arith.subf %3, %40 : vector<8x64xf32>
    %42 = arith.mulf %41, %41 : vector<8x64xf32>
    %cst_20 = arith.constant dense<0.000000e+00> : vector<8xf32>
    %43 = vector.multi_reduction <add>, %42, %cst_20 [1] : vector<8x64xf32> to vector<8xf32>
    %44 = vector.shape_cast %43 : vector<8xf32> to vector<8x1xf32>
    %cst_21 = arith.constant 6.400000e+01 : f32
    %45 = vector.broadcast %cst_21 : f32 to vector<8x1xf32>
    %46 = arith.divf %44, %45 : vector<8x1xf32>
    %cst_22 = arith.constant 9.99999997E-7 : f32
    %47 = vector.broadcast %cst_22 : f32 to vector<8x1xf32>
    %48 = arith.addf %46, %47 : vector<8x1xf32>
    %49 = math.rsqrt %48 : vector<8x1xf32>
    %50 = vector.broadcast %49 : vector<8x1xf32> to vector<8x64xf32>
    %51 = arith.mulf %41, %50 : vector<8x64xf32>
    %52 = vector.extract_strided_slice %5 {offsets = [3, 0], sizes = [1, 64], strides = [1, 1]} : vector<6x64xf32> to vector<1x64xf32>
    %cst_23 = arith.constant 1.000000e+00 : f32
    %53 = vector.broadcast %cst_23 : f32 to vector<1x64xf32>
    %54 = arith.addf %53, %52 : vector<1x64xf32>
    %55 = vector.broadcast %54 : vector<1x64xf32> to vector<8x64xf32>
    %56 = arith.mulf %51, %55 : vector<8x64xf32>
    %57 = vector.extract_strided_slice %5 {offsets = [2, 0], sizes = [1, 64], strides = [1, 1]} : vector<6x64xf32> to vector<1x64xf32>
    %58 = vector.broadcast %57 : vector<1x64xf32> to vector<8x64xf32>
    %59 = arith.addf %56, %58 : vector<8x64xf32>
    %60 = arith.truncf %59 : vector<8x64xf32> to vector<8x64xbf16>
    %c0_24 = arith.constant 0 : index
    %c0_25 = arith.constant 0 : index
    %61 = vector.load %arg6[%c0_24, %c0_25] : memref<64x128xbf16, #tpu.memory_space<vmem>>, vector<64x128xbf16>
    %cst_26 = arith.constant dense<0.000000e+00> : vector<8x128xf32>
    %62 = tpu.matmul %60, %61, %cst_26 {dimension_numbers = #tpu.dot_dimension_numbers<[1], [0], [0], [1], [0, 0, 1, 1], [], []>} : vector<8x64xbf16>, vector<64x128xbf16>, vector<8x128xf32> -> vector<8x128xf32>
    %c0_27 = arith.constant 0 : index
    %c0_28 = arith.constant 0 : index
    %63 = vector.load %arg7[%c0_27, %c0_28] : memref<1x128xf32, #tpu.memory_space<vmem>>, vector<1x128xf32>
    %64 = vector.broadcast %63 : vector<1x128xf32> to vector<8x128xf32>
    %65 = arith.addf %62, %64 : vector<8x128xf32>
    %66 = vector.extract_strided_slice %35 {offsets = [0, 0], sizes = [8, 64], strides = [1, 1]} : vector<8x192xf32> to vector<8x64xf32>
    %67 = arith.truncf %66 : vector<8x64xf32> to vector<8x64xbf16>
    %68 = vector.extract_strided_slice %35 {offsets = [0, 64], sizes = [8, 64], strides = [1, 1]} : vector<8x192xf32> to vector<8x64xf32>
    %69 = vector.extract_strided_slice %65 {offsets = [0, 0], sizes = [8, 64], strides = [1, 1]} : vector<8x128xf32> to vector<8x64xf32>
    %70 = tpu.concatenate %68, %69 in 0 : vector<8x64xf32>, vector<8x64xf32> -> vector<16x64xf32>
    %71 = arith.truncf %70 : vector<16x64xf32> to vector<16x64xbf16>
    %72 = vector.extract_strided_slice %35 {offsets = [0, 128], sizes = [8, 64], strides = [1, 1]} : vector<8x192xf32> to vector<8x64xf32>
    %73 = vector.extract_strided_slice %65 {offsets = [0, 64], sizes = [8, 64], strides = [1, 1]} : vector<8x128xf32> to vector<8x64xf32>
    %74 = tpu.concatenate %72, %73 in 0 : vector<8x64xf32>, vector<8x64xf32> -> vector<16x64xf32>
    %75 = arith.truncf %74 : vector<16x64xf32> to vector<16x64xbf16>
    %c0_29 = arith.constant 0 : index
    %c0_30 = arith.constant 0 : index
    %76 = vector.load %arg8[%c0_29, %c0_30] : memref<64x64xbf16, #tpu.memory_space<vmem>>, vector<64x64xbf16>
    %cst_31 = arith.constant 0.000000e+00 : f32
    %77 = vector.broadcast %cst_31 : f32 to vector<8x64xf32>
    %c0_32 = arith.constant 0 : index
    %c0_33 = arith.constant 0 : index
    %78 = vector.load %arg15[%c0_32, %c0_33] : memref<8x64xf32, #tpu.memory_space<vmem>>, vector<8x64xf32>
    tpu.vector_store %arg15[%c0_32, %c0_33], %77 {strides = array<i32>} : memref<8x64xf32, #tpu.memory_space<vmem>>, vector<8x64xf32>,
    %79 = vector.extract_strided_slice %67 {offsets = [0, 0], sizes = [8, 16], strides = [1, 1]} : vector<8x64xbf16> to vector<8x16xbf16>
    %80 = vector.extract_strided_slice %71 {offsets = [0, 0], sizes = [16, 16], strides = [1, 1]} : vector<16x64xbf16> to vector<16x16xbf16>
    %81 = vector.extract_strided_slice %75 {offsets = [0, 0], sizes = [16, 16], strides = [1, 1]} : vector<16x64xbf16> to vector<16x16xbf16>
    %cst_34 = arith.constant dense<0.000000e+00> : vector<8x16xf32>
    %82 = tpu.matmul %79, %80, %cst_34 {dimension_numbers = #tpu.dot_dimension_numbers<[1], [1], [0], [0], [0, 0, 1, 0], [], []>} : vector<8x16xbf16>, vector<16x16xbf16>, vector<8x16xf32> -> vector<8x16xf32>
    %cst_35 = arith.constant 2.500000e-01 : f32
    %83 = vector.broadcast %cst_35 : f32 to vector<8x16xf32>
    %84 = arith.mulf %82, %83 : vector<8x16xf32>
    %cst_36 = arith.constant dense<0xFF800000> : vector<8xf32>
    %85 = vector.multi_reduction <maximumf>, %84, %cst_36 [1] : vector<8x16xf32> to vector<8xf32>
    %86 = vector.shape_cast %85 : vector<8xf32> to vector<8x1xf32>
    %87 = vector.broadcast %86 : vector<8x1xf32> to vector<8x16xf32>
    %88 = arith.subf %84, %87 : vector<8x16xf32>
    %89 = math.exp %88 : vector<8x16xf32>
    %cst_37 = arith.constant dense<0.000000e+00> : vector<8xf32>
    %90 = vector.multi_reduction <add>, %89, %cst_37 [1] : vector<8x16xf32> to vector<8xf32>
    %91 = vector.shape_cast %90 : vector<8xf32> to vector<8x1xf32>
    %92 = tpu.reciprocal %91 {approx = true} : vector<8x1xf32> -> vector<8x1xf32>
    %93 = vector.broadcast %92 : vector<8x1xf32> to vector<8x16xf32>
    %94 = arith.mulf %89, %93 : vector<8x16xf32>
    %95 = arith.truncf %94 : vector<8x16xf32> to vector<8x16xbf16>
    %cst_38 = arith.constant dense<0.000000e+00> : vector<8x16xf32>
    %96 = tpu.matmul %95, %81, %cst_38 {dimension_numbers = #tpu.dot_dimension_numbers<[1], [0], [0], [1], [0, 0, 1, 1], [], []>} : vector<8x16xbf16>, vector<16x16xbf16>, vector<8x16xf32> -> vector<8x16xf32>
    %c0_39 = arith.constant 0 : index
    %c0_40 = arith.constant 0 : index
    %97 = vector.load %arg15[%c0_39, %c0_40] : memref<8x64xf32, #tpu.memory_space<vmem>>, vector<8x64xf32>
    %98 = arith.truncf %96 : vector<8x16xf32> to vector<8x16xbf16>
    %99 = vector.extract_strided_slice %76 {offsets = [0, 0], sizes = [16, 64], strides = [1, 1]} : vector<64x64xbf16> to vector<16x64xbf16>
    %cst_41 = arith.constant dense<0.000000e+00> : vector<8x64xf32>
    %100 = tpu.matmul %98, %99, %cst_41 {dimension_numbers = #tpu.dot_dimension_numbers<[1], [0], [0], [1], [0, 0, 1, 1], [], []>} : vector<8x16xbf16>, vector<16x64xbf16>, vector<8x64xf32> -> vector<8x64xf32>
    %101 = arith.addf %97, %100 : vector<8x64xf32>
    %c0_42 = arith.constant 0 : index
    %c0_43 = arith.constant 0 : index
    %102 = vector.load %arg15[%c0_42, %c0_43] : memref<8x64xf32, #tpu.memory_space<vmem>>, vector<8x64xf32>
    tpu.vector_store %arg15[%c0_42, %c0_43], %101 {strides = array<i32>} : memref<8x64xf32, #tpu.memory_space<vmem>>, vector<8x64xf32>,
    %103 = vector.extract_strided_slice %67 {offsets = [0, 16], sizes = [8, 16], strides = [1, 1]} : vector<8x64xbf16> to vector<8x16xbf16>
    %104 = vector.extract_strided_slice %71 {offsets = [0, 16], sizes = [16, 16], strides = [1, 1]} : vector<16x64xbf16> to vector<16x16xbf16>
    %105 = vector.extract_strided_slice %75 {offsets = [0, 16], sizes = [16, 16], strides = [1, 1]} : vector<16x64xbf16> to vector<16x16xbf16>
    %cst_44 = arith.constant dense<0.000000e+00> : vector<8x16xf32>
    %106 = tpu.matmul %103, %104, %cst_44 {dimension_numbers = #tpu.dot_dimension_numbers<[1], [1], [0], [0], [0, 0, 1, 0], [], []>} : vector<8x16xbf16>, vector<16x16xbf16>, vector<8x16xf32> -> vector<8x16xf32>
    %cst_45 = arith.constant 2.500000e-01 : f32
    %107 = vector.broadcast %cst_45 : f32 to vector<8x16xf32>
    %108 = arith.mulf %106, %107 : vector<8x16xf32>
    %cst_46 = arith.constant dense<0xFF800000> : vector<8xf32>
    %109 = vector.multi_reduction <maximumf>, %108, %cst_46 [1] : vector<8x16xf32> to vector<8xf32>
    %110 = vector.shape_cast %109 : vector<8xf32> to vector<8x1xf32>
    %111 = vector.broadcast %110 : vector<8x1xf32> to vector<8x16xf32>
    %112 = arith.subf %108, %111 : vector<8x16xf32>
    %113 = math.exp %112 : vector<8x16xf32>
    %cst_47 = arith.constant dense<0.000000e+00> : vector<8xf32>
    %114 = vector.multi_reduction <add>, %113, %cst_47 [1] : vector<8x16xf32> to vector<8xf32>
    %115 = vector.shape_cast %114 : vector<8xf32> to vector<8x1xf32>
    %116 = tpu.reciprocal %115 {approx = true} : vector<8x1xf32> -> vector<8x1xf32>
    %117 = vector.broadcast %116 : vector<8x1xf32> to vector<8x16xf32>
    %118 = arith.mulf %113, %117 : vector<8x16xf32>
    %119 = arith.truncf %118 : vector<8x16xf32> to vector<8x16xbf16>
    %cst_48 = arith.constant dense<0.000000e+00> : vector<8x16xf32>
    %120 = tpu.matmul %119, %105, %cst_48 {dimension_numbers = #tpu.dot_dimension_numbers<[1], [0], [0], [1], [0, 0, 1, 1], [], []>} : vector<8x16xbf16>, vector<16x16xbf16>, vector<8x16xf32> -> vector<8x16xf32>
    %c0_49 = arith.constant 0 : index
    %c0_50 = arith.constant 0 : index
    %121 = vector.load %arg15[%c0_49, %c0_50] : memref<8x64xf32, #tpu.memory_space<vmem>>, vector<8x64xf32>
    %122 = arith.truncf %120 : vector<8x16xf32> to vector<8x16xbf16>
    %123 = vector.extract_strided_slice %76 {offsets = [16, 0], sizes = [16, 64], strides = [1, 1]} : vector<64x64xbf16> to vector<16x64xbf16>
    %cst_51 = arith.constant dense<0.000000e+00> : vector<8x64xf32>
    %124 = tpu.matmul %122, %123, %cst_51 {dimension_numbers = #tpu.dot_dimension_numbers<[1], [0], [0], [1], [0, 0, 1, 1], [], []>} : vector<8x16xbf16>, vector<16x64xbf16>, vector<8x64xf32> -> vector<8x64xf32>
    %125 = arith.addf %121, %124 : vector<8x64xf32>
    %c0_52 = arith.constant 0 : index
    %c0_53 = arith.constant 0 : index
    %126 = vector.load %arg15[%c0_52, %c0_53] : memref<8x64xf32, #tpu.memory_space<vmem>>, vector<8x64xf32>
    tpu.vector_store %arg15[%c0_52, %c0_53], %125 {strides = array<i32>} : memref<8x64xf32, #tpu.memory_space<vmem>>, vector<8x64xf32>,
    %127 = vector.extract_strided_slice %67 {offsets = [0, 32], sizes = [8, 16], strides = [1, 1]} : vector<8x64xbf16> to vector<8x16xbf16>
    %128 = vector.extract_strided_slice %71 {offsets = [0, 32], sizes = [16, 16], strides = [1, 1]} : vector<16x64xbf16> to vector<16x16xbf16>
    %129 = vector.extract_strided_slice %75 {offsets = [0, 32], sizes = [16, 16], strides = [1, 1]} : vector<16x64xbf16> to vector<16x16xbf16>
    %cst_54 = arith.constant dense<0.000000e+00> : vector<8x16xf32>
    %130 = tpu.matmul %127, %128, %cst_54 {dimension_numbers = #tpu.dot_dimension_numbers<[1], [1], [0], [0], [0, 0, 1, 0], [], []>} : vector<8x16xbf16>, vector<16x16xbf16>, vector<8x16xf32> -> vector<8x16xf32>
    %cst_55 = arith.constant 2.500000e-01 : f32
    %131 = vector.broadcast %cst_55 : f32 to vector<8x16xf32>
    %132 = arith.mulf %130, %131 : vector<8x16xf32>
    %cst_56 = arith.constant dense<0xFF800000> : vector<8xf32>
    %133 = vector.multi_reduction <maximumf>, %132, %cst_56 [1] : vector<8x16xf32> to vector<8xf32>
    %134 = vector.shape_cast %133 : vector<8xf32> to vector<8x1xf32>
    %135 = vector.broadcast %134 : vector<8x1xf32> to vector<8x16xf32>
    %136 = arith.subf %132, %135 : vector<8x16xf32>
    %137 = math.exp %136 : vector<8x16xf32>
    %cst_57 = arith.constant dense<0.000000e+00> : vector<8xf32>
    %138 = vector.multi_reduction <add>, %137, %cst_57 [1] : vector<8x16xf32> to vector<8xf32>
    %139 = vector.shape_cast %138 : vector<8xf32> to vector<8x1xf32>
    %140 = tpu.reciprocal %139 {approx = true} : vector<8x1xf32> -> vector<8x1xf32>
    %141 = vector.broadcast %140 : vector<8x1xf32> to vector<8x16xf32>
    %142 = arith.mulf %137, %141 : vector<8x16xf32>
    %143 = arith.truncf %142 : vector<8x16xf32> to vector<8x16xbf16>
    %cst_58 = arith.constant dense<0.000000e+00> : vector<8x16xf32>
    %144 = tpu.matmul %143, %129, %cst_58 {dimension_numbers = #tpu.dot_dimension_numbers<[1], [0], [0], [1], [0, 0, 1, 1], [], []>} : vector<8x16xbf16>, vector<16x16xbf16>, vector<8x16xf32> -> vector<8x16xf32>
    %c0_59 = arith.constant 0 : index
    %c0_60 = arith.constant 0 : index
    %145 = vector.load %arg15[%c0_59, %c0_60] : memref<8x64xf32, #tpu.memory_space<vmem>>, vector<8x64xf32>
    %146 = arith.truncf %144 : vector<8x16xf32> to vector<8x16xbf16>
    %147 = vector.extract_strided_slice %76 {offsets = [32, 0], sizes = [16, 64], strides = [1, 1]} : vector<64x64xbf16> to vector<16x64xbf16>
    %cst_61 = arith.constant dense<0.000000e+00> : vector<8x64xf32>
    %148 = tpu.matmul %146, %147, %cst_61 {dimension_numbers = #tpu.dot_dimension_numbers<[1], [0], [0], [1], [0, 0, 1, 1], [], []>} : vector<8x16xbf16>, vector<16x64xbf16>, vector<8x64xf32> -> vector<8x64xf32>
    %149 = arith.addf %145, %148 : vector<8x64xf32>
    %c0_62 = arith.constant 0 : index
    %c0_63 = arith.constant 0 : index
    %150 = vector.load %arg15[%c0_62, %c0_63] : memref<8x64xf32, #tpu.memory_space<vmem>>, vector<8x64xf32>
    tpu.vector_store %arg15[%c0_62, %c0_63], %149 {strides = array<i32>} : memref<8x64xf32, #tpu.memory_space<vmem>>, vector<8x64xf32>,
    %151 = vector.extract_strided_slice %67 {offsets = [0, 48], sizes = [8, 16], strides = [1, 1]} : vector<8x64xbf16> to vector<8x16xbf16>
    %152 = vector.extract_strided_slice %71 {offsets = [0, 48], sizes = [16, 16], strides = [1, 1]} : vector<16x64xbf16> to vector<16x16xbf16>
    %153 = vector.extract_strided_slice %75 {offsets = [0, 48], sizes = [16, 16], strides = [1, 1]} : vector<16x64xbf16> to vector<16x16xbf16>
    %cst_64 = arith.constant dense<0.000000e+00> : vector<8x16xf32>
    %154 = tpu.matmul %151, %152, %cst_64 {dimension_numbers = #tpu.dot_dimension_numbers<[1], [1], [0], [0], [0, 0, 1, 0], [], []>} : vector<8x16xbf16>, vector<16x16xbf16>, vector<8x16xf32> -> vector<8x16xf32>
    %cst_65 = arith.constant 2.500000e-01 : f32
    %155 = vector.broadcast %cst_65 : f32 to vector<8x16xf32>
    %156 = arith.mulf %154, %155 : vector<8x16xf32>
    %cst_66 = arith.constant dense<0xFF800000> : vector<8xf32>
    %157 = vector.multi_reduction <maximumf>, %156, %cst_66 [1] : vector<8x16xf32> to vector<8xf32>
    %158 = vector.shape_cast %157 : vector<8xf32> to vector<8x1xf32>
    %159 = vector.broadcast %158 : vector<8x1xf32> to vector<8x16xf32>
    %160 = arith.subf %156, %159 : vector<8x16xf32>
    %161 = math.exp %160 : vector<8x16xf32>
    %cst_67 = arith.constant dense<0.000000e+00> : vector<8xf32>
    %162 = vector.multi_reduction <add>, %161, %cst_67 [1] : vector<8x16xf32> to vector<8xf32>
    %163 = vector.shape_cast %162 : vector<8xf32> to vector<8x1xf32>
    %164 = tpu.reciprocal %163 {approx = true} : vector<8x1xf32> -> vector<8x1xf32>
    %165 = vector.broadcast %164 : vector<8x1xf32> to vector<8x16xf32>
    %166 = arith.mulf %161, %165 : vector<8x16xf32>
    %167 = arith.truncf %166 : vector<8x16xf32> to vector<8x16xbf16>
    %cst_68 = arith.constant dense<0.000000e+00> : vector<8x16xf32>
    %168 = tpu.matmul %167, %153, %cst_68 {dimension_numbers = #tpu.dot_dimension_numbers<[1], [0], [0], [1], [0, 0, 1, 1], [], []>} : vector<8x16xbf16>, vector<16x16xbf16>, vector<8x16xf32> -> vector<8x16xf32>
    %c0_69 = arith.constant 0 : index
    %c0_70 = arith.constant 0 : index
    %169 = vector.load %arg15[%c0_69, %c0_70] : memref<8x64xf32, #tpu.memory_space<vmem>>, vector<8x64xf32>
    %170 = arith.truncf %168 : vector<8x16xf32> to vector<8x16xbf16>
    %171 = vector.extract_strided_slice %76 {offsets = [48, 0], sizes = [16, 64], strides = [1, 1]} : vector<64x64xbf16> to vector<16x64xbf16>
    %cst_71 = arith.constant dense<0.000000e+00> : vector<8x64xf32>
    %172 = tpu.matmul %170, %171, %cst_71 {dimension_numbers = #tpu.dot_dimension_numbers<[1], [0], [0], [1], [0, 0, 1, 1], [], []>} : vector<8x16xbf16>, vector<16x64xbf16>, vector<8x64xf32> -> vector<8x64xf32>
    %173 = arith.addf %169, %172 : vector<8x64xf32>
    %c0_72 = arith.constant 0 : index
    %c0_73 = arith.constant 0 : index
    %174 = vector.load %arg15[%c0_72, %c0_73] : memref<8x64xf32, #tpu.memory_space<vmem>>, vector<8x64xf32>
    tpu.vector_store %arg15[%c0_72, %c0_73], %173 {strides = array<i32>} : memref<8x64xf32, #tpu.memory_space<vmem>>, vector<8x64xf32>,
    %c0_74 = arith.constant 0 : index
    %c0_75 = arith.constant 0 : index
    %175 = vector.load %arg15[%c0_74, %c0_75] : memref<8x64xf32, #tpu.memory_space<vmem>>, vector<8x64xf32>
    %176 = arith.addf %1, %175 : vector<8x64xf32>
    %c0_76 = arith.constant 0 : index
    %c0_77 = arith.constant 0 : index
    %177 = vector.load %arg9[%c0_76, %c0_77] : memref<1x64xf32, #tpu.memory_space<vmem>>, vector<1x64xf32>
    %178 = vector.broadcast %177 : vector<1x64xf32> to vector<8x64xf32>
    %179 = arith.addf %176, %178 : vector<8x64xf32>
    %cst_78 = arith.constant dense<0.000000e+00> : vector<8xf32>
    %180 = vector.multi_reduction <add>, %179, %cst_78 [1] : vector<8x64xf32> to vector<8xf32>
    %181 = vector.shape_cast %180 : vector<8xf32> to vector<8x1xf32>
    %cst_79 = arith.constant 6.400000e+01 : f32
    %182 = vector.broadcast %cst_79 : f32 to vector<8x1xf32>
    %183 = arith.divf %181, %182 : vector<8x1xf32>
    %184 = vector.broadcast %183 : vector<8x1xf32> to vector<8x64xf32>
    %185 = arith.subf %179, %184 : vector<8x64xf32>
    %186 = arith.mulf %185, %185 : vector<8x64xf32>
    %cst_80 = arith.constant dense<0.000000e+00> : vector<8xf32>
    %187 = vector.multi_reduction <add>, %186, %cst_80 [1] : vector<8x64xf32> to vector<8xf32>
    %188 = vector.shape_cast %187 : vector<8xf32> to vector<8x1xf32>
    %cst_81 = arith.constant 6.400000e+01 : f32
    %189 = vector.broadcast %cst_81 : f32 to vector<8x1xf32>
    %190 = arith.divf %188, %189 : vector<8x1xf32>
    %cst_82 = arith.constant 9.99999997E-7 : f32
    %191 = vector.broadcast %cst_82 : f32 to vector<8x1xf32>
    %192 = arith.addf %190, %191 : vector<8x1xf32>
    %193 = math.rsqrt %192 : vector<8x1xf32>
    %194 = vector.broadcast %193 : vector<8x1xf32> to vector<8x64xf32>
    %195 = arith.mulf %185, %194 : vector<8x64xf32>
    %196 = vector.extract_strided_slice %5 {offsets = [5, 0], sizes = [1, 64], strides = [1, 1]} : vector<6x64xf32> to vector<1x64xf32>
    %cst_83 = arith.constant 1.000000e+00 : f32
    %197 = vector.broadcast %cst_83 : f32 to vector<1x64xf32>
    %198 = arith.addf %197, %196 : vector<1x64xf32>
    %199 = vector.broadcast %198 : vector<1x64xf32> to vector<8x64xf32>
    %200 = arith.mulf %195, %199 : vector<8x64xf32>
    %201 = vector.extract_strided_slice %5 {offsets = [4, 0], sizes = [1, 64], strides = [1, 1]} : vector<6x64xf32> to vector<1x64xf32>
    %202 = vector.broadcast %201 : vector<1x64xf32> to vector<8x64xf32>
    %203 = arith.addf %200, %202 : vector<8x64xf32>
    %204 = arith.truncf %203 : vector<8x64xf32> to vector<8x64xbf16>
    %c0_84 = arith.constant 0 : index
    %c0_85 = arith.constant 0 : index
    %205 = vector.load %arg10[%c0_84, %c0_85] : memref<64x256xbf16, #tpu.memory_space<vmem>>, vector<64x256xbf16>
    %cst_86 = arith.constant dense<0.000000e+00> : vector<8x256xf32>
    %206 = tpu.matmul %204, %205, %cst_86 {dimension_numbers = #tpu.dot_dimension_numbers<[1], [0], [0], [1], [0, 0, 1, 1], [], []>} : vector<8x64xbf16>, vector<64x256xbf16>, vector<8x256xf32> -> vector<8x256xf32>
    %c0_87 = arith.constant 0 : index
    %c0_88 = arith.constant 0 : index
    %207 = vector.load %arg11[%c0_87, %c0_88] : memref<1x256xf32, #tpu.memory_space<vmem>>, vector<1x256xf32>
    %208 = vector.broadcast %207 : vector<1x256xf32> to vector<8x256xf32>
    %209 = arith.addf %206, %208 : vector<8x256xf32>
    %cst_89 = arith.constant 0.000000e+00 : f32
    %210 = vector.broadcast %cst_89 : f32 to vector<8x256xf32>
    %211 = arith.maximumf %209, %210 : vector<8x256xf32>
    %212 = arith.mulf %211, %211 : vector<8x256xf32>
    %213 = arith.truncf %212 : vector<8x256xf32> to vector<8x256xbf16>
    %c0_90 = arith.constant 0 : index
    %c0_91 = arith.constant 0 : index
    %214 = vector.load %arg12[%c0_90, %c0_91] : memref<256x64xbf16, #tpu.memory_space<vmem>>, vector<256x64xbf16>
    %cst_92 = arith.constant dense<0.000000e+00> : vector<8x64xf32>
    %215 = tpu.matmul %213, %214, %cst_92 {dimension_numbers = #tpu.dot_dimension_numbers<[1], [0], [0], [1], [0, 0, 1, 1], [], []>} : vector<8x256xbf16>, vector<256x64xbf16>, vector<8x64xf32> -> vector<8x64xf32>
    %216 = arith.addf %179, %215 : vector<8x64xf32>
    %c0_93 = arith.constant 0 : index
    %c0_94 = arith.constant 0 : index
    %217 = vector.load %arg13[%c0_93, %c0_94] : memref<1x64xf32, #tpu.memory_space<vmem>>, vector<1x64xf32>
    %218 = vector.broadcast %217 : vector<1x64xf32> to vector<8x64xf32>
    %219 = arith.addf %216, %218 : vector<8x64xf32>
    %c0_95 = arith.constant 0 : index
    %c0_96 = arith.constant 0 : index
    %c0_97 = arith.constant 0 : index
    %220 = vector.load %arg14[%c0_95, %c0_96, %c0_97] : memref<1x8x64xf32, #tpu.memory_space<vmem>>, vector<1x8x64xf32>
    %221 = vector.shape_cast %220 : vector<1x8x64xf32> to vector<8x64xf32>
    %222 = vector.shape_cast %219 : vector<8x64xf32> to vector<1x8x64xf32>
    tpu.vector_store %arg14[%c0_95, %c0_96, %c0_97], %222 {strides = array<i32>} : memref<1x8x64xf32, #tpu.memory_space<vmem>>, vector<1x8x64xf32>,
    return
  }
  func.func @transform_0(%arg0: i32) -> (i32, i32, i32) {
    %c0_i32 = arith.constant 0 : i32
    %c0_i32_0 = arith.constant 0 : i32
    %c0_i32_1 = arith.constant 0 : i32
    return %arg0, %c0_i32, %c0_i32_0 : i32, i32, i32
  }
  func.func @transform_1(%arg0: i32) -> (i32, i32, i32) {
    %c0_i32 = arith.constant 0 : i32
    %c0_i32_0 = arith.constant 0 : i32
    %c0_i32_1 = arith.constant 0 : i32
    return %arg0, %c0_i32, %c0_i32_0 : i32, i32, i32
  }
  func.func @transform_2(%arg0: i32) -> (i32, i32, i32) {
    %c0_i32 = arith.constant 0 : i32
    %c0_i32_0 = arith.constant 0 : i32
    %c0_i32_1 = arith.constant 0 : i32
    return %arg0, %c0_i32, %c0_i32_0 : i32, i32, i32
  }
  func.func @transform_3(%arg0: i32) -> (i32, i32) {
    %c0_i32 = arith.constant 0 : i32
    %c0_i32_0 = arith.constant 0 : i32
    %c0_i32_1 = arith.constant 0 : i32
    return %c0_i32, %c0_i32_0 : i32, i32
  }
  func.func @transform_4(%arg0: i32) -> (i32, i32) {
    %c0_i32 = arith.constant 0 : i32
    %c0_i32_0 = arith.constant 0 : i32
    %c0_i32_1 = arith.constant 0 : i32
    return %c0_i32, %c0_i32_0 : i32, i32
  }
  func.func @transform_5(%arg0: i32) -> (i32, i32) {
    %c0_i32 = arith.constant 0 : i32
    %c0_i32_0 = arith.constant 0 : i32
    %c0_i32_1 = arith.constant 0 : i32
    return %c0_i32, %c0_i32_0 : i32, i32
  }
  func.func @transform_6(%arg0: i32) -> (i32, i32) {
    %c0_i32 = arith.constant 0 : i32
    %c0_i32_0 = arith.constant 0 : i32
    %c0_i32_1 = arith.constant 0 : i32
    return %c0_i32, %c0_i32_0 : i32, i32
  }
  func.func @transform_7(%arg0: i32) -> (i32, i32) {
    %c0_i32 = arith.constant 0 : i32
    %c0_i32_0 = arith.constant 0 : i32
    %c0_i32_1 = arith.constant 0 : i32
    return %c0_i32, %c0_i32_0 : i32, i32
  }
  func.func @transform_8(%arg0: i32) -> (i32, i32) {
    %c0_i32 = arith.constant 0 : i32
    %c0_i32_0 = arith.constant 0 : i32
    %c0_i32_1 = arith.constant 0 : i32
    return %c0_i32, %c0_i32_0 : i32, i32
  }
  func.func @transform_9(%arg0: i32) -> (i32, i32) {
    %c0_i32 = arith.constant 0 : i32
    %c0_i32_0 = arith.constant 0 : i32
    %c0_i32_1 = arith.constant 0 : i32
    return %c0_i32, %c0_i32_0 : i32, i32
  }
  func.func @transform_10(%arg0: i32) -> (i32, i32) {
    %c0_i32 = arith.constant 0 : i32
    %c0_i32_0 = arith.constant 0 : i32
    %c0_i32_1 = arith.constant 0 : i32
    return %c0_i32, %c0_i32_0 : i32, i32
  }
  func.func @transform_11(%arg0: i32) -> (i32, i32) {
    %c0_i32 = arith.constant 0 : i32
    %c0_i32_0 = arith.constant 0 : i32
    %c0_i32_1 = arith.constant 0 : i32
    return %c0_i32, %c0_i32_0 : i32, i32
  }
  func.func @transform_12(%arg0: i32) -> (i32, i32) {
    %c0_i32 = arith.constant 0 : i32
    %c0_i32_0 = arith.constant 0 : i32
    %c0_i32_1 = arith.constant 0 : i32
    return %c0_i32, %c0_i32_0 : i32, i32
  }
  func.func @transform_13(%arg0: i32) -> (i32, i32, i32) {
    %c0_i32 = arith.constant 0 : i32
    %c0_i32_0 = arith.constant 0 : i32
    %c0_i32_1 = arith.constant 0 : i32
    return %arg0, %c0_i32, %c0_i32_0 : i32, i32, i32
  }
}

</mosaic_0001>

<llo_original>
// kernel: ella_forward.5
$region0: #{ella_forward.5}
  #allocation0 [shape = 'u32[]', space=smem, size = 0x4, offset = 0x4, fixed_abs, tag = 'smem constant byte address 0x4 - core index']
  #allocation1 [shape = 'u32[72,128]{1,0:T(1,128)}', space=vmem, size = 0x9000, scoped, tag = 'internal scratch']
  %s0 = inlined_call_operand.vmem [shape: f32[2,32], index: 0, kind: input, shape index: {}]
  %s1 = inlined_call_operand.hbm [shape: bf16[32,64], index: 1, kind: input, shape index: {}]
  %s2 = inlined_call_operand.vmem [shape: f32[1,64], index: 2, kind: input, shape index: {}]
  %s3 = inlined_call_operand.vmem [shape: bf16[64,64], index: 3, kind: input, shape index: {}]
  %s4 = inlined_call_operand.vmem [shape: f32[1,64], index: 4, kind: input, shape index: {}]
  %s5 = inlined_call_operand.vmem [shape: f32[2,64], index: 5, kind: output, shape index: {}]
  %s6 = sld [smem:[#allocation0]]
  $region34: #{ella_forward.5} parent=0
    _
  %s8 = ssub.s32 1, %s6
  %s9 = scalar_select 0, %s8, %s6
  $region1: #{ella_forward.5} parent=0
    #allocation2 [shape = 'u8[8192]{0}', space=vmem, size = 0x2000, scoped, tag = 'input window, operand 1, single buffered']
    #allocation3 [shape = 's32[1]{0}', space=sflag, size = 0x4, scoped, tag = 'scoped memory for ella_forward.5']
    %10 = vsyncpa [#allocation3], 0
    // Predicated region
    $region2: #{ella_forward.5} parent=1 // pred_check
      _
    $region3: #{ella_forward.5} parent=1 // pred_check_branch
      %12 = sbr.rel (0) target = $region5
    $region4: #{ella_forward.5} parent=1 // pred_region
      _
    $region5: #{ella_forward.5} parent=1 // pred_fallthru
      _
    // Predicated region
    $region6: #{ella_forward.5} parent=1 // pred_check
      _
    $region7: #{ella_forward.5} parent=1 // pred_check_branch
      %14 = sbr.rel (0) target = $region9
    $region8: #{ella_forward.5} parent=1 // pred_region
      %16 = vsyncadd [#allocation3], 0
      %s17 = sshll.u32 %s1, 4
      %s18 = int_to_ptr.hbm [resolvable:$true] %s17
      %s19 = sshll.u32 [#allocation2], 4
      %s20 = int_to_ptr.vmem [resolvable:$true] %s19
      %25 = dma.hbm_to_vmem [thread:$0]  %s18, 256, %s20, [#allocation3], 64, 64, 4
    $region9: #{ella_forward.5} parent=1 // pred_fallthru
      _
    // Predicated region
    $region10: #{ella_forward.5} parent=1 // pred_check
      _
    $region11: #{ella_forward.5} parent=1 // pred_check_branch
      %27 = sbr.rel (0) target = $region13
    $region12: #{ella_forward.5} parent=1 // pred_region
      _
    $region13: #{ella_forward.5} parent=1 // pred_fallthru
      _
    // Predicated region
    $region14: #{ella_forward.5} parent=1 // pred_check
      _
    $region15: #{ella_forward.5} parent=1 // pred_check_branch
      %29 = sbr.rel (0) target = $region17
    $region16: #{ella_forward.5} parent=1 // pred_region
      _
    $region17: #{ella_forward.5} parent=1 // pred_fallthru
      _
    // Predicated region
    $region18: #{ella_forward.5} parent=1 // pred_check
      _
    $region19: #{ella_forward.5} parent=1 // pred_check_branch
      %31 = sbr.rel (0) target = $region21
    $region20: #{ella_forward.5} parent=1 // pred_region
      _
    $region21: #{ella_forward.5} parent=1 // pred_fallthru
      _
    // Predicated region
    $region22: #{ella_forward.5} parent=1 // pred_check
      _
    $region23: #{ella_forward.5} parent=1 // pred_check_branch
      %33 = sbr.rel (0) target = $region25
    $region24: #{ella_forward.5} parent=1 // pred_region
      %35 = dma.done [#allocation3], 256
    $region25: #{ella_forward.5} parent=1 // pred_fallthru
      _
    %v37 = vld [vmem:[%s0] sm:$0x3]
    %v38 = vpack.c.bf16 %v37, %v37
    %v39 = vld [vmem:[#allocation2] sm:$0xf]
    %v40 = vld [vmem:[#allocation2 + $0x4] sm:$0xf]
    %v41 = vld [vmem:[#allocation2 + $0x8] sm:$0xf]
    %v42 = vld [vmem:[#allocation2 + $0xc] sm:$0xf]
    %v43 = vld [vmem:[%s2] sm:$0x1]
    %v45 = vperm.slane %v43, 0
    %v51 = vunpack.c.l.b16 %v39
    %v52 = vunpack.c.l.b16 %v40
    %v53 = vunpack.c.l.b16 %v41
    %v54 = vunpack.c.l.b16 %v42
    %v55 = vpack.c.b16 %v52, %v51
    %v56 = vpack.c.b16 %v54, %v53
    %vm59 = vcmask 261120
    %v61 = vsel %vm59, %v38, 0
    %63 = vmatpush.bf16.msra.mxu0 0
    %64 = vmatpush.bf16.msra.mxu0 0
    %65 = vmatpush.bf16.msra.mxu0 0
    %66 = vmatpush.bf16.msra.mxu0 0
    %67 = vmatpush.bf16.msra.mxu0 0
    %68 = vmatpush.bf16.msra.mxu0 0
    %69 = vmatpush.bf16.msra.mxu0 %v56
    %70 = vmatpush.bf16.msra.mxu0 %v55
    %71 = vmatmul.bf16.gmra.mxu0 %v61
    %v72 = vpop.f32.mrf.mxu0
    %v73 = vadd.f32 %v45, %v72
    %v74 = vpop.f32.mrf.mxu0
    %75 = vdwg.mxu0
    %v76 = vxor.u32 %v73, 2147483648
    %v77 = vmul.f32 %v76, 1.442695
    %v78 = vpow.pop %v77
    %v79 = vadd.f32 %v78, 1.0
    %v80 = vrcp.pop %v79
    %v81 = vmul.f32 %v79, %v80
    %v82 = vsub.f32 1.0, %v81
    %v83 = vmul.f32 %v80, %v82
    %v84 = vadd.f32 %v80, %v83
    %vm85 = vweird.f32 %v79
    %vm86 = vweird.f32 %v80
    %vm87 = vmor %vm85, %vm86
    %v88 = vsel %vm87, %v80, %v84
    %v89 = vand.u32 2147483647, %v79
    %vm90 = vcmp.eq.f32.partialorder %v89, 8.507059e+37
    %v91 = vand.u32 %v79, 2147483648
    %v92 = vor.u32 1.1754944e-38, %v91
    %v93 = vsel %vm90, %v92, %v88
    %v94 = vmul.f32 1.0, %v93
    %v95 = vmul.f32 %v73, %v94
    %v96 = vpack.c.bf16 %v95, %v95
    %v97 = vld [vmem:[%s3] sm:$0xf]
    %v98 = vld [vmem:[%s3 + $0x4] sm:$0xf]
    %v99 = vld [vmem:[%s3 + $0x8] sm:$0xf]
    %v100 = vld [vmem:[%s3 + $0xc] sm:$0xf]
    %v101 = vld [vmem:[%s3 + $0x10] sm:$0xf]
    %v102 = vld [vmem:[%s3 + $0x14] sm:$0xf]
    %v103 = vld [vmem:[%s3 + $0x18] sm:$0xf]
    %v104 = vld [vmem:[%s3 + $0x1c] sm:$0xf]
    %v105 = vld [vmem:[%s4] sm:$0x1]
    %v107 = vperm.slane %v105, 0
    %v117 = vunpack.c.l.b16 %v97
    %v118 = vunpack.c.l.b16 %v98
    %v119 = vunpack.c.l.b16 %v99
    %v120 = vunpack.c.l.b16 %v100
    %v121 = vunpack.c.l.b16 %v101
    %v122 = vunpack.c.l.b16 %v102
    %v123 = vunpack.c.l.b16 %v103
    %v124 = vunpack.c.l.b16 %v104
    %v125 = vpack.c.b16 %v118, %v117
    %v126 = vpack.c.b16 %v120, %v119
    %v127 = vpack.c.b16 %v122, %v121
    %v128 = vpack.c.b16 %v124, %v123
    %vm133 = vcmask 523264
    %v135 = vsel %vm133, %v96, 0
    %137 = vmatpush.bf16.msra.mxu0 0
    %138 = vmatpush.bf16.msra.mxu0 0
    %139 = vmatpush.bf16.msra.mxu0 0
    %140 = vmatpush.bf16.msra.mxu0 0
    %141 = vmatpush.bf16.msra.mxu0 %v128
    %142 = vmatpush.bf16.msra.mxu0 %v127
    %143 = vmatpush.bf16.msra.mxu0 %v126
    %144 = vmatpush.bf16.msra.mxu0 %v125
    %145 = vmatmul.bf16.gmra.mxu0 %v135
    %v146 = vpop.f32.mrf.mxu0
    %v147 = vadd.f32 %v107, %v146
    %v148 = vpop.f32.mrf.mxu0
    %149 = vdwg.mxu0
    %v150 = vxor.u32 %v147, 2147483648
    %v151 = vmul.f32 %v150, 1.442695
    %v152 = vpow.pop %v151
    %v153 = vadd.f32 %v152, 1.0
    %v154 = vrcp.pop %v153
    %v155 = vmul.f32 %v153, %v154
    %v156 = vsub.f32 1.0, %v155
    %v157 = vmul.f32 %v154, %v156
    %v158 = vadd.f32 %v154, %v157
    %vm159 = vweird.f32 %v153
    %vm160 = vweird.f32 %v154
    %vm161 = vmor %vm159, %vm160
    %v162 = vsel %vm161, %v154, %v158
    %v163 = vand.u32 2147483647, %v153
    %vm164 = vcmp.eq.f32.partialorder %v163, 8.507059e+37
    %v165 = vand.u32 %v153, 2147483648
    %v166 = vor.u32 1.1754944e-38, %v165
    %v167 = vsel %vm164, %v166, %v162
    %v168 = vmul.f32 1.0, %v167
    %v169 = vmul.f32 %v147, %v168
    %vm170 = vcmask 517120
    %171 = vst.msk [vmem:[%s5] sm:$0x3] %vm170, %v169
    // Predicated region
    $region26: #{ella_forward.5} parent=1 // pred_check
      _
    $region27: #{ella_forward.5} parent=1 // pred_check_branch
      %173 = sbr.rel (0) target = $region29
    $region28: #{ella_forward.5} parent=1 // pred_region
      _
    $region29: #{ella_forward.5} parent=1 // pred_fallthru
      _
    // Predicated region
    $region30: #{ella_forward.5} parent=1 // pred_check
      _
    $region31: #{ella_forward.5} parent=1 // pred_check_branch
      %175 = sbr.rel (0) target = $region33
    $region32: #{ella_forward.5} parent=1 // pred_region
      _
    $region33: #{ella_forward.5} parent=1 // pred_fallthru
      _
    %176 = vsyncpa [#allocation3], 1

// kernel: ella_forward.7
$region0: #{ella_forward.7}
  #allocation0 [shape = 'u32[]', space=smem, size = 0x4, offset = 0x4, fixed_abs, tag = 'smem constant byte address 0x4 - core index']
  #allocation1 [shape = 'u32[72,128]{1,0:T(1,128)}', space=vmem, size = 0x9000, scoped, tag = 'internal scratch']
  #allocation2 [shape = 'f32[16,64]{1,0:T(8,128)}', space=vmem, size = 0x2000, scoped, tag = 'scratch operand']
  %s0 = inlined_call_operand.vmem [shape: f32[16,32], index: 0, kind: input, shape index: {}]
  %s1 = inlined_call_operand.vmem [shape: bf16[32,64], index: 1, kind: input, shape index: {}]
  %s2 = inlined_call_operand.vmem [shape: f32[1,64], index: 2, kind: input, shape index: {}]
  %s3 = inlined_call_operand.vmem [shape: f32[16,64], index: 3, kind: output, shape index: {}]
  %s4 = sld [smem:[#allocation0]]
  $region30: #{ella_forward.7} parent=0
    _
  %s6 = ssub.s32 1, %s4
  %s7 = scalar_select 0, %s6, %s4
  // Predicated region
  $region2: #{ella_forward.7} parent=0 // pred_check
    _
  $region3: #{ella_forward.7} parent=0 // pred_check_branch
    %9 = sbr.rel (0) target = $region5
  $region4: #{ella_forward.7} parent=0 // pred_region
    _
  $region5: #{ella_forward.7} parent=0 // pred_fallthru
    _
  // Predicated region
  $region6: #{ella_forward.7} parent=0 // pred_check
    _
  $region7: #{ella_forward.7} parent=0 // pred_check_branch
    %11 = sbr.rel (0) target = $region9
  $region8: #{ella_forward.7} parent=0 // pred_region
    _
  $region9: #{ella_forward.7} parent=0 // pred_fallthru
    _
  // Predicated region
  $region10: #{ella_forward.7} parent=0 // pred_check
    _
  $region11: #{ella_forward.7} parent=0 // pred_check_branch
    %13 = sbr.rel (0) target = $region13
  $region12: #{ella_forward.7} parent=0 // pred_region
    _
  $region13: #{ella_forward.7} parent=0 // pred_fallthru
    _
  %p15 = scmp.eq.s32.totalorder 0, 0
  // Predicated region
  $region14: #{ella_forward.7} parent=0 // pred_check
    %p16 = pneg %p15
  $region15: #{ella_forward.7} parent=0 // pred_check_branch
    %18 = sbr.rel (%p16) target = $region17
  $region16: #{ella_forward.7} parent=0 // pred_region
    %vm19 = vcmask 523264
    %20 = vst.msk [vmem:[#allocation2] sm:$0xff] %vm19, 0.0
    %21 = vst.msk [vmem:[#allocation2 + $0x8] sm:$0xff] %vm19, 0.0
  $region17: #{ella_forward.7} parent=0 // pred_fallthru
    _
  %v22 = vld [vmem:[#allocation2] sm:$0xff]
  %v23 = vld [vmem:[#allocation2 + $0x8] sm:$0xff]
  %v24 = vld [vmem:[%s0] sm:$0xff]
  %v25 = vld [vmem:[%s0 + $0x8] sm:$0xff]
  %v26 = vpack.c.bf16 %v25, %v24
  %v27 = vld [vmem:[%s1] sm:$0xf]
  %v28 = vld [vmem:[%s1 + $0x4] sm:$0xf]
  %v29 = vld [vmem:[%s1 + $0x8] sm:$0xf]
  %v30 = vld [vmem:[%s1 + $0xc] sm:$0xf]
  %v35 = vunpack.c.l.b16 %v27
  %v36 = vunpack.c.l.b16 %v28
  %v37 = vunpack.c.l.b16 %v29
  %v38 = vunpack.c.l.b16 %v30
  %v39 = vpack.c.b16 %v36, %v35
  %v40 = vpack.c.b16 %v38, %v37
  %vm43 = vcmask 261120
  %v45 = vsel %vm43, %v26, 0
  %47 = vmatpush.bf16.msra.mxu0 0
  %48 = vmatpush.bf16.msra.mxu0 0
  %49 = vmatpush.bf16.msra.mxu0 0
  %50 = vmatpush.bf16.msra.mxu0 0
  %51 = vmatpush.bf16.msra.mxu0 0
  %52 = vmatpush.bf16.msra.mxu0 0
  %53 = vmatpush.bf16.msra.mxu0 %v40
  %54 = vmatpush.bf16.msra.mxu0 %v39
  %55 = vmatmul.bf16.gmra.mxu0 %v45
  %v56 = vpop.f32.mrf.mxu0
  %v57 = vadd.f32 0.0, %v56
  %v58 = vpop.f32.mrf.mxu0
  %v59 = vadd.f32 0.0, %v58
  %60 = vdwg.mxu0
  %v61 = vadd.f32 %v22, %v57
  %v62 = vadd.f32 %v23, %v59
  %vm63 = vcmask 523264
  %64 = vst.msk [vmem:[#allocation2] sm:$0xff] %vm63, %v61
  %65 = vst.msk [vmem:[#allocation2 + $0x8] sm:$0xff] %vm63, %v62
  // Predicated region
  $region18: #{ella_forward.7} parent=0 // pred_check
    %p66 = pneg %p15
  $region19: #{ella_forward.7} parent=0 // pred_check_branch
    %68 = sbr.rel (%p66) target = $region21
  $region20: #{ella_forward.7} parent=0 // pred_region
    %v69 = vld [vmem:[#allocation2] sm:$0xff]
    %v70 = vld [vmem:[#allocation2 + $0x8] sm:$0xff]
    %v71 = vld [vmem:[%s2] sm:$0x1]
    %v73 = vperm.slane %v71, 0
    %v75 = vadd.f32 %v69, %v73
    %v76 = vadd.f32 %v70, %v73
    %77 = vst.msk [vmem:[%s3] sm:$0xff] %vm63, %v75
    %78 = vst.msk [vmem:[%s3 + $0x8] sm:$0xff] %vm63, %v76
  $region21: #{ella_forward.7} parent=0 // pred_fallthru
    _
  // Predicated region
  $region22: #{ella_forward.7} parent=0 // pred_check
    _
  $region23: #{ella_forward.7} parent=0 // pred_check_branch
    %80 = sbr.rel (0) target = $region25
  $region24: #{ella_forward.7} parent=0 // pred_region
    _
  $region25: #{ella_forward.7} parent=0 // pred_fallthru
    _
  // Predicated region
  $region26: #{ella_forward.7} parent=0 // pred_check
    _
  $region27: #{ella_forward.7} parent=0 // pred_check_branch
    %82 = sbr.rel (0) target = $region29
  $region28: #{ella_forward.7} parent=0 // pred_region
    _
  $region29: #{ella_forward.7} parent=0 // pred_fallthru
    _

// kernel: ella_forward.6
$region0: #{ella_forward.6}
  #allocation0 [shape = 'u32[]', space=smem, size = 0x4, offset = 0x4, fixed_abs, tag = 'smem constant byte address 0x4 - core index']
  #allocation1 [shape = 'u32[72,128]{1,0:T(1,128)}', space=vmem, size = 0x9000, scoped, tag = 'internal scratch']
  #allocation2 [shape = 'f32[2,832]{1,0:T(2,128)}', space=vmem, size = 0x1c00, scoped, tag = 'scratch operand']
  %s0 = inlined_call_operand.vmem [shape: f32[2,64], index: 0, kind: input, shape index: {}]
  %s1 = inlined_call_operand.hbm [shape: bf16[64,832], index: 1, kind: input, shape index: {}]
  %s2 = inlined_call_operand.vmem [shape: f32[1,832], index: 2, kind: input, shape index: {}]
  %s3 = inlined_call_operand.vmem [shape: f32[2,832], index: 3, kind: output, shape index: {}]
  %s4 = sld [smem:[#allocation0]]
  $region34: #{ella_forward.6} parent=0
    _
  %s6 = ssub.s32 1, %s4
  %s7 = scalar_select 0, %s6, %s4
  $region1: #{ella_forward.6} parent=0
    #allocation3 [shape = 'u8[114688]{0}', space=vmem, size = 0x1c000, scoped, tag = 'input window, operand 1, single buffered']
    #allocation4 [shape = 's32[1]{0}', space=sflag, size = 0x4, scoped, tag = 'scoped memory for ella_forward.6']
    %8 = vsyncpa [#allocation4], 0
    // Predicated region
    $region2: #{ella_forward.6} parent=1 // pred_check
      _
    $region3: #{ella_forward.6} parent=1 // pred_check_branch
      %10 = sbr.rel (0) target = $region5
    $region4: #{ella_forward.6} parent=1 // pred_region
      _
    $region5: #{ella_forward.6} parent=1 // pred_fallthru
      _
    // Predicated region
    $region6: #{ella_forward.6} parent=1 // pred_check
      _
    $region7: #{ella_forward.6} parent=1 // pred_check_branch
      %12 = sbr.rel (0) target = $region9
    $region8: #{ella_forward.6} parent=1 // pred_region
      %14 = vsyncadd [#allocation4], 0
      %s15 = sshll.u32 %s1, 4
      %s16 = int_to_ptr.hbm [resolvable:$true] %s15
      %s17 = sshll.u32 [#allocation3], 4
      %s18 = int_to_ptr.vmem [resolvable:$true] %s17
      %23 = dma.hbm_to_vmem [thread:$0]  %s16, 3584, %s18, [#allocation4], 448, 448, 28
    $region9: #{ella_forward.6} parent=1 // pred_fallthru
      _
    // Predicated region
    $region10: #{ella_forward.6} parent=1 // pred_check
      _
    $region11: #{ella_forward.6} parent=1 // pred_check_branch
      %25 = sbr.rel (0) target = $region13
    $region12: #{ella_forward.6} parent=1 // pred_region
      _
    $region13: #{ella_forward.6} parent=1 // pred_fallthru
      _
    // Predicated region
    $region14: #{ella_forward.6} parent=1 // pred_check
      _
    $region15: #{ella_forward.6} parent=1 // pred_check_branch
      %27 = sbr.rel (0) target = $region17
    $region16: #{ella_forward.6} parent=1 // pred_region
      %29 = dma.done [#allocation4], 3584
    $region17: #{ella_forward.6} parent=1 // pred_fallthru
      _
    %p31 = scmp.eq.s32.totalorder 0, 0
    // Predicated region
    $region18: #{ella_forward.6} parent=1 // pred_check
      %p32 = pneg %p31
    $region19: #{ella_forward.6} parent=1 // pred_check_branch
      %34 = sbr.rel (%p32) target = $region21
    $region20: #{ella_forward.6} parent=1 // pred_region
      %35 = vst [vmem:[#allocation2] sm:$0xff] 0.0
      %vm36 = vcmask 1041408
      %vm37 = vcmask 1043458
      %vm38 = vmor %vm37, %vm36
      %vm39 = vcmask 521220
      %vm40 = vmor %vm39, %vm38
      %41 = vst.msk [vmem:[#allocation2 + $0x8] sm:$0x3f] %vm40, 0.0
    $region21: #{ella_forward.6} parent=1 // pred_fallthru
      _
    %v42 = vld [vmem:[#allocation2] sm:$0xff]
    %v43 = vld [vmem:[#allocation2 + $0x8] sm:$0x3f]
    %v44 = vld [vmem:[%s0] sm:$0x3]
    %v45 = vpack.c.bf16 %v44, %v44
    %v46 = vld [vmem:[#allocation3] sm:$0xff]
    %v47 = vld [vmem:[#allocation3 + $0x8] sm:$0xff]
    %v48 = vld [vmem:[#allocation3 + $0x10] sm:$0xff]
    %v49 = vld [vmem:[#allocation3 + $0x18] sm:$0xf]
    %v50 = vld [vmem:[#allocation3 + $0x1c] sm:$0xff]
    %v51 = vld [vmem:[#allocation3 + $0x24] sm:$0xff]
    %v52 = vld [vmem:[#allocation3 + $0x2c] sm:$0xff]
    %v53 = vld [vmem:[#allocation3 + $0x34] sm:$0xf]
    %v54 = vld [vmem:[#allocation3 + $0x38] sm:$0xff]
    %v55 = vld [vmem:[#allocation3 + $0x40] sm:$0xff]
    %v56 = vld [vmem:[#allocation3 + $0x48] sm:$0xff]
    %v57 = vld [vmem:[#allocation3 + $0x50] sm:$0xf]
    %v58 = vld [vmem:[#allocation3 + $0x54] sm:$0xff]
    %v59 = vld [vmem:[#allocation3 + $0x5c] sm:$0xff]
    %v60 = vld [vmem:[#allocation3 + $0x64] sm:$0xff]
    %v61 = vld [vmem:[#allocation3 + $0x6c] sm:$0xf]
    %v62 = vld [vmem:[#allocation3 + $0x70] sm:$0xff]
    %v63 = vld [vmem:[#allocation3 + $0x78] sm:$0xff]
    %v64 = vld [vmem:[#allocation3 + $0x80] sm:$0xff]
    %v65 = vld [vmem:[#allocation3 + $0x88] sm:$0xf]
    %v66 = vld [vmem:[#allocation3 + $0x8c] sm:$0xff]
    %v67 = vld [vmem:[#allocation3 + $0x94] sm:$0xff]
    %v68 = vld [vmem:[#allocation3 + $0x9c] sm:$0xff]
    %v69 = vld [vmem:[#allocation3 + $0xa4] sm:$0xf]
    %v70 = vld [vmem:[#allocation3 + $0xa8] sm:$0xff]
    %v71 = vld [vmem:[#allocation3 + $0xb0] sm:$0xff]
    %v72 = vld [vmem:[#allocation3 + $0xb8] sm:$0xff]
    %v73 = vld [vmem:[#allocation3 + $0xc0] sm:$0xf]
    %v74 = vld [vmem:[#allocation3 + $0xc4] sm:$0xff]
    %v75 = vld [vmem:[#allocation3 + $0xcc] sm:$0xff]
    %v76 = vld [vmem:[#allocation3 + $0xd4] sm:$0xff]
    %v77 = vld [vmem:[#allocation3 + $0xdc] sm:$0xf]
    %v110 = vunpack.c.l.b16 %v46
    %v111 = vunpack.c.h.b16 %v46
    %v112 = vunpack.c.l.b16 %v47
    %v113 = vunpack.c.h.b16 %v47
    %v114 = vunpack.c.l.b16 %v48
    %v115 = vunpack.c.h.b16 %v48
    %v116 = vunpack.c.l.b16 %v49
    %v117 = vunpack.c.l.b16 %v50
    %v118 = vunpack.c.h.b16 %v50
    %v119 = vunpack.c.l.b16 %v51
    %v120 = vunpack.c.h.b16 %v51
    %v121 = vunpack.c.l.b16 %v52
    %v122 = vunpack.c.h.b16 %v52
    %v123 = vunpack.c.l.b16 %v53
    %v124 = vunpack.c.l.b16 %v54
    %v125 = vunpack.c.h.b16 %v54
    %v126 = vunpack.c.l.b16 %v55
    %v127 = vunpack.c.h.b16 %v55
    %v128 = vunpack.c.l.b16 %v56
    %v129 = vunpack.c.h.b16 %v56
    %v130 = vunpack.c.l.b16 %v57
    %v131 = vunpack.c.l.b16 %v58
    %v132 = vunpack.c.h.b16 %v58
    %v133 = vunpack.c.l.b16 %v59
    %v134 = vunpack.c.h.b16 %v59
    %v135 = vunpack.c.l.b16 %v60
    %v136 = vunpack.c.h.b16 %v60
    %v137 = vunpack.c.l.b16 %v61
    %v138 = vunpack.c.l.b16 %v62
    %v139 = vunpack.c.h.b16 %v62
    %v140 = vunpack.c.l.b16 %v63
    %v141 = vunpack.c.h.b16 %v63
    %v142 = vunpack.c.l.b16 %v64
    %v143 = vunpack.c.h.b16 %v64
    %v144 = vunpack.c.l.b16 %v65
    %v145 = vunpack.c.l.b16 %v66
    %v146 = vunpack.c.h.b16 %v66
    %v147 = vunpack.c.l.b16 %v67
    %v148 = vunpack.c.h.b16 %v67
    %v149 = vunpack.c.l.b16 %v68
    %v150 = vunpack.c.h.b16 %v68
    %v151 = vunpack.c.l.b16 %v69
    %v152 = vunpack.c.l.b16 %v70
    %v153 = vunpack.c.h.b16 %v70
    %v154 = vunpack.c.l.b16 %v71
    %v155 = vunpack.c.h.b16 %v71
    %v156 = vunpack.c.l.b16 %v72
    %v157 = vunpack.c.h.b16 %v72
    %v158 = vunpack.c.l.b16 %v73
    %v159 = vunpack.c.l.b16 %v74
    %v160 = vunpack.c.h.b16 %v74
    %v161 = vunpack.c.l.b16 %v75
    %v162 = vunpack.c.h.b16 %v75
    %v163 = vunpack.c.l.b16 %v76
    %v164 = vunpack.c.h.b16 %v76
    %v165 = vunpack.c.l.b16 %v77
    %v166 = vpack.c.b16 %v117, %v110
    %v167 = vpack.c.b16 %v118, %v111
    %v168 = vpack.c.b16 %v119, %v112
    %v169 = vpack.c.b16 %v120, %v113
    %v170 = vpack.c.b16 %v121, %v114
    %v171 = vpack.c.b16 %v122, %v115
    %v172 = vpack.c.b16 %v123, %v116
    %v173 = vpack.c.b16 %v131, %v124
    %v174 = vpack.c.b16 %v132, %v125
    %v175 = vpack.c.b16 %v133, %v126
    %v176 = vpack.c.b16 %v134, %v127
    %v177 = vpack.c.b16 %v135, %v128
    %v178 = vpack.c.b16 %v136, %v129
    %v179 = vpack.c.b16 %v137, %v130
    %v180 = vpack.c.b16 %v145, %v138
    %v181 = vpack.c.b16 %v146, %v139
    %v182 = vpack.c.b16 %v147, %v140
    %v183 = vpack.c.b16 %v148, %v141
    %v184 = vpack.c.b16 %v149, %v142
    %v185 = vpack.c.b16 %v150, %v143
    %v186 = vpack.c.b16 %v151, %v144
    %v187 = vpack.c.b16 %v159, %v152
    %v188 = vpack.c.b16 %v160, %v153
    %v189 = vpack.c.b16 %v161, %v154
    %v190 = vpack.c.b16 %v162, %v155
    %v191 = vpack.c.b16 %v163, %v156
    %v192 = vpack.c.b16 %v164, %v157
    %v193 = vpack.c.b16 %v165, %v158
    %vm222 = vcmask 523264
    %v224 = vsel %vm222, %v45, 0
    %226 = vmatpush.bf16.msra.mxu0 0
    %227 = vmatpush.bf16.msra.mxu0 0
    %228 = vmatpush.bf16.msra.mxu0 0
    %229 = vmatpush.bf16.msra.mxu0 0
    %230 = vmatpush.bf16.msra.mxu0 %v187
    %231 = vmatpush.bf16.msra.mxu0 %v180
    %232 = vmatpush.bf16.msra.mxu0 %v173
    %233 = vmatpush.bf16.msra.mxu0 %v166
    %234 = vmatmul.bf16.gmra.mxu0 %v224
    %v235 = vpop.f32.mrf.mxu0
    %v236 = vadd.f32 0.0, %v235
    %v237 = vpop.f32.mrf.mxu0
    %238 = vdwg.mxu0
    %239 = vmatpush.bf16.msra.mxu0 0
    %240 = vmatpush.bf16.msra.mxu0 0
    %241 = vmatpush.bf16.msra.mxu0 0
    %242 = vmatpush.bf16.msra.mxu0 0
    %243 = vmatpush.bf16.msra.mxu0 %v188
    %244 = vmatpush.bf16.msra.mxu0 %v181
    %245 = vmatpush.bf16.msra.mxu0 %v174
    %246 = vmatpush.bf16.msra.mxu0 %v167
    %247 = vmatmul.bf16.gmra.mxu0 %v224
    %v248 = vpop.f32.mrf.mxu0
    %v249 = vadd.f32 0.0, %v248
    %v250 = vpop.f32.mrf.mxu0
    %251 = vdwg.mxu0
    %252 = vmatpush.bf16.msra.mxu0 0
    %253 = vmatpush.bf16.msra.mxu0 0
    %254 = vmatpush.bf16.msra.mxu0 0
    %255 = vmatpush.bf16.msra.mxu0 0
    %256 = vmatpush.bf16.msra.mxu0 %v189
    %257 = vmatpush.bf16.msra.mxu0 %v182
    %258 = vmatpush.bf16.msra.mxu0 %v175
    %259 = vmatpush.bf16.msra.mxu0 %v168
    %260 = vmatmul.bf16.gmra.mxu0 %v224
    %v261 = vpop.f32.mrf.mxu0
    %v262 = vadd.f32 0.0, %v261
    %v263 = vpop.f32.mrf.mxu0
    %264 = vdwg.mxu0
    %265 = vmatpush.bf16.msra.mxu0 0
    %266 = vmatpush.bf16.msra.mxu0 0
    %267 = vmatpush.bf16.msra.mxu0 0
    %268 = vmatpush.bf16.msra.mxu0 0
    %269 = vmatpush.bf16.msra.mxu0 %v190
    %270 = vmatpush.bf16.msra.mxu0 %v183
    %271 = vmatpush.bf16.msra.mxu0 %v176
    %272 = vmatpush.bf16.msra.mxu0 %v169
    %273 = vmatmul.bf16.gmra.mxu0 %v224
    %v274 = vpop.f32.mrf.mxu0
    %v275 = vadd.f32 0.0, %v274
    %v276 = vpop.f32.mrf.mxu0
    %277 = vdwg.mxu0
    %278 = vmatpush.bf16.msra.mxu0 0
    %279 = vmatpush.bf16.msra.mxu0 0
    %280 = vmatpush.bf16.msra.mxu0 0
    %281 = vmatpush.bf16.msra.mxu0 0
    %282 = vmatpush.bf16.msra.mxu0 %v191
    %283 = vmatpush.bf16.msra.mxu0 %v184
    %284 = vmatpush.bf16.msra.mxu0 %v177
    %285 = vmatpush.bf16.msra.mxu0 %v170
    %286 = vmatmul.bf16.gmra.mxu0 %v224
    %v287 = vpop.f32.mrf.mxu0
    %v288 = vadd.f32 0.0, %v287
    %v289 = vpop.f32.mrf.mxu0
    %290 = vdwg.mxu0
    %291 = vmatpush.bf16.msra.mxu0 0
    %292 = vmatpush.bf16.msra.mxu0 0
    %293 = vmatpush.bf16.msra.mxu0 0
    %294 = vmatpush.bf16.msra.mxu0 0
    %295 = vmatpush.bf16.msra.mxu0 %v192
    %296 = vmatpush.bf16.msra.mxu0 %v185
    %297 = vmatpush.bf16.msra.mxu0 %v178
    %298 = vmatpush.bf16.msra.mxu0 %v171
    %299 = vmatmul.bf16.gmra.mxu0 %v224
    %v300 = vpop.f32.mrf.mxu0
    %v301 = vadd.f32 0.0, %v300
    %v302 = vpop.f32.mrf.mxu0
    %303 = vdwg.mxu0
    %304 = vmatpush.bf16.msra.mxu0 0
    %305 = vmatpush.bf16.msra.mxu0 0
    %306 = vmatpush.bf16.msra.mxu0 0
    %307 = vmatpush.bf16.msra.mxu0 0
    %308 = vmatpush.bf16.msra.mxu0 %v193
    %309 = vmatpush.bf16.msra.mxu0 %v186
    %310 = vmatpush.bf16.msra.mxu0 %v179
    %311 = vmatpush.bf16.msra.mxu0 %v172
    %312 = vmatmul.bf16.gmra.mxu0 %v224
    %v313 = vpop.f32.mrf.mxu0
    %v314 = vadd.f32 0.0, %v313
    %v315 = vpop.f32.mrf.mxu0
    %316 = vdwg.mxu0
    %v324 = vrot.slane %v249, 6
    %v325 = vrot.slane %v262, 4
    %v326 = vrot.slane %v275, 2
    %v327 = vrot.slane %v301, 6
    %v328 = vrot.slane %v314, 4
    %vm329 = vcmask 1041408
    %v330 = vsel %vm329, %v236, %v324
    %vm331 = vcmask 1045508
    %v332 = vsel %vm331, %v325, %v326
    %vm333 = vcmask 1043456
    %v334 = vsel %vm333, %v330, %v332
    %v335 = vsel %vm329, %v288, %v327
    %v336 = vsel %vm333, %v335, %v328
    %v339 = vadd.f32 %v42, %v334
    %v340 = vadd.f32 %v43, %v336
    %341 = vst [vmem:[#allocation2] sm:$0xff] %v339
    %vm342 = vcmask 1043458
    %vm343 = vmor %vm342, %vm329
    %vm344 = vcmask 521220
    %vm345 = vmor %vm344, %vm343
    %346 = vst.msk [vmem:[#allocation2 + $0x8] sm:$0x3f] %vm345, %v340
    // Predicated region
    $region22: #{ella_forward.6} parent=1 // pred_check
      %p347 = pneg %p31
    $region23: #{ella_forward.6} parent=1 // pred_check_branch
      %349 = sbr.rel (%p347) target = $region25
    $region24: #{ella_forward.6} parent=1 // pred_region
      %v350 = vld [vmem:[#allocation2] sm:$0xff]
      %v351 = vld [vmem:[#allocation2 + $0x8] sm:$0x3f]
      %v352 = vld [vmem:[%s2] sm:$0x7f]
      %v354 = vperm.slane %v352, 0
      %v355 = vperm.slane %v352, 1
      %v356 = vperm.slane %v352, 2
      %v357 = vperm.slane %v352, 3
      %v358 = vperm.slane %v352, 4
      %v359 = vperm.slane %v352, 5
      %v360 = vperm.slane %v352, 6
      %v361 = vrot.slane %v355, 6
      %v362 = vrot.slane %v356, 4
      %v363 = vrot.slane %v357, 2
      %v364 = vrot.slane %v359, 6
      %v365 = vrot.slane %v360, 4
      %v366 = vsel %vm329, %v354, %v361
      %v367 = vsel %vm331, %v362, %v363
      %v368 = vsel %vm333, %v366, %v367
      %v369 = vsel %vm329, %v358, %v364
      %v370 = vsel %vm333, %v369, %v365
      %v373 = vadd.f32 %v350, %v368
      %v374 = vadd.f32 %v351, %v370
      %375 = vst [vmem:[%s3] sm:$0xff] %v373
      %376 = vst.msk [vmem:[%s3 + $0x8] sm:$0x3f] %vm345, %v374
    $region25: #{ella_forward.6} parent=1 // pred_fallthru
      _
    // Predicated region
    $region26: #{ella_forward.6} parent=1 // pred_check
      _
    $region27: #{ella_forward.6} parent=1 // pred_check_branch
      %378 = sbr.rel (0) target = $region29
    $region28: #{ella_forward.6} parent=1 // pred_region
      _
    $region29: #{ella_forward.6} parent=1 // pred_fallthru
      _
    // Predicated region
    $region30: #{ella_forward.6} parent=1 // pred_check
      _
    $region31: #{ella_forward.6} parent=1 // pred_check_branch
      %380 = sbr.rel (0) target = $region33
    $region32: #{ella_forward.6} parent=1 // pred_region
      _
    $region33: #{ella_forward.6} parent=1 // pred_fallthru
      _
    %381 = vsyncpa [#allocation4], 1

// kernel: ella_forward.8
$region0: #{ella_forward.8}
  #allocation0 [shape = 'u32[]', space=smem, size = 0x4, offset = 0x4, fixed_abs, tag = 'smem constant byte address 0x4 - core index']
  #allocation1 [shape = 'u32[72,128]{1,0:T(1,128)}', space=vmem, size = 0x9000, scoped, tag = 'internal scratch']
  #allocation2 [shape = 'f32[8,64]{1,0:T(8,128)}', space=vmem, size = 0x1000, scoped, tag = 'scratch operand']
  %s0 = inlined_call_operand.vmem [shape: f32[2,6,64], index: 0, kind: input, shape index: {}]
  %s1 = inlined_call_operand.vmem [shape: f32[2,8,64], index: 1, kind: input, shape index: {}]
  %s2 = inlined_call_operand.vmem [shape: f32[2,8,64], index: 2, kind: input, shape index: {}]
  %s3 = inlined_call_operand.vmem [shape: bf16[64,192], index: 3, kind: input, shape index: {}]
  %s4 = inlined_call_operand.vmem [shape: f32[1,192], index: 4, kind: input, shape index: {}]
  %s5 = inlined_call_operand.vmem [shape: bf16[64,128], index: 5, kind: input, shape index: {}]
  %s6 = inlined_call_operand.vmem [shape: f32[1,128], index: 6, kind: input, shape index: {}]
  %s7 = inlined_call_operand.vmem [shape: bf16[64,64], index: 7, kind: input, shape index: {}]
  %s8 = inlined_call_operand.vmem [shape: f32[1,64], index: 8, kind: input, shape index: {}]
  %s9 = inlined_call_operand.vmem [shape: bf16[64,256], index: 9, kind: input, shape index: {}]
  %s10 = inlined_call_operand.vmem [shape: f32[1,256], index: 10, kind: input, shape index: {}]
  %s11 = inlined_call_operand.vmem [shape: bf16[256,64], index: 11, kind: input, shape index: {}]
  %s12 = inlined_call_operand.vmem [shape: f32[1,64], index: 12, kind: input, shape index: {}]
  %s13 = inlined_call_operand.vmem [shape: f32[2,8,64], index: 13, kind: output, shape index: {}]
  %s14 = sld [smem:[#allocation0]]
  $region85: #{ella_forward.8} parent=0
    _
  %s16 = ssub.s32 1, %s14
  %s17 = scalar_select 0, %s16, %s14
  loop: start=0, step=1, limit=4
  $region2: #{ella_forward.8} parent=0 // loop_pre_header
    _
  $region3: #{ella_forward.8} parent=0 // loop_header
    %s19 = sphi 0, %s23
    %p20 = scmp.ge.s32.totalorder %s19, 4
    %s29 = sphi 0, %s31
    %s32 = sphi 0, %s29
    %s33 = sphi 0, %s32
    %s49 = sphi 0, %s33
    %s55 = sphi 0, %s57
    %s58 = sphi 0, %s55
    %s59 = sphi 0, %s58
    %s75 = sphi 0, %s59
    %s81 = sphi 0, %s83
    %s84 = sphi 0, %s81
    %s85 = sphi 0, %s84
    %s101 = sphi 0, %s85
    %s105 = sphi 0, %s105
    %s107 = sphi 0, %s105
    %s108 = sphi 0, %s107
    %s122 = sphi 0, %s108
    %s126 = sphi 0, %s126
    %s128 = sphi 0, %s126
    %s129 = sphi 0, %s128
    %s143 = sphi 0, %s129
    %s147 = sphi 0, %s147
    %s149 = sphi 0, %s147
    %s150 = sphi 0, %s149
    %s164 = sphi 0, %s150
    %s168 = sphi 0, %s168
    %s170 = sphi 0, %s168
    %s171 = sphi 0, %s170
    %s185 = sphi 0, %s171
    %s189 = sphi 0, %s189
    %s191 = sphi 0, %s189
    %s192 = sphi 0, %s191
    %s206 = sphi 0, %s192
    %s210 = sphi 0, %s210
    %s212 = sphi 0, %s210
    %s213 = sphi 0, %s212
    %s227 = sphi 0, %s213
    %s231 = sphi 0, %s231
    %s233 = sphi 0, %s231
    %s234 = sphi 0, %s233
    %s248 = sphi 0, %s234
    %s252 = sphi 0, %s252
    %s254 = sphi 0, %s252
    %s255 = sphi 0, %s254
    %s269 = sphi 0, %s255
    %s273 = sphi 0, %s273
    %s275 = sphi 0, %s273
    %s276 = sphi 0, %s275
    %s290 = sphi 0, %s276
    %s294 = sphi 0, %s294
    %s296 = sphi 0, %s294
    %s297 = sphi 0, %s296
    %s311 = sphi 0, %s297
    %s317 = sphi 0, %s319
    %s320 = sphi 0, %s317
    %s321 = sphi 0, %s320
    %s337 = sphi 0, %s321
  $region4: #{ella_forward.8} parent=0 // loop_header_branch
    %22 = sbr.rel (%p20) target = $region8
  $region5: #{ella_forward.8} parent=0 // loop_body
    %s24 = ssub.s32 %s19, 1
    %s25 = ssub.s32 %s19, 2
    %s26 = sadd.s32 %s19, 1
    %s27 = ssub.s32 %s19, %s26
    %p28 = scmp.eq.s32.totalorder %s27, 0
    %s30 = sadd.s32 %s29, 1
    %s31 = scalar_select %p28, %s29, %s30
    %p34 = pneg %p28
    %p35 = scmp.eq.s32.totalorder %s19, 1
    %p36 = por %p34, %p35
    %p37 = scmp.ne.s32.totalorder %s29, %s32
    %p38 = scmp.eq.s32.totalorder %s19, 0
    %p39 = por %p37, %p38
    %p40 = scmp.ne.s32.totalorder %s29, %s32
    %p41 = scmp.eq.s32.totalorder %s24, 1
    %p42 = por %p40, %p41
    %p43 = scmp.ne.s32.totalorder %s32, %s33
    %p44 = scmp.eq.s32.totalorder %s24, 0
    %p45 = por %p43, %p44
    %p46 = scmp.ne.s32.totalorder %s32, %s33
    %p47 = scmp.eq.s32.totalorder %s25, 1
    %p48 = por %p46, %p47
    %p50 = scmp.ne.s32.totalorder %s33, %s49
    %p51 = scmp.eq.s32.totalorder %s25, 0
    %p52 = por %p50, %p51
    %s53 = ssub.s32 %s19, %s26
    %p54 = scmp.eq.s32.totalorder %s53, 0
    %s56 = sadd.s32 %s55, 1
    %s57 = scalar_select %p54, %s55, %s56
    %p60 = pneg %p54
    %p61 = scmp.eq.s32.totalorder %s19, 1
    %p62 = por %p60, %p61
    %p63 = scmp.ne.s32.totalorder %s55, %s58
    %p64 = scmp.eq.s32.totalorder %s19, 0
    %p65 = por %p63, %p64
    %p66 = scmp.ne.s32.totalorder %s55, %s58
    %p67 = scmp.eq.s32.totalorder %s24, 1
    %p68 = por %p66, %p67
    %p69 = scmp.ne.s32.totalorder %s58, %s59
    %p70 = scmp.eq.s32.totalorder %s24, 0
    %p71 = por %p69, %p70
    %p72 = scmp.ne.s32.totalorder %s58, %s59
    %p73 = scmp.eq.s32.totalorder %s25, 1
    %p74 = por %p72, %p73
    %p76 = scmp.ne.s32.totalorder %s59, %s75
    %p77 = scmp.eq.s32.totalorder %s25, 0
    %p78 = por %p76, %p77
    %s79 = ssub.s32 %s19, %s26
    %p80 = scmp.eq.s32.totalorder %s79, 0
    %s82 = sadd.s32 %s81, 1
    %s83 = scalar_select %p80, %s81, %s82
    %p86 = pneg %p80
    %p87 = scmp.eq.s32.totalorder %s19, 1
    %p88 = por %p86, %p87
    %p89 = scmp.ne.s32.totalorder %s81, %s84
    %p90 = scmp.eq.s32.totalorder %s19, 0
    %p91 = por %p89, %p90
    %p92 = scmp.ne.s32.totalorder %s81, %s84
    %p93 = scmp.eq.s32.totalorder %s24, 1
    %p94 = por %p92, %p93
    %p95 = scmp.ne.s32.totalorder %s84, %s85
    %p96 = scmp.eq.s32.totalorder %s24, 0
    %p97 = por %p95, %p96
    %p98 = scmp.ne.s32.totalorder %s84, %s85
    %p99 = scmp.eq.s32.totalorder %s25, 1
    %p100 = por %p98, %p99
    %p102 = scmp.ne.s32.totalorder %s85, %s101
    %p103 = scmp.eq.s32.totalorder %s25, 0
    %p104 = por %p102, %p103
    %s106 = sadd.s32 %s105, 1
    %p109 = scmp.eq.s32.totalorder %s19, 1
    %p110 = scmp.ne.s32.totalorder %s105, %s107
    %p111 = scmp.eq.s32.totalorder %s19, 0
    %p112 = por %p110, %p111
    %p113 = scmp.ne.s32.totalorder %s105, %s107
    %p114 = scmp.eq.s32.totalorder %s24, 1
    %p115 = por %p113, %p114
    %p116 = scmp.ne.s32.totalorder %s107, %s108
    %p117 = scmp.eq.s32.totalorder %s24, 0
    %p118 = por %p116, %p117
    %p119 = scmp.ne.s32.totalorder %s107, %s108
    %p120 = scmp.eq.s32.totalorder %s25, 1
    %p121 = por %p119, %p120
    %p123 = scmp.ne.s32.totalorder %s108, %s122
    %p124 = scmp.eq.s32.totalorder %s25, 0
    %p125 = por %p123, %p124
    %s127 = sadd.s32 %s126, 1
    %p130 = scmp.eq.s32.totalorder %s19, 1
    %p131 = scmp.ne.s32.totalorder %s126, %s128
    %p132 = scmp.eq.s32.totalorder %s19, 0
    %p133 = por %p131, %p132
    %p134 = scmp.ne.s32.totalorder %s126, %s128
    %p135 = scmp.eq.s32.totalorder %s24, 1
    %p136 = por %p134, %p135
    %p137 = scmp.ne.s32.totalorder %s128, %s129
    %p138 = scmp.eq.s32.totalorder %s24, 0
    %p139 = por %p137, %p138
    %p140 = scmp.ne.s32.totalorder %s128, %s129
    %p141 = scmp.eq.s32.totalorder %s25, 1
    %p142 = por %p140, %p141
    %p144 = scmp.ne.s32.totalorder %s129, %s143
    %p145 = scmp.eq.s32.totalorder %s25, 0
    %p146 = por %p144, %p145
    %s148 = sadd.s32 %s147, 1
    %p151 = scmp.eq.s32.totalorder %s19, 1
    %p152 = scmp.ne.s32.totalorder %s147, %s149
    %p153 = scmp.eq.s32.totalorder %s19, 0
    %p154 = por %p152, %p153
    %p155 = scmp.ne.s32.totalorder %s147, %s149
    %p156 = scmp.eq.s32.totalorder %s24, 1
    %p157 = por %p155, %p156
    %p158 = scmp.ne.s32.totalorder %s149, %s150
    %p159 = scmp.eq.s32.totalorder %s24, 0
    %p160 = por %p158, %p159
    %p161 = scmp.ne.s32.totalorder %s149, %s150
    %p162 = scmp.eq.s32.totalorder %s25, 1
    %p163 = por %p161, %p162
    %p165 = scmp.ne.s32.totalorder %s150, %s164
    %p166 = scmp.eq.s32.totalorder %s25, 0
    %p167 = por %p165, %p166
    %s169 = sadd.s32 %s168, 1
    %p172 = scmp.eq.s32.totalorder %s19, 1
    %p173 = scmp.ne.s32.totalorder %s168, %s170
    %p174 = scmp.eq.s32.totalorder %s19, 0
    %p175 = por %p173, %p174
    %p176 = scmp.ne.s32.totalorder %s168, %s170
    %p177 = scmp.eq.s32.totalorder %s24, 1
    %p178 = por %p176, %p177
    %p179 = scmp.ne.s32.totalorder %s170, %s171
    %p180 = scmp.eq.s32.totalorder %s24, 0
    %p181 = por %p179, %p180
    %p182 = scmp.ne.s32.totalorder %s170, %s171
    %p183 = scmp.eq.s32.totalorder %s25, 1
    %p184 = por %p182, %p183
    %p186 = scmp.ne.s32.totalorder %s171, %s185
    %p187 = scmp.eq.s32.totalorder %s25, 0
    %p188 = por %p186, %p187
    %s190 = sadd.s32 %s189, 1
    %p193 = scmp.eq.s32.totalorder %s19, 1
    %p194 = scmp.ne.s32.totalorder %s189, %s191
    %p195 = scmp.eq.s32.totalorder %s19, 0
    %p196 = por %p194, %p195
    %p197 = scmp.ne.s32.totalorder %s189, %s191
    %p198 = scmp.eq.s32.totalorder %s24, 1
    %p199 = por %p197, %p198
    %p200 = scmp.ne.s32.totalorder %s191, %s192
    %p201 = scmp.eq.s32.totalorder %s24, 0
    %p202 = por %p200, %p201
    %p203 = scmp.ne.s32.totalorder %s191, %s192
    %p204 = scmp.eq.s32.totalorder %s25, 1
    %p205 = por %p203, %p204
    %p207 = scmp.ne.s32.totalorder %s192, %s206
    %p208 = scmp.eq.s32.totalorder %s25, 0
    %p209 = por %p207, %p208
    %s211 = sadd.s32 %s210, 1
    %p214 = scmp.eq.s32.totalorder %s19, 1
    %p215 = scmp.ne.s32.totalorder %s210, %s212
    %p216 = scmp.eq.s32.totalorder %s19, 0
    %p217 = por %p215, %p216
    %p218 = scmp.ne.s32.totalorder %s210, %s212
    %p219 = scmp.eq.s32.totalorder %s24, 1
    %p220 = por %p218, %p219
    %p221 = scmp.ne.s32.totalorder %s212, %s213
    %p222 = scmp.eq.s32.totalorder %s24, 0
    %p223 = por %p221, %p222
    %p224 = scmp.ne.s32.totalorder %s212, %s213
    %p225 = scmp.eq.s32.totalorder %s25, 1
    %p226 = por %p224, %p225
    %p228 = scmp.ne.s32.totalorder %s213, %s227
    %p229 = scmp.eq.s32.totalorder %s25, 0
    %p230 = por %p228, %p229
    %s232 = sadd.s32 %s231, 1
    %p235 = scmp.eq.s32.totalorder %s19, 1
    %p236 = scmp.ne.s32.totalorder %s231, %s233
    %p237 = scmp.eq.s32.totalorder %s19, 0
    %p238 = por %p236, %p237
    %p239 = scmp.ne.s32.totalorder %s231, %s233
    %p240 = scmp.eq.s32.totalorder %s24, 1
    %p241 = por %p239, %p240
    %p242 = scmp.ne.s32.totalorder %s233, %s234
    %p243 = scmp.eq.s32.totalorder %s24, 0
    %p244 = por %p242, %p243
    %p245 = scmp.ne.s32.totalorder %s233, %s234
    %p246 = scmp.eq.s32.totalorder %s25, 1
    %p247 = por %p245, %p246
    %p249 = scmp.ne.s32.totalorder %s234, %s248
    %p250 = scmp.eq.s32.totalorder %s25, 0
    %p251 = por %p249, %p250
    %s253 = sadd.s32 %s252, 1
    %p256 = scmp.eq.s32.totalorder %s19, 1
    %p257 = scmp.ne.s32.totalorder %s252, %s254
    %p258 = scmp.eq.s32.totalorder %s19, 0
    %p259 = por %p257, %p258
    %p260 = scmp.ne.s32.totalorder %s252, %s254
    %p261 = scmp.eq.s32.totalorder %s24, 1
    %p262 = por %p260, %p261
    %p263 = scmp.ne.s32.totalorder %s254, %s255
    %p264 = scmp.eq.s32.totalorder %s24, 0
    %p265 = por %p263, %p264
    %p266 = scmp.ne.s32.totalorder %s254, %s255
    %p267 = scmp.eq.s32.totalorder %s25, 1
    %p268 = por %p266, %p267
    %p270 = scmp.ne.s32.totalorder %s255, %s269
    %p271 = scmp.eq.s32.totalorder %s25, 0
    %p272 = por %p270, %p271
    %s274 = sadd.s32 %s273, 1
    %p277 = scmp.eq.s32.totalorder %s19, 1
    %p278 = scmp.ne.s32.totalorder %s273, %s275
    %p279 = scmp.eq.s32.totalorder %s19, 0
    %p280 = por %p278, %p279
    %p281 = scmp.ne.s32.totalorder %s273, %s275
    %p282 = scmp.eq.s32.totalorder %s24, 1
    %p283 = por %p281, %p282
    %p284 = scmp.ne.s32.totalorder %s275, %s276
    %p285 = scmp.eq.s32.totalorder %s24, 0
    %p286 = por %p284, %p285
    %p287 = scmp.ne.s32.totalorder %s275, %s276
    %p288 = scmp.eq.s32.totalorder %s25, 1
    %p289 = por %p287, %p288
    %p291 = scmp.ne.s32.totalorder %s276, %s290
    %p292 = scmp.eq.s32.totalorder %s25, 0
    %p293 = por %p291, %p292
    %s295 = sadd.s32 %s294, 1
    %p298 = scmp.eq.s32.totalorder %s19, 1
    %p299 = scmp.ne.s32.totalorder %s294, %s296
    %p300 = scmp.eq.s32.totalorder %s19, 0
    %p301 = por %p299, %p300
    %p302 = scmp.ne.s32.totalorder %s294, %s296
    %p303 = scmp.eq.s32.totalorder %s24, 1
    %p304 = por %p302, %p303
    %p305 = scmp.ne.s32.totalorder %s296, %s297
    %p306 = scmp.eq.s32.totalorder %s24, 0
    %p307 = por %p305, %p306
    %p308 = scmp.ne.s32.totalorder %s296, %s297
    %p309 = scmp.eq.s32.totalorder %s25, 1
    %p310 = por %p308, %p309
    %p312 = scmp.ne.s32.totalorder %s297, %s311
    %p313 = scmp.eq.s32.totalorder %s25, 0
    %p314 = por %p312, %p313
    %s315 = ssub.s32 %s19, %s26
    %p316 = scmp.eq.s32.totalorder %s315, 0
    %s318 = sadd.s32 %s317, 1
    %s319 = scalar_select %p316, %s317, %s318
    %p322 = pneg %p316
    %p323 = scmp.eq.s32.totalorder %s19, 1
    %p324 = por %p322, %p323
    %p325 = scmp.ne.s32.totalorder %s317, %s320
    %p326 = scmp.eq.s32.totalorder %s19, 0
    %p327 = por %p325, %p326
    %p328 = scmp.ne.s32.totalorder %s317, %s320
    %p329 = scmp.eq.s32.totalorder %s24, 1
    %p330 = por %p328, %p329
    %p331 = scmp.ne.s32.totalorder %s320, %s321
    %p332 = scmp.eq.s32.totalorder %s24, 0
    %p333 = por %p331, %p332
    %p334 = scmp.ne.s32.totalorder %s320, %s321
    %p335 = scmp.eq.s32.totalorder %s25, 1
    %p336 = por %p334, %p335
    %p338 = scmp.ne.s32.totalorder %s321, %s337
    %p339 = scmp.eq.s32.totalorder %s25, 0
    %p340 = por %p338, %p339
    %p341 = scmp.le.s32.totalorder 1, %s19
    %p342 = scmp.lt.s32.totalorder %s19, 3
    %p343 = pnand %p341, %p342
    %p344 = pneg %p343
    // Predicated region
    $region9: #{ella_forward.8} parent=5 // pred_check
      _
    $region10: #{ella_forward.8} parent=5 // pred_check_branch
      %346 = sbr.rel (%p343) target = $region12
    $region11: #{ella_forward.8} parent=5 // pred_region
      %s347 = ssub.s32 %s19, 1
      // Predicated region
      $region13: #{ella_forward.8} parent=11 // pred_check
        %p348 = pneg %p118
      $region14: #{ella_forward.8} parent=11 // pred_check_branch
        %350 = sbr.rel (%p348) target = $region16
      $region15: #{ella_forward.8} parent=11 // pred_region
        _
      $region16: #{ella_forward.8} parent=11 // pred_fallthru
        _
      // Predicated region
      $region17: #{ella_forward.8} parent=11 // pred_check
        %p351 = pneg %p139
      $region18: #{ella_forward.8} parent=11 // pred_check_branch
        %353 = sbr.rel (%p351) target = $region20
      $region19: #{ella_forward.8} parent=11 // pred_region
        _
      $region20: #{ella_forward.8} parent=11 // pred_fallthru
        _
      // Predicated region
      $region21: #{ella_forward.8} parent=11 // pred_check
        %p354 = pneg %p160
      $region22: #{ella_forward.8} parent=11 // pred_check_branch
        %356 = sbr.rel (%p354) target = $region24
      $region23: #{ella_forward.8} parent=11 // pred_region
        _
      $region24: #{ella_forward.8} parent=11 // pred_fallthru
        _
      // Predicated region
      $region25: #{ella_forward.8} parent=11 // pred_check
        %p357 = pneg %p181
      $region26: #{ella_forward.8} parent=11 // pred_check_branch
        %359 = sbr.rel (%p357) target = $region28
      $region27: #{ella_forward.8} parent=11 // pred_region
        _
      $region28: #{ella_forward.8} parent=11 // pred_fallthru
        _
      // Predicated region
      $region29: #{ella_forward.8} parent=11 // pred_check
        %p360 = pneg %p202
      $region30: #{ella_forward.8} parent=11 // pred_check_branch
        %362 = sbr.rel (%p360) target = $region32
      $region31: #{ella_forward.8} parent=11 // pred_region
        _
      $region32: #{ella_forward.8} parent=11 // pred_fallthru
        _
      // Predicated region
      $region33: #{ella_forward.8} parent=11 // pred_check
        %p363 = pneg %p223
      $region34: #{ella_forward.8} parent=11 // pred_check_branch
        %365 = sbr.rel (%p363) target = $region36
      $region35: #{ella_forward.8} parent=11 // pred_region
        _
      $region36: #{ella_forward.8} parent=11 // pred_fallthru
        _
      // Predicated region
      $region37: #{ella_forward.8} parent=11 // pred_check
        %p366 = pneg %p244
      $region38: #{ella_forward.8} parent=11 // pred_check_branch
        %368 = sbr.rel (%p366) target = $region40
      $region39: #{ella_forward.8} parent=11 // pred_region
        _
      $region40: #{ella_forward.8} parent=11 // pred_fallthru
        _
      // Predicated region
      $region41: #{ella_forward.8} parent=11 // pred_check
        %p369 = pneg %p265
      $region42: #{ella_forward.8} parent=11 // pred_check_branch
        %371 = sbr.rel (%p369) target = $region44
      $region43: #{ella_forward.8} parent=11 // pred_region
        _
      $region44: #{ella_forward.8} parent=11 // pred_fallthru
        _
      // Predicated region
      $region45: #{ella_forward.8} parent=11 // pred_check
        %p372 = pneg %p286
      $region46: #{ella_forward.8} parent=11 // pred_check_branch
        %374 = sbr.rel (%p372) target = $region48
      $region47: #{ella_forward.8} parent=11 // pred_region
        _
      $region48: #{ella_forward.8} parent=11 // pred_fallthru
        _
      // Predicated region
      $region49: #{ella_forward.8} parent=11 // pred_check
        %p375 = pneg %p307
      $region50: #{ella_forward.8} parent=11 // pred_check_branch
        %377 = sbr.rel (%p375) target = $region52
      $region51: #{ella_forward.8} parent=11 // pred_region
        _
      $region52: #{ella_forward.8} parent=11 // pred_fallthru
        _
    $region12: #{ella_forward.8} parent=5 // pred_fallthru
      _
    %p378 = scmp.lt.s32.totalorder %s19, 2
    // Predicated region
    $region53: #{ella_forward.8} parent=5 // pred_check
      %p379 = pneg %p378
    $region54: #{ella_forward.8} parent=5 // pred_check_branch
      %381 = sbr.rel (%p379) target = $region56
    $region55: #{ella_forward.8} parent=5 // pred_region
      // Predicated region
      $region57: #{ella_forward.8} parent=55 // pred_check
        %p382 = pneg %p39
      $region58: #{ella_forward.8} parent=55 // pred_check_branch
        %384 = sbr.rel (%p382) target = $region60
      $region59: #{ella_forward.8} parent=55 // pred_region
        %p385 = scmp.lt.s32.totalorder %s19, 1
        %s386 = scalar_select %p385, %s19, 1
        %s387 = smul.addr %s386, 8
        %s388 = scalar_lea.vmem %s0, %s387
      $region60: #{ella_forward.8} parent=55 // pred_fallthru
        _
      // Predicated region
      $region61: #{ella_forward.8} parent=55 // pred_check
        %p389 = pneg %p65
      $region62: #{ella_forward.8} parent=55 // pred_check_branch
        %391 = sbr.rel (%p389) target = $region64
      $region63: #{ella_forward.8} parent=55 // pred_region
        %p392 = scmp.lt.s32.totalorder %s19, 1
        %s393 = scalar_select %p392, %s19, 1
        %s394 = smul.addr %s393, 8
        %s395 = scalar_lea.vmem %s1, %s394
      $region64: #{ella_forward.8} parent=55 // pred_fallthru
        _
      // Predicated region
      $region65: #{ella_forward.8} parent=55 // pred_check
        %p396 = pneg %p91
      $region66: #{ella_forward.8} parent=55 // pred_check_branch
        %398 = sbr.rel (%p396) target = $region68
      $region67: #{ella_forward.8} parent=55 // pred_region
        %p399 = scmp.lt.s32.totalorder %s19, 1
        %s400 = scalar_select %p399, %s19, 1
        %s401 = smul.addr %s400, 8
        %s402 = scalar_lea.vmem %s2, %s401
      $region68: #{ella_forward.8} parent=55 // pred_fallthru
        _
    $region56: #{ella_forward.8} parent=5 // pred_fallthru
      _
    %p403 = scmp.le.s32.totalorder 1, %s19
    %p404 = scmp.lt.s32.totalorder %s19, 3
    %p405 = pnand %p403, %p404
    %p406 = pneg %p405
    // Predicated region
    $region69: #{ella_forward.8} parent=5 // pred_check
      _
    $region70: #{ella_forward.8} parent=5 // pred_check_branch
      %408 = sbr.rel (%p405) target = $region72
    $region71: #{ella_forward.8} parent=5 // pred_region
      %s409 = ssub.s32 %s19, 1
      %p410 = scmp.lt.s32.totalorder %s24, 1
      %s411 = scalar_select %p410, %s24, 1
      %s412 = smul.addr %s411, 8
      %s413 = scalar_lea.vmem %s0, %s412
      %p414 = pneg %p45
      %p415 = pneg %p42
      %p416 = scmp.lt.s32.totalorder %s24, 1
      %s417 = scalar_select %p416, %s24, 1
      %s418 = smul.addr %s417, 8
      %s419 = scalar_lea.vmem %s1, %s418
      %p420 = pneg %p71
      %p421 = pneg %p68
      %p422 = scmp.lt.s32.totalorder %s24, 1
      %s423 = scalar_select %p422, %s24, 1
      %s424 = smul.addr %s423, 8
      %s425 = scalar_lea.vmem %s2, %s424
      %p426 = pneg %p97
      %p427 = pneg %p94
      %p428 = pneg %p118
      %p429 = pneg %p115
      %p430 = pneg %p139
      %p431 = pneg %p136
      %p432 = pneg %p160
      %p433 = pneg %p157
      %p434 = pneg %p181
      %p435 = pneg %p178
      %p436 = pneg %p202
      %p437 = pneg %p199
      %p438 = pneg %p223
      %p439 = pneg %p220
      %p440 = pneg %p244
      %p441 = pneg %p241
      %p442 = pneg %p265
      %p443 = pneg %p262
      %p444 = pneg %p286
      %p445 = pneg %p283
      %p446 = pneg %p307
      %p447 = pneg %p304
      %p448 = pneg %p333
      %p449 = pneg %p330
      %p450 = scmp.lt.s32.totalorder %s24, 1
      %s451 = scalar_select %p450, %s24, 1
      %s452 = smul.addr %s451, 8
      %s453 = scalar_lea.vmem %s13, %s452
      %p454 = scmp.lt.s32.totalorder %s24, 1
      %s455 = scalar_select %p454, %s24, 1
      %s456 = smul.addr %s455, 8
      %s457 = scalar_lea.vmem %s0, %s456
      %p458 = scmp.lt.s32.totalorder %s24, 1
      %s459 = scalar_select %p458, %s24, 1
      %s460 = smul.addr %s459, 8
      %s461 = scalar_lea.vmem %s1, %s460
      %p462 = scmp.lt.s32.totalorder %s24, 1
      %s463 = scalar_select %p462, %s24, 1
      %s464 = smul.addr %s463, 8
      %s465 = scalar_lea.vmem %s2, %s464
      %p466 = scmp.lt.s32.totalorder %s24, 1
      %s467 = scalar_select %p466, %s24, 1
      %s468 = smul.addr %s467, 8
      %s469 = scalar_lea.vmem %s13, %s468
      %v471 = vld [vmem:[%s465] sm:$0xff]
      %v472 = vld [vmem:[%s461] sm:$0xff]
      %v473 = vld [vmem:[%s457] sm:$0x3f]
      %vm474 = vcmask 523264
      %v475 = vsel %vm474, %v471, 0.0
      %476 = vadd.xlane.f32.xlu0 %v475
      %v477 = vpop.xlane.xlu0 %476
      %v478 = vrcp.pop 64.0
      %v479 = vmul.f32 64.0, %v478
      %v480 = vsub.f32 1.0, %v479
      %v481 = vmul.f32 %v478, %v480
      %v482 = vadd.f32 %v478, %v481
      %vm483 = vweird.f32 %v478
      %v484 = vsel %vm483, %v478, %v482
      %v485 = vmul.f32 %v477, %v484
      %v486 = vsub.f32 %v471, %v485
      %v487 = vmul.f32 %v486, %v486
      %v488 = vsel %vm474, %v487, 0.0
      %489 = vadd.xlane.f32.xlu0 %v488
      %v490 = vpop.xlane.xlu0 %489
      %v491 = vmul.f32 %v490, %v484
      %v492 = vadd.f32 %v491, 1e-06
      %v493 = vrsqrt.pop %v492
      %v494 = vmul.f32 %v493, %v492
      %v495 = vmul.f32 %v494, %v493
      %v496 = vmul.f32 0.5, %v495
      %v497 = vsub.f32 1.5, %v496
      %v498 = vmul.f32 %v493, %v497
      %vm499 = vweird.f32 %v492
      %vm500 = vweird.f32 %v493
      %vm501 = vmor %vm499, %vm500
      %v502 = vsel %vm501, %v493, %v498
      %v503 = vmul.f32 %v486, %v502
      %v504 = vadd.f32 %v473, 1.0
      %v505 = vperm.slane %v504, 1
      %v506 = vmul.f32 %v503, %v505
      %v507 = vperm.slane %v473, 0
      %v508 = vadd.f32 %v506, %v507
      %v509 = vpack.c.bf16 %v508, %v508
      %v510 = vld [vmem:[%s3] sm:$0xff]
      %v511 = vld [vmem:[%s3 + $0x8] sm:$0xff]
      %v512 = vld [vmem:[%s3 + $0x10] sm:$0xff]
      %v513 = vld [vmem:[%s3 + $0x18] sm:$0xff]
      %v514 = vld [vmem:[%s3 + $0x20] sm:$0xff]
      %v515 = vld [vmem:[%s3 + $0x28] sm:$0xff]
      %v516 = vld [vmem:[%s3 + $0x30] sm:$0xff]
      %v517 = vld [vmem:[%s3 + $0x38] sm:$0xff]
      %v518 = vld [vmem:[%s4] sm:$0x3]
      %v520 = vperm.slane %v518, 0
      %v521 = vperm.slane %v518, 1
      %v532 = vunpack.c.l.b16 %v510
      %v533 = vunpack.c.h.b16 %v510
      %v534 = vunpack.c.l.b16 %v511
      %v535 = vunpack.c.h.b16 %v511
      %v536 = vunpack.c.l.b16 %v512
      %v537 = vunpack.c.h.b16 %v512
      %v538 = vunpack.c.l.b16 %v513
      %v539 = vunpack.c.h.b16 %v513
      %v540 = vunpack.c.l.b16 %v514
      %v541 = vunpack.c.h.b16 %v514
      %v542 = vunpack.c.l.b16 %v515
      %v543 = vunpack.c.h.b16 %v515
      %v544 = vunpack.c.l.b16 %v516
      %v545 = vunpack.c.h.b16 %v516
      %v546 = vunpack.c.l.b16 %v517
      %v547 = vunpack.c.h.b16 %v517
      %v548 = vpack.c.b16 %v534, %v532
      %v549 = vpack.c.b16 %v535, %v533
      %v550 = vpack.c.b16 %v538, %v536
      %v551 = vpack.c.b16 %v539, %v537
      %v552 = vpack.c.b16 %v542, %v540
      %v553 = vpack.c.b16 %v543, %v541
      %v554 = vpack.c.b16 %v546, %v544
      %v555 = vpack.c.b16 %v547, %v545
      %v565 = vsel %vm474, %v509, 0
      %567 = vmatpush.bf16.msra.mxu0 0
      %568 = vmatpush.bf16.msra.mxu0 0
      %569 = vmatpush.bf16.msra.mxu0 0
      %570 = vmatpush.bf16.msra.mxu0 0
      %571 = vmatpush.bf16.msra.mxu0 %v554
      %572 = vmatpush.bf16.msra.mxu0 %v552
      %573 = vmatpush.bf16.msra.mxu0 %v550
      %574 = vmatpush.bf16.msra.mxu0 %v548
      %575 = vmatmul.bf16.gmra.mxu0 %v565
      %v576 = vpop.f32.mrf.mxu0
      %v577 = vadd.f32 %v520, %v576
      %v578 = vpop.f32.mrf.mxu0
      %579 = vdwg.mxu0
      %580 = vmatpush.bf16.msra.mxu0 0
      %581 = vmatpush.bf16.msra.mxu0 0
      %582 = vmatpush.bf16.msra.mxu0 0
      %583 = vmatpush.bf16.msra.mxu0 0
      %584 = vmatpush.bf16.msra.mxu0 %v555
      %585 = vmatpush.bf16.msra.mxu0 %v553
      %586 = vmatpush.bf16.msra.mxu0 %v551
      %587 = vmatpush.bf16.msra.mxu0 %v549
      %588 = vmatmul.bf16.gmra.mxu0 %v565
      %v589 = vpop.f32.mrf.mxu0
      %v590 = vadd.f32 %v521, %v589
      %v591 = vpop.f32.mrf.mxu0
      %592 = vdwg.mxu0
      %v593 = vsel %vm474, %v472, 0.0
      %594 = vadd.xlane.f32.xlu0 %v593
      %v595 = vpop.xlane.xlu0 %594
      %v596 = vmul.f32 %v595, %v484
      %v597 = vsub.f32 %v472, %v596
      %v598 = vmul.f32 %v597, %v597
      %v599 = vsel %vm474, %v598, 0.0
      %600 = vadd.xlane.f32.xlu0 %v599
      %v601 = vpop.xlane.xlu0 %600
      %v602 = vmul.f32 %v601, %v484
      %v603 = vadd.f32 %v602, 1e-06
      %v604 = vrsqrt.pop %v603
      %v605 = vmul.f32 %v604, %v603
      %v606 = vmul.f32 %v605, %v604
      %v607 = vmul.f32 0.5, %v606
      %v608 = vsub.f32 1.5, %v607
      %v609 = vmul.f32 %v604, %v608
      %vm610 = vweird.f32 %v603
      %vm611 = vweird.f32 %v604
      %vm612 = vmor %vm610, %vm611
      %v613 = vsel %vm612, %v604, %v609
      %v614 = vmul.f32 %v597, %v613
      %v615 = vperm.slane %v504, 3
      %v616 = vmul.f32 %v614, %v615
      %v617 = vperm.slane %v473, 2
      %v618 = vadd.f32 %v616, %v617
      %v619 = vpack.c.bf16 %v618, %v618
      %v620 = vld [vmem:[%s5] sm:$0xf]
      %v621 = vld [vmem:[%s5 + $0x4] sm:$0xf]
      %v622 = vld [vmem:[%s5 + $0x8] sm:$0xf]
      %v623 = vld [vmem:[%s5 + $0xc] sm:$0xf]
      %v624 = vld [vmem:[%s5 + $0x10] sm:$0xf]
      %v625 = vld [vmem:[%s5 + $0x14] sm:$0xf]
      %v626 = vld [vmem:[%s5 + $0x18] sm:$0xf]
      %v627 = vld [vmem:[%s5 + $0x1c] sm:$0xf]
      %v628 = vld [vmem:[%s6] sm:$0x1]
      %v630 = vperm.slane %v628, 0
      %v640 = vunpack.c.l.b16 %v620
      %v641 = vunpack.c.l.b16 %v621
      %v642 = vunpack.c.l.b16 %v622
      %v643 = vunpack.c.l.b16 %v623
      %v644 = vunpack.c.l.b16 %v624
      %v645 = vunpack.c.l.b16 %v625
      %v646 = vunpack.c.l.b16 %v626
      %v647 = vunpack.c.l.b16 %v627
      %v648 = vpack.c.b16 %v641, %v640
      %v649 = vpack.c.b16 %v643, %v642
      %v650 = vpack.c.b16 %v645, %v644
      %v651 = vpack.c.b16 %v647, %v646
      %v657 = vsel %vm474, %v619, 0
      %659 = vmatpush.bf16.msra.mxu0 0
      %660 = vmatpush.bf16.msra.mxu0 0
      %661 = vmatpush.bf16.msra.mxu0 0
      %662 = vmatpush.bf16.msra.mxu0 0
      %663 = vmatpush.bf16.msra.mxu0 %v651
      %664 = vmatpush.bf16.msra.mxu0 %v650
      %665 = vmatpush.bf16.msra.mxu0 %v649
      %666 = vmatpush.bf16.msra.mxu0 %v648
      %667 = vmatmul.bf16.gmra.mxu0 %v657
      %v668 = vpop.f32.mrf.mxu0
      %v669 = vadd.f32 %v630, %v668
      %v670 = vpop.f32.mrf.mxu0
      %671 = vdwg.mxu0
      %v672 = vpack.c.bf16 %v577, %v577
      %674 = vrot.lane.b32.xlu0 %v669, 64
      %v675 = vpop.permute.xlu0 %674
      %v677 = vpack.c.bf16 %v675, %v675
      %v678 = vpack.c.bf16 %v590, %v590
      %v679 = vld [vmem:[%s7] sm:$0xf]
      %v680 = vld [vmem:[%s7 + $0x4] sm:$0xf]
      %v681 = vld [vmem:[%s7 + $0x8] sm:$0xf]
      %v682 = vld [vmem:[%s7 + $0xc] sm:$0xf]
      %v683 = vld [vmem:[%s7 + $0x10] sm:$0xf]
      %v684 = vld [vmem:[%s7 + $0x14] sm:$0xf]
      %v685 = vld [vmem:[%s7 + $0x18] sm:$0xf]
      %v686 = vld [vmem:[%s7 + $0x1c] sm:$0xf]
      %687 = vst.msk [vmem:[#allocation2] sm:$0xff] %vm474, 0.0
      %v690 = vunpack.c.l.b16 %v672
      %v691 = vunpack.c.l.b16 %v677
      %v692 = vpack.c.b16 %v691, %v690
      %693 = vrot.lane.b32.xlu0 %v692, 64
      %v694 = vpop.permute.xlu0 %693
      %vm695 = vcmask 130048
      %v697 = vsel %vm695, %v672, 0
      %v700 = vsel %vm695, %v694, 0
      %702 = vmatpush.bf16.xpose.msra.mxu0 0
      %703 = vmatpush.bf16.xpose.msra.mxu0 0
      %704 = vmatpush.bf16.xpose.msra.mxu0 0
      %705 = vmatpush.bf16.xpose.msra.mxu0 0
      %706 = vmatpush.bf16.xpose.msra.mxu0 0
      %707 = vmatpush.bf16.xpose.msra.mxu0 0
      %708 = vmatpush.bf16.xpose.msra.mxu0 0
      %709 = vmatpush.bf16.xpose.msra.mxu0 %v700
      %710 = vmatmul.bf16.gmra.mxu0 %v697
      %v711 = vpop.f32.mrf.mxu0
      %v712 = vadd.f32 0.0, %v711
      %v713 = vpop.f32.mrf.mxu0
      %714 = vdwg.mxu0
      %v715 = vmul.f32 %v712, 0.25
      %v716 = vsel %vm695, %v715, -inf
      %717 = vmax.xlane.f32.xlu0 %v716
      %v718 = vpop.xlane.xlu0 %717
      %v719 = vsub.f32 %v715, %v718
      %v720 = vmul.f32 %v719, 1.442695
      %v721 = vpow.pop %v720
      %v722 = vsel %vm695, %v721, 0.0
      %723 = vadd.xlane.f32.xlu0 %v722
      %v724 = vpop.xlane.xlu0 %723
      %v725 = vrcp.pop %v724
      %v726 = vmul.f32 %v721, %v725
      %v727 = vpack.c.bf16 %v726, %v726
      %v729 = vunpack.c.l.b16 %v678
      %v730 = vpack.c.b16 %v691, %v729
      %v733 = vsel %vm695, %v727, 0
      %735 = vmatpush.bf16.msra.mxu0 0
      %736 = vmatpush.bf16.msra.mxu0 0
      %737 = vmatpush.bf16.msra.mxu0 0
      %738 = vmatpush.bf16.msra.mxu0 0
      %739 = vmatpush.bf16.msra.mxu0 0
      %740 = vmatpush.bf16.msra.mxu0 0
      %741 = vmatpush.bf16.msra.mxu0 0
      %742 = vmatpush.bf16.msra.mxu0 %v730
      %743 = vmatmul.bf16.gmra.mxu0 %v733
      %v744 = vpop.f32.mrf.mxu0
      %v745 = vadd.f32 0.0, %v744
      %v746 = vpop.f32.mrf.mxu0
      %747 = vdwg.mxu0
      %v748 = vld [vmem:[#allocation2] sm:$0xff]
      %v749 = vpack.c.bf16 %v745, %v745
      %v752 = vunpack.c.l.b16 %v679
      %v753 = vunpack.c.l.b16 %v680
      %v754 = vpack.c.b16 %v753, %v752
      %v757 = vsel %vm695, %v749, 0
      %759 = vmatpush.bf16.msra.mxu0 0
      %760 = vmatpush.bf16.msra.mxu0 0
      %761 = vmatpush.bf16.msra.mxu0 0
      %762 = vmatpush.bf16.msra.mxu0 0
      %763 = vmatpush.bf16.msra.mxu0 0
      %764 = vmatpush.bf16.msra.mxu0 0
      %765 = vmatpush.bf16.msra.mxu0 0
      %766 = vmatpush.bf16.msra.mxu0 %v754
      %767 = vmatmul.bf16.gmra.mxu0 %v757
      %v768 = vpop.f32.mrf.mxu0
      %v769 = vadd.f32 0.0, %v768
      %v770 = vpop.f32.mrf.mxu0
      %771 = vdwg.mxu0
      %v772 = vadd.f32 %v748, %v769
      %773 = vst.msk [vmem:[#allocation2] sm:$0xff] %vm474, %v772
      %v774 = vpack.c.b16 %v690, %v690
      %775 = vrot.lane.b32.xlu0 %v774, 112
      %v776 = vpop.permute.xlu0 %775
      %777 = vrot.lane.b32.xlu0 %v692, 48
      %v778 = vpop.permute.xlu0 %777
      %v780 = vsel %vm695, %v776, 0
      %v783 = vsel %vm695, %v778, 0
      %785 = vmatpush.bf16.xpose.msra.mxu0 0
      %786 = vmatpush.bf16.xpose.msra.mxu0 0
      %787 = vmatpush.bf16.xpose.msra.mxu0 0
      %788 = vmatpush.bf16.xpose.msra.mxu0 0
      %789 = vmatpush.bf16.xpose.msra.mxu0 0
      %790 = vmatpush.bf16.xpose.msra.mxu0 0
      %791 = vmatpush.bf16.xpose.msra.mxu0 0
      %792 = vmatpush.bf16.xpose.msra.mxu0 %v783
      %793 = vmatmul.bf16.gmra.mxu0 %v780
      %v794 = vpop.f32.mrf.mxu0
      %v795 = vadd.f32 0.0, %v794
      %v796 = vpop.f32.mrf.mxu0
      %797 = vdwg.mxu0
      %v798 = vmul.f32 %v795, 0.25
      %v799 = vsel %vm695, %v798, -inf
      %800 = vmax.xlane.f32.xlu0 %v799
      %v801 = vpop.xlane.xlu0 %800
      %v802 = vsub.f32 %v798, %v801
      %v803 = vmul.f32 %v802, 1.442695
      %v804 = vpow.pop %v803
      %v805 = vsel %vm695, %v804, 0.0
      %806 = vadd.xlane.f32.xlu0 %v805
      %v807 = vpop.xlane.xlu0 %806
      %v808 = vrcp.pop %v807
      %v809 = vmul.f32 %v804, %v808
      %v810 = vpack.c.bf16 %v809, %v809
      %811 = vrot.lane.b32.xlu0 %v730, 112
      %v812 = vpop.permute.xlu0 %811
      %v815 = vsel %vm695, %v810, 0
      %817 = vmatpush.bf16.msra.mxu0 0
      %818 = vmatpush.bf16.msra.mxu0 0
      %819 = vmatpush.bf16.msra.mxu0 0
      %820 = vmatpush.bf16.msra.mxu0 0
      %821 = vmatpush.bf16.msra.mxu0 0
      %822 = vmatpush.bf16.msra.mxu0 0
      %823 = vmatpush.bf16.msra.mxu0 0
      %824 = vmatpush.bf16.msra.mxu0 %v812
      %825 = vmatmul.bf16.gmra.mxu0 %v815
      %v826 = vpop.f32.mrf.mxu0
      %v827 = vadd.f32 0.0, %v826
      %v828 = vpop.f32.mrf.mxu0
      %829 = vdwg.mxu0
      %v830 = vld [vmem:[#allocation2] sm:$0xff]
      %v831 = vpack.c.bf16 %v827, %v827
      %v834 = vunpack.c.l.b16 %v681
      %v835 = vunpack.c.l.b16 %v682
      %v836 = vpack.c.b16 %v835, %v834
      %v839 = vsel %vm695, %v831, 0
      %841 = vmatpush.bf16.msra.mxu0 0
      %842 = vmatpush.bf16.msra.mxu0 0
      %843 = vmatpush.bf16.msra.mxu0 0
      %844 = vmatpush.bf16.msra.mxu0 0
      %845 = vmatpush.bf16.msra.mxu0 0
      %846 = vmatpush.bf16.msra.mxu0 0
      %847 = vmatpush.bf16.msra.mxu0 0
      %848 = vmatpush.bf16.msra.mxu0 %v836
      %849 = vmatmul.bf16.gmra.mxu0 %v839
      %v850 = vpop.f32.mrf.mxu0
      %v851 = vadd.f32 0.0, %v850
      %v852 = vpop.f32.mrf.mxu0
      %853 = vdwg.mxu0
      %v854 = vadd.f32 %v830, %v851
      %855 = vst.msk [vmem:[#allocation2] sm:$0xff] %vm474, %v854
      %856 = vrot.lane.b32.xlu0 %v774, 96
      %v857 = vpop.permute.xlu0 %856
      %858 = vrot.lane.b32.xlu0 %v692, 32
      %v859 = vpop.permute.xlu0 %858
      %v861 = vsel %vm695, %v857, 0
      %v864 = vsel %vm695, %v859, 0
      %866 = vmatpush.bf16.xpose.msra.mxu0 0
      %867 = vmatpush.bf16.xpose.msra.mxu0 0
      %868 = vmatpush.bf16.xpose.msra.mxu0 0
      %869 = vmatpush.bf16.xpose.msra.mxu0 0
      %870 = vmatpush.bf16.xpose.msra.mxu0 0
      %871 = vmatpush.bf16.xpose.msra.mxu0 0
      %872 = vmatpush.bf16.xpose.msra.mxu0 0
      %873 = vmatpush.bf16.xpose.msra.mxu0 %v864
      %874 = vmatmul.bf16.gmra.mxu0 %v861
      %v875 = vpop.f32.mrf.mxu0
      %v876 = vadd.f32 0.0, %v875
      %v877 = vpop.f32.mrf.mxu0
      %878 = vdwg.mxu0
      %v879 = vmul.f32 %v876, 0.25
      %v880 = vsel %vm695, %v879, -inf
      %881 = vmax.xlane.f32.xlu0 %v880
      %v882 = vpop.xlane.xlu0 %881
      %v883 = vsub.f32 %v879, %v882
      %v884 = vmul.f32 %v883, 1.442695
      %v885 = vpow.pop %v884
      %v886 = vsel %vm695, %v885, 0.0
      %887 = vadd.xlane.f32.xlu0 %v886
      %v888 = vpop.xlane.xlu0 %887
      %v889 = vrcp.pop %v888
      %v890 = vmul.f32 %v885, %v889
      %v891 = vpack.c.bf16 %v890, %v890
      %892 = vrot.lane.b32.xlu0 %v730, 96
      %v893 = vpop.permute.xlu0 %892
      %v896 = vsel %vm695, %v891, 0
      %898 = vmatpush.bf16.msra.mxu0 0
      %899 = vmatpush.bf16.msra.mxu0 0
      %900 = vmatpush.bf16.msra.mxu0 0
      %901 = vmatpush.bf16.msra.mxu0 0
      %902 = vmatpush.bf16.msra.mxu0 0
      %903 = vmatpush.bf16.msra.mxu0 0
      %904 = vmatpush.bf16.msra.mxu0 0
      %905 = vmatpush.bf16.msra.mxu0 %v893
      %906 = vmatmul.bf16.gmra.mxu0 %v896
      %v907 = vpop.f32.mrf.mxu0
      %v908 = vadd.f32 0.0, %v907
      %v909 = vpop.f32.mrf.mxu0
      %910 = vdwg.mxu0
      %v911 = vld [vmem:[#allocation2] sm:$0xff]
      %v912 = vpack.c.bf16 %v908, %v908
      %v915 = vunpack.c.l.b16 %v683
      %v916 = vunpack.c.l.b16 %v684
      %v917 = vpack.c.b16 %v916, %v915
      %v920 = vsel %vm695, %v912, 0
      %922 = vmatpush.bf16.msra.mxu0 0
      %923 = vmatpush.bf16.msra.mxu0 0
      %924 = vmatpush.bf16.msra.mxu0 0
      %925 = vmatpush.bf16.msra.mxu0 0
      %926 = vmatpush.bf16.msra.mxu0 0
      %927 = vmatpush.bf16.msra.mxu0 0
      %928 = vmatpush.bf16.msra.mxu0 0
      %929 = vmatpush.bf16.msra.mxu0 %v917
      %930 = vmatmul.bf16.gmra.mxu0 %v920
      %v931 = vpop.f32.mrf.mxu0
      %v932 = vadd.f32 0.0, %v931
      %v933 = vpop.f32.mrf.mxu0
      %934 = vdwg.mxu0
      %v935 = vadd.f32 %v911, %v932
      %936 = vst.msk [vmem:[#allocation2] sm:$0xff] %vm474, %v935
      %937 = vrot.lane.b32.xlu0 %v774, 80
      %v938 = vpop.permute.xlu0 %937
      %939 = vrot.lane.b32.xlu0 %v692, 16
      %v940 = vpop.permute.xlu0 %939
      %v942 = vsel %vm695, %v938, 0
      %v945 = vsel %vm695, %v940, 0
      %947 = vmatpush.bf16.xpose.msra.mxu0 0
      %948 = vmatpush.bf16.xpose.msra.mxu0 0
      %949 = vmatpush.bf16.xpose.msra.mxu0 0
      %950 = vmatpush.bf16.xpose.msra.mxu0 0
      %951 = vmatpush.bf16.xpose.msra.mxu0 0
      %952 = vmatpush.bf16.xpose.msra.mxu0 0
      %953 = vmatpush.bf16.xpose.msra.mxu0 0
      %954 = vmatpush.bf16.xpose.msra.mxu0 %v945
      %955 = vmatmul.bf16.gmra.mxu0 %v942
      %v956 = vpop.f32.mrf.mxu0
      %v957 = vadd.f32 0.0, %v956
      %v958 = vpop.f32.mrf.mxu0
      %959 = vdwg.mxu0
      %v960 = vmul.f32 %v957, 0.25
      %v961 = vsel %vm695, %v960, -inf
      %962 = vmax.xlane.f32.xlu0 %v961
      %v963 = vpop.xlane.xlu0 %962
      %v964 = vsub.f32 %v960, %v963
      %v965 = vmul.f32 %v964, 1.442695
      %v966 = vpow.pop %v965
      %v967 = vsel %vm695, %v966, 0.0
      %968 = vadd.xlane.f32.xlu0 %v967
      %v969 = vpop.xlane.xlu0 %968
      %v970 = vrcp.pop %v969
      %v971 = vmul.f32 %v966, %v970
      %v972 = vpack.c.bf16 %v971, %v971
      %973 = vrot.lane.b32.xlu0 %v730, 80
      %v974 = vpop.permute.xlu0 %973
      %v977 = vsel %vm695, %v972, 0
      %979 = vmatpush.bf16.msra.mxu0 0
      %980 = vmatpush.bf16.msra.mxu0 0
      %981 = vmatpush.bf16.msra.mxu0 0
      %982 = vmatpush.bf16.msra.mxu0 0
      %983 = vmatpush.bf16.msra.mxu0 0
      %984 = vmatpush.bf16.msra.mxu0 0
      %985 = vmatpush.bf16.msra.mxu0 0
      %986 = vmatpush.bf16.msra.mxu0 %v974
      %987 = vmatmul.bf16.gmra.mxu0 %v977
      %v988 = vpop.f32.mrf.mxu0
      %v989 = vadd.f32 0.0, %v988
      %v990 = vpop.f32.mrf.mxu0
      %991 = vdwg.mxu0
      %v992 = vld [vmem:[#allocation2] sm:$0xff]
      %v993 = vpack.c.bf16 %v989, %v989
      %v996 = vunpack.c.l.b16 %v685
      %v997 = vunpack.c.l.b16 %v686
      %v998 = vpack.c.b16 %v997, %v996
      %v1001 = vsel %vm695, %v993, 0
      %1003 = vmatpush.bf16.msra.mxu0 0
      %1004 = vmatpush.bf16.msra.mxu0 0
      %1005 = vmatpush.bf16.msra.mxu0 0
      %1006 = vmatpush.bf16.msra.mxu0 0
      %1007 = vmatpush.bf16.msra.mxu0 0
      %1008 = vmatpush.bf16.msra.mxu0 0
      %1009 = vmatpush.bf16.msra.mxu0 0
      %1010 = vmatpush.bf16.msra.mxu0 %v998
      %1011 = vmatmul.bf16.gmra.mxu0 %v1001
      %v1012 = vpop.f32.mrf.mxu0
      %v1013 = vadd.f32 0.0, %v1012
      %v1014 = vpop.f32.mrf.mxu0
      %1015 = vdwg.mxu0
      %v1016 = vadd.f32 %v992, %v1013
      %1017 = vst.msk [vmem:[#allocation2] sm:$0xff] %vm474, %v1016
      %v1018 = vld [vmem:[#allocation2] sm:$0xff]
      %v1019 = vadd.f32 %v471, %v1018
      %v1020 = vld [vmem:[%s8] sm:$0x1]
      %v1022 = vperm.slane %v1020, 0
      %v1024 = vadd.f32 %v1019, %v1022
      %v1025 = vsel %vm474, %v1024, 0.0
      %1026 = vadd.xlane.f32.xlu0 %v1025
      %v1027 = vpop.xlane.xlu0 %1026
      %v1028 = vmul.f32 %v1027, %v484
      %v1029 = vsub.f32 %v1024, %v1028
      %v1030 = vmul.f32 %v1029, %v1029
      %v1031 = vsel %vm474, %v1030, 0.0
      %1032 = vadd.xlane.f32.xlu0 %v1031
      %v1033 = vpop.xlane.xlu0 %1032
      %v1034 = vmul.f32 %v1033, %v484
      %v1035 = vadd.f32 %v1034, 1e-06
      %v1036 = vrsqrt.pop %v1035
      %v1037 = vmul.f32 %v1036, %v1035
      %v1038 = vmul.f32 %v1037, %v1036
      %v1039 = vmul.f32 0.5, %v1038
      %v1040 = vsub.f32 1.5, %v1039
      %v1041 = vmul.f32 %v1036, %v1040
      %vm1042 = vweird.f32 %v1035
      %vm1043 = vweird.f32 %v1036
      %vm1044 = vmor %vm1042, %vm1043
      %v1045 = vsel %vm1044, %v1036, %v1041
      %v1046 = vmul.f32 %v1029, %v1045
      %v1047 = vperm.slane %v504, 5
      %v1048 = vmul.f32 %v1046, %v1047
      %v1049 = vperm.slane %v473, 4
      %v1050 = vadd.f32 %v1048, %v1049
      %v1051 = vpack.c.bf16 %v1050, %v1050
      %v1052 = vld [vmem:[%s9] sm:$0xff]
      %v1053 = vld [vmem:[%s9 + $0x8] sm:$0xff]
      %v1054 = vld [vmem:[%s9 + $0x10] sm:$0xff]
      %v1055 = vld [vmem:[%s9 + $0x18] sm:$0xff]
      %v1056 = vld [vmem:[%s9 + $0x20] sm:$0xff]
      %v1057 = vld [vmem:[%s9 + $0x28] sm:$0xff]
      %v1058 = vld [vmem:[%s9 + $0x30] sm:$0xff]
      %v1059 = vld [vmem:[%s9 + $0x38] sm:$0xff]
      %v1060 = vld [vmem:[%s10] sm:$0x3]
      %v1062 = vperm.slane %v1060, 0
      %v1063 = vperm.slane %v1060, 1
      %v1074 = vunpack.c.l.b16 %v1052
      %v1075 = vunpack.c.h.b16 %v1052
      %v1076 = vunpack.c.l.b16 %v1053
      %v1077 = vunpack.c.h.b16 %v1053
      %v1078 = vunpack.c.l.b16 %v1054
      %v1079 = vunpack.c.h.b16 %v1054
      %v1080 = vunpack.c.l.b16 %v1055
      %v1081 = vunpack.c.h.b16 %v1055
      %v1082 = vunpack.c.l.b16 %v1056
      %v1083 = vunpack.c.h.b16 %v1056
      %v1084 = vunpack.c.l.b16 %v1057
      %v1085 = vunpack.c.h.b16 %v1057
      %v1086 = vunpack.c.l.b16 %v1058
      %v1087 = vunpack.c.h.b16 %v1058
      %v1088 = vunpack.c.l.b16 %v1059
      %v1089 = vunpack.c.h.b16 %v1059
      %v1090 = vpack.c.b16 %v1076, %v1074
      %v1091 = vpack.c.b16 %v1077, %v1075
      %v1092 = vpack.c.b16 %v1080, %v1078
      %v1093 = vpack.c.b16 %v1081, %v1079
      %v1094 = vpack.c.b16 %v1084, %v1082
      %v1095 = vpack.c.b16 %v1085, %v1083
      %v1096 = vpack.c.b16 %v1088, %v1086
      %v1097 = vpack.c.b16 %v1089, %v1087
      %v1107 = vsel %vm474, %v1051, 0
      %1109 = vmatpush.bf16.msra.mxu0 0
      %1110 = vmatpush.bf16.msra.mxu0 0
      %1111 = vmatpush.bf16.msra.mxu0 0
      %1112 = vmatpush.bf16.msra.mxu0 0
      %1113 = vmatpush.bf16.msra.mxu0 %v1096
      %1114 = vmatpush.bf16.msra.mxu0 %v1094
      %1115 = vmatpush.bf16.msra.mxu0 %v1092
      %1116 = vmatpush.bf16.msra.mxu0 %v1090
      %1117 = vmatmul.bf16.gmra.mxu0 %v1107
      %v1118 = vpop.f32.mrf.mxu0
      %v1119 = vadd.f32 %v1062, %v1118
      %v1120 = vpop.f32.mrf.mxu0
      %1121 = vdwg.mxu0
      %1122 = vmatpush.bf16.msra.mxu0 0
      %1123 = vmatpush.bf16.msra.mxu0 0
      %1124 = vmatpush.bf16.msra.mxu0 0
      %1125 = vmatpush.bf16.msra.mxu0 0
      %1126 = vmatpush.bf16.msra.mxu0 %v1097
      %1127 = vmatpush.bf16.msra.mxu0 %v1095
      %1128 = vmatpush.bf16.msra.mxu0 %v1093
      %1129 = vmatpush.bf16.msra.mxu0 %v1091
      %1130 = vmatmul.bf16.gmra.mxu0 %v1107
      %v1131 = vpop.f32.mrf.mxu0
      %v1132 = vadd.f32 %v1063, %v1131
      %v1133 = vpop.f32.mrf.mxu0
      %1134 = vdwg.mxu0
      %v1135 = vmax.f32 %v1119, 0.0
      %v1136 = vmax.f32 %v1132, 0.0
      %v1137 = vmul.f32 %v1135, %v1135
      %v1138 = vmul.f32 %v1136, %v1136
      %v1139 = vpack.c.bf16 %v1137, %v1137
      %v1140 = vpack.c.bf16 %v1138, %v1138
      %v1141 = vld [vmem:[%s11] sm:$0xf]
      %v1142 = vld [vmem:[%s11 + $0x4] sm:$0xf]
      %v1143 = vld [vmem:[%s11 + $0x8] sm:$0xf]
      %v1144 = vld [vmem:[%s11 + $0xc] sm:$0xf]
      %v1145 = vld [vmem:[%s11 + $0x10] sm:$0xf]
      %v1146 = vld [vmem:[%s11 + $0x14] sm:$0xf]
      %v1147 = vld [vmem:[%s11 + $0x18] sm:$0xf]
      %v1148 = vld [vmem:[%s11 + $0x1c] sm:$0xf]
      %v1149 = vld [vmem:[%s11 + $0x20] sm:$0xf]
      %v1150 = vld [vmem:[%s11 + $0x24] sm:$0xf]
      %v1151 = vld [vmem:[%s11 + $0x28] sm:$0xf]
      %v1152 = vld [vmem:[%s11 + $0x2c] sm:$0xf]
      %v1153 = vld [vmem:[%s11 + $0x30] sm:$0xf]
      %v1154 = vld [vmem:[%s11 + $0x34] sm:$0xf]
      %v1155 = vld [vmem:[%s11 + $0x38] sm:$0xf]
      %v1156 = vld [vmem:[%s11 + $0x3c] sm:$0xf]
      %v1157 = vld [vmem:[%s11 + $0x40] sm:$0xf]
      %v1158 = vld [vmem:[%s11 + $0x44] sm:$0xf]
      %v1159 = vld [vmem:[%s11 + $0x48] sm:$0xf]
      %v1160 = vld [vmem:[%s11 + $0x4c] sm:$0xf]
      %v1161 = vld [vmem:[%s11 + $0x50] sm:$0xf]
      %v1162 = vld [vmem:[%s11 + $0x54] sm:$0xf]
      %v1163 = vld [vmem:[%s11 + $0x58] sm:$0xf]
      %v1164 = vld [vmem:[%s11 + $0x5c] sm:$0xf]
      %v1165 = vld [vmem:[%s11 + $0x60] sm:$0xf]
      %v1166 = vld [vmem:[%s11 + $0x64] sm:$0xf]
      %v1167 = vld [vmem:[%s11 + $0x68] sm:$0xf]
      %v1168 = vld [vmem:[%s11 + $0x6c] sm:$0xf]
      %v1169 = vld [vmem:[%s11 + $0x70] sm:$0xf]
      %v1170 = vld [vmem:[%s11 + $0x74] sm:$0xf]
      %v1171 = vld [vmem:[%s11 + $0x78] sm:$0xf]
      %v1172 = vld [vmem:[%s11 + $0x7c] sm:$0xf]
      %v1205 = vunpack.c.l.b16 %v1141
      %v1206 = vunpack.c.l.b16 %v1142
      %v1207 = vunpack.c.l.b16 %v1143
      %v1208 = vunpack.c.l.b16 %v1144
      %v1209 = vunpack.c.l.b16 %v1145
      %v1210 = vunpack.c.l.b16 %v1146
      %v1211 = vunpack.c.l.b16 %v1147
      %v1212 = vunpack.c.l.b16 %v1148
      %v1213 = vunpack.c.l.b16 %v1149
      %v1214 = vunpack.c.l.b16 %v1150
      %v1215 = vunpack.c.l.b16 %v1151
      %v1216 = vunpack.c.l.b16 %v1152
      %v1217 = vunpack.c.l.b16 %v1153
      %v1218 = vunpack.c.l.b16 %v1154
      %v1219 = vunpack.c.l.b16 %v1155
      %v1220 = vunpack.c.l.b16 %v1156
      %v1221 = vunpack.c.l.b16 %v1157
      %v1222 = vunpack.c.l.b16 %v1158
      %v1223 = vunpack.c.l.b16 %v1159
      %v1224 = vunpack.c.l.b16 %v1160
      %v1225 = vunpack.c.l.b16 %v1161
      %v1226 = vunpack.c.l.b16 %v1162
      %v1227 = vunpack.c.l.b16 %v1163
      %v1228 = vunpack.c.l.b16 %v1164
      %v1229 = vunpack.c.l.b16 %v1165
      %v1230 = vunpack.c.l.b16 %v1166
      %v1231 = vunpack.c.l.b16 %v1167
      %v1232 = vunpack.c.l.b16 %v1168
      %v1233 = vunpack.c.l.b16 %v1169
      %v1234 = vunpack.c.l.b16 %v1170
      %v1235 = vunpack.c.l.b16 %v1171
      %v1236 = vunpack.c.l.b16 %v1172
      %v1237 = vpack.c.b16 %v1206, %v1205
      %v1238 = vpack.c.b16 %v1208, %v1207
      %v1239 = vpack.c.b16 %v1210, %v1209
      %v1240 = vpack.c.b16 %v1212, %v1211
      %v1241 = vpack.c.b16 %v1214, %v1213
      %v1242 = vpack.c.b16 %v1216, %v1215
      %v1243 = vpack.c.b16 %v1218, %v1217
      %v1244 = vpack.c.b16 %v1220, %v1219
      %v1245 = vpack.c.b16 %v1222, %v1221
      %v1246 = vpack.c.b16 %v1224, %v1223
      %v1247 = vpack.c.b16 %v1226, %v1225
      %v1248 = vpack.c.b16 %v1228, %v1227
      %v1249 = vpack.c.b16 %v1230, %v1229
      %v1250 = vpack.c.b16 %v1232, %v1231
      %v1251 = vpack.c.b16 %v1234, %v1233
      %v1252 = vpack.c.b16 %v1236, %v1235
      %1269 = vmatpush.bf16.msra.mxu0 %v1244
      %1270 = vmatpush.bf16.msra.mxu0 %v1243
      %1271 = vmatpush.bf16.msra.mxu0 %v1242
      %1272 = vmatpush.bf16.msra.mxu0 %v1241
      %1273 = vmatpush.bf16.msra.mxu0 %v1240
      %1274 = vmatpush.bf16.msra.mxu0 %v1239
      %1275 = vmatpush.bf16.msra.mxu0 %v1238
      %1276 = vmatpush.bf16.msra.mxu0 %v1237
      %1277 = vmatmul.bf16.gmra.mxu0 %v1139
      %v1278 = vpop.f32.mrf.mxu0
      %v1279 = vadd.f32 0.0, %v1278
      %v1280 = vpop.f32.mrf.mxu0
      %1281 = vdwg.mxu0
      %1282 = vmatpush.bf16.msra.mxu0 %v1252
      %1283 = vmatpush.bf16.msra.mxu0 %v1251
      %1284 = vmatpush.bf16.msra.mxu0 %v1250
      %1285 = vmatpush.bf16.msra.mxu0 %v1249
      %1286 = vmatpush.bf16.msra.mxu0 %v1248
      %1287 = vmatpush.bf16.msra.mxu0 %v1247
      %1288 = vmatpush.bf16.msra.mxu0 %v1246
      %1289 = vmatpush.bf16.msra.mxu0 %v1245
      %1290 = vmatmul.bf16.gmra.mxu0 %v1140
      %v1291 = vpop.f32.mrf.mxu0
      %v1292 = vadd.f32 %v1279, %v1291
      %v1293 = vpop.f32.mrf.mxu0
      %1294 = vdwg.mxu0
      %v1295 = vadd.f32 %v1024, %v1292
      %v1296 = vld [vmem:[%s12] sm:$0x1]
      %v1298 = vperm.slane %v1296, 0
      %v1300 = vadd.f32 %v1295, %v1298
      %1301 = vst.msk [vmem:[%s469] sm:$0xff] %vm474, %v1300
      %p1302 = scmp.lt.s32.totalorder %s24, 1
      %s1303 = scalar_select %p1302, %s24, 1
      %s1304 = smul.addr %s1303, 8
      %s1305 = scalar_lea.vmem %s13, %s1304
      // Predicated region
      $region73: #{ella_forward.8} parent=71 // pred_check
        %p1306 = pneg %p330
      $region74: #{ella_forward.8} parent=71 // pred_check_branch
        %1308 = sbr.rel (%p1306) target = $region76
      $region75: #{ella_forward.8} parent=71 // pred_region
        _
      $region76: #{ella_forward.8} parent=71 // pred_fallthru
        _
    $region72: #{ella_forward.8} parent=5 // pred_fallthru
      _
    %p1309 = scmp.le.s32.totalorder 2, %s19
    // Predicated region
    $region77: #{ella_forward.8} parent=5 // pred_check
      %p1310 = pneg %p1309
    $region78: #{ella_forward.8} parent=5 // pred_check_branch
      %1312 = sbr.rel (%p1310) target = $region80
    $region79: #{ella_forward.8} parent=5 // pred_region
      %s1313 = ssub.s32 %s19, 2
      // Predicated region
      $region81: #{ella_forward.8} parent=79 // pred_check
        %p1314 = pneg %p336
      $region82: #{ella_forward.8} parent=79 // pred_check_branch
        %1316 = sbr.rel (%p1314) target = $region84
      $region83: #{ella_forward.8} parent=79 // pred_region
        %p1317 = scmp.lt.s32.totalorder %s25, 1
        %s1318 = scalar_select %p1317, %s25, 1
        %s1319 = smul.addr %s1318, 8
        %s1320 = scalar_lea.vmem %s13, %s1319
      $region84: #{ella_forward.8} parent=79 // pred_fallthru
        _
    $region80: #{ella_forward.8} parent=5 // pred_fallthru
      _
  $region6: #{ella_forward.8} parent=0 // loop_footer
    %s23 = sadd.s32 1, %s19
  $region7: #{ella_forward.8} parent=0 // loop_footer_branch
    %18 = sbr.rel target = $region3
  $region8: #{ella_forward.8} parent=0 // loop_exit
    _

// kernel: ella_forward.9
$region0: #{ella_forward.9}
  #allocation0 [shape = 'u32[]', space=smem, size = 0x4, offset = 0x4, fixed_abs, tag = 'smem constant byte address 0x4 - core index']
  #allocation1 [shape = 'u32[72,128]{1,0:T(1,128)}', space=vmem, size = 0x9000, scoped, tag = 'internal scratch']
  #allocation2 [shape = 'f32[8,64]{1,0:T(8,128)}', space=vmem, size = 0x1000, scoped, tag = 'scratch operand']
  %s0 = inlined_call_operand.vmem [shape: f32[2,6,64], index: 0, kind: input, shape index: {}]
  %s1 = inlined_call_operand.vmem [shape: f32[2,8,64], index: 1, kind: input, shape index: {}]
  %s2 = inlined_call_operand.vmem [shape: f32[2,8,64], index: 2, kind: input, shape index: {}]
  %s3 = inlined_call_operand.vmem [shape: bf16[64,192], index: 3, kind: input, shape index: {}]
  %s4 = inlined_call_operand.vmem [shape: f32[1,192], index: 4, kind: input, shape index: {}]
  %s5 = inlined_call_operand.vmem [shape: bf16[64,128], index: 5, kind: input, shape index: {}]
  %s6 = inlined_call_operand.vmem [shape: f32[1,128], index: 6, kind: input, shape index: {}]
  %s7 = inlined_call_operand.vmem [shape: bf16[64,64], index: 7, kind: input, shape index: {}]
  %s8 = inlined_call_operand.vmem [shape: f32[1,64], index: 8, kind: input, shape index: {}]
  %s9 = inlined_call_operand.vmem [shape: bf16[64,256], index: 9, kind: input, shape index: {}]
  %s10 = inlined_call_operand.vmem [shape: f32[1,256], index: 10, kind: input, shape index: {}]
  %s11 = inlined_call_operand.vmem [shape: bf16[256,64], index: 11, kind: input, shape index: {}]
  %s12 = inlined_call_operand.vmem [shape: f32[1,64], index: 12, kind: input, shape index: {}]
  %s13 = inlined_call_operand.hbm [shape: f32[2,8,64], index: 13, kind: output, shape index: {}]
  %s14 = sld [smem:[#allocation0]]
  $region85: #{ella_forward.9} parent=0
    _
  %s16 = ssub.s32 1, %s14
  %s17 = scalar_select 0, %s16, %s14
  $region1: #{ella_forward.9} parent=0
    #allocation3 [shape = 'u8[8192]{0}', space=vmem, size = 0x2000, scoped, tag = 'output window, operand 0']
    #allocation4 [shape = 's32[2]{0}', space=sflag, size = 0x8, scoped, tag = 'scoped memory for ella_forward.9']
    %18 = vsyncpa [#allocation4], 0
    %s19 = scalar_lea.sflag [#allocation4], 1
    %20 = vsyncpa %s19, 0
    loop: start=0, step=1, limit=4
    $region2: #{ella_forward.9} parent=1 // loop_pre_header
      _
    $region3: #{ella_forward.9} parent=1 // loop_header
      %s22 = sphi 0, %s26
      %p23 = scmp.ge.s32.totalorder %s22, 4
      %s32 = sphi 0, %s34
      %s35 = sphi 0, %s32
      %s36 = sphi 0, %s35
      %s52 = sphi 0, %s36
      %s58 = sphi 0, %s60
      %s61 = sphi 0, %s58
      %s62 = sphi 0, %s61
      %s78 = sphi 0, %s62
      %s84 = sphi 0, %s86
      %s87 = sphi 0, %s84
      %s88 = sphi 0, %s87
      %s104 = sphi 0, %s88
      %s108 = sphi 0, %s108
      %s110 = sphi 0, %s108
      %s111 = sphi 0, %s110
      %s125 = sphi 0, %s111
      %s129 = sphi 0, %s129
      %s131 = sphi 0, %s129
      %s132 = sphi 0, %s131
      %s146 = sphi 0, %s132
      %s150 = sphi 0, %s150
      %s152 = sphi 0, %s150
      %s153 = sphi 0, %s152
      %s167 = sphi 0, %s153
      %s171 = sphi 0, %s171
      %s173 = sphi 0, %s171
      %s174 = sphi 0, %s173
      %s188 = sphi 0, %s174
      %s192 = sphi 0, %s192
      %s194 = sphi 0, %s192
      %s195 = sphi 0, %s194
      %s209 = sphi 0, %s195
      %s213 = sphi 0, %s213
      %s215 = sphi 0, %s213
      %s216 = sphi 0, %s215
      %s230 = sphi 0, %s216
      %s234 = sphi 0, %s234
      %s236 = sphi 0, %s234
      %s237 = sphi 0, %s236
      %s251 = sphi 0, %s237
      %s255 = sphi 0, %s255
      %s257 = sphi 0, %s255
      %s258 = sphi 0, %s257
      %s272 = sphi 0, %s258
      %s276 = sphi 0, %s276
      %s278 = sphi 0, %s276
      %s279 = sphi 0, %s278
      %s293 = sphi 0, %s279
      %s297 = sphi 0, %s297
      %s299 = sphi 0, %s297
      %s300 = sphi 0, %s299
      %s314 = sphi 0, %s300
      %s320 = sphi 0, %s322
      %s323 = sphi 0, %s320
      %s324 = sphi 0, %s323
      %s340 = sphi 0, %s324
    $region4: #{ella_forward.9} parent=1 // loop_header_branch
      %25 = sbr.rel (%p23) target = $region8
    $region5: #{ella_forward.9} parent=1 // loop_body
      %s27 = ssub.s32 %s22, 1
      %s28 = ssub.s32 %s22, 2
      %s29 = sadd.s32 %s22, 1
      %s30 = ssub.s32 %s22, %s29
      %p31 = scmp.eq.s32.totalorder %s30, 0
      %s33 = sadd.s32 %s32, 1
      %s34 = scalar_select %p31, %s32, %s33
      %p37 = pneg %p31
      %p38 = scmp.eq.s32.totalorder %s22, 1
      %p39 = por %p37, %p38
      %p40 = scmp.ne.s32.totalorder %s32, %s35
      %p41 = scmp.eq.s32.totalorder %s22, 0
      %p42 = por %p40, %p41
      %p43 = scmp.ne.s32.totalorder %s32, %s35
      %p44 = scmp.eq.s32.totalorder %s27, 1
      %p45 = por %p43, %p44
      %p46 = scmp.ne.s32.totalorder %s35, %s36
      %p47 = scmp.eq.s32.totalorder %s27, 0
      %p48 = por %p46, %p47
      %p49 = scmp.ne.s32.totalorder %s35, %s36
      %p50 = scmp.eq.s32.totalorder %s28, 1
      %p51 = por %p49, %p50
      %p53 = scmp.ne.s32.totalorder %s36, %s52
      %p54 = scmp.eq.s32.totalorder %s28, 0
      %p55 = por %p53, %p54
      %s56 = ssub.s32 %s22, %s29
      %p57 = scmp.eq.s32.totalorder %s56, 0
      %s59 = sadd.s32 %s58, 1
      %s60 = scalar_select %p57, %s58, %s59
      %p63 = pneg %p57
      %p64 = scmp.eq.s32.totalorder %s22, 1
      %p65 = por %p63, %p64
      %p66 = scmp.ne.s32.totalorder %s58, %s61
      %p67 = scmp.eq.s32.totalorder %s22, 0
      %p68 = por %p66, %p67
      %p69 = scmp.ne.s32.totalorder %s58, %s61
      %p70 = scmp.eq.s32.totalorder %s27, 1
      %p71 = por %p69, %p70
      %p72 = scmp.ne.s32.totalorder %s61, %s62
      %p73 = scmp.eq.s32.totalorder %s27, 0
      %p74 = por %p72, %p73
      %p75 = scmp.ne.s32.totalorder %s61, %s62
      %p76 = scmp.eq.s32.totalorder %s28, 1
      %p77 = por %p75, %p76
      %p79 = scmp.ne.s32.totalorder %s62, %s78
      %p80 = scmp.eq.s32.totalorder %s28, 0
      %p81 = por %p79, %p80
      %s82 = ssub.s32 %s22, %s29
      %p83 = scmp.eq.s32.totalorder %s82, 0
      %s85 = sadd.s32 %s84, 1
      %s86 = scalar_select %p83, %s84, %s85
      %p89 = pneg %p83
      %p90 = scmp.eq.s32.totalorder %s22, 1
      %p91 = por %p89, %p90
      %p92 = scmp.ne.s32.totalorder %s84, %s87
      %p93 = scmp.eq.s32.totalorder %s22, 0
      %p94 = por %p92, %p93
      %p95 = scmp.ne.s32.totalorder %s84, %s87
      %p96 = scmp.eq.s32.totalorder %s27, 1
      %p97 = por %p95, %p96
      %p98 = scmp.ne.s32.totalorder %s87, %s88
      %p99 = scmp.eq.s32.totalorder %s27, 0
      %p100 = por %p98, %p99
      %p101 = scmp.ne.s32.totalorder %s87, %s88
      %p102 = scmp.eq.s32.totalorder %s28, 1
      %p103 = por %p101, %p102
      %p105 = scmp.ne.s32.totalorder %s88, %s104
      %p106 = scmp.eq.s32.totalorder %s28, 0
      %p107 = por %p105, %p106
      %s109 = sadd.s32 %s108, 1
      %p112 = scmp.eq.s32.totalorder %s22, 1
      %p113 = scmp.ne.s32.totalorder %s108, %s110
      %p114 = scmp.eq.s32.totalorder %s22, 0
      %p115 = por %p113, %p114
      %p116 = scmp.ne.s32.totalorder %s108, %s110
      %p117 = scmp.eq.s32.totalorder %s27, 1
      %p118 = por %p116, %p117
      %p119 = scmp.ne.s32.totalorder %s110, %s111
      %p120 = scmp.eq.s32.totalorder %s27, 0
      %p121 = por %p119, %p120
      %p122 = scmp.ne.s32.totalorder %s110, %s111
      %p123 = scmp.eq.s32.totalorder %s28, 1
      %p124 = por %p122, %p123
      %p126 = scmp.ne.s32.totalorder %s111, %s125
      %p127 = scmp.eq.s32.totalorder %s28, 0
      %p128 = por %p126, %p127
      %s130 = sadd.s32 %s129, 1
      %p133 = scmp.eq.s32.totalorder %s22, 1
      %p134 = scmp.ne.s32.totalorder %s129, %s131
      %p135 = scmp.eq.s32.totalorder %s22, 0
      %p136 = por %p134, %p135
      %p137 = scmp.ne.s32.totalorder %s129, %s131
      %p138 = scmp.eq.s32.totalorder %s27, 1
      %p139 = por %p137, %p138
      %p140 = scmp.ne.s32.totalorder %s131, %s132
      %p141 = scmp.eq.s32.totalorder %s27, 0
      %p142 = por %p140, %p141
      %p143 = scmp.ne.s32.totalorder %s131, %s132
      %p144 = scmp.eq.s32.totalorder %s28, 1
      %p145 = por %p143, %p144
      %p147 = scmp.ne.s32.totalorder %s132, %s146
      %p148 = scmp.eq.s32.totalorder %s28, 0
      %p149 = por %p147, %p148
      %s151 = sadd.s32 %s150, 1
      %p154 = scmp.eq.s32.totalorder %s22, 1
      %p155 = scmp.ne.s32.totalorder %s150, %s152
      %p156 = scmp.eq.s32.totalorder %s22, 0
      %p157 = por %p155, %p156
      %p158 = scmp.ne.s32.totalorder %s150, %s152
      %p159 = scmp.eq.s32.totalorder %s27, 1
      %p160 = por %p158, %p159
      %p161 = scmp.ne.s32.totalorder %s152, %s153
      %p162 = scmp.eq.s32.totalorder %s27, 0
      %p163 = por %p161, %p162
      %p164 = scmp.ne.s32.totalorder %s152, %s153
      %p165 = scmp.eq.s32.totalorder %s28, 1
      %p166 = por %p164, %p165
      %p168 = scmp.ne.s32.totalorder %s153, %s167
      %p169 = scmp.eq.s32.totalorder %s28, 0
      %p170 = por %p168, %p169
      %s172 = sadd.s32 %s171, 1
      %p175 = scmp.eq.s32.totalorder %s22, 1
      %p176 = scmp.ne.s32.totalorder %s171, %s173
      %p177 = scmp.eq.s32.totalorder %s22, 0
      %p178 = por %p176, %p177
      %p179 = scmp.ne.s32.totalorder %s171, %s173
      %p180 = scmp.eq.s32.totalorder %s27, 1
      %p181 = por %p179, %p180
      %p182 = scmp.ne.s32.totalorder %s173, %s174
      %p183 = scmp.eq.s32.totalorder %s27, 0
      %p184 = por %p182, %p183
      %p185 = scmp.ne.s32.totalorder %s173, %s174
      %p186 = scmp.eq.s32.totalorder %s28, 1
      %p187 = por %p185, %p186
      %p189 = scmp.ne.s32.totalorder %s174, %s188
      %p190 = scmp.eq.s32.totalorder %s28, 0
      %p191 = por %p189, %p190
      %s193 = sadd.s32 %s192, 1
      %p196 = scmp.eq.s32.totalorder %s22, 1
      %p197 = scmp.ne.s32.totalorder %s192, %s194
      %p198 = scmp.eq.s32.totalorder %s22, 0
      %p199 = por %p197, %p198
      %p200 = scmp.ne.s32.totalorder %s192, %s194
      %p201 = scmp.eq.s32.totalorder %s27, 1
      %p202 = por %p200, %p201
      %p203 = scmp.ne.s32.totalorder %s194, %s195
      %p204 = scmp.eq.s32.totalorder %s27, 0
      %p205 = por %p203, %p204
      %p206 = scmp.ne.s32.totalorder %s194, %s195
      %p207 = scmp.eq.s32.totalorder %s28, 1
      %p208 = por %p206, %p207
      %p210 = scmp.ne.s32.totalorder %s195, %s209
      %p211 = scmp.eq.s32.totalorder %s28, 0
      %p212 = por %p210, %p211
      %s214 = sadd.s32 %s213, 1
      %p217 = scmp.eq.s32.totalorder %s22, 1
      %p218 = scmp.ne.s32.totalorder %s213, %s215
      %p219 = scmp.eq.s32.totalorder %s22, 0
      %p220 = por %p218, %p219
      %p221 = scmp.ne.s32.totalorder %s213, %s215
      %p222 = scmp.eq.s32.totalorder %s27, 1
      %p223 = por %p221, %p222
      %p224 = scmp.ne.s32.totalorder %s215, %s216
      %p225 = scmp.eq.s32.totalorder %s27, 0
      %p226 = por %p224, %p225
      %p227 = scmp.ne.s32.totalorder %s215, %s216
      %p228 = scmp.eq.s32.totalorder %s28, 1
      %p229 = por %p227, %p228
      %p231 = scmp.ne.s32.totalorder %s216, %s230
      %p232 = scmp.eq.s32.totalorder %s28, 0
      %p233 = por %p231, %p232
      %s235 = sadd.s32 %s234, 1
      %p238 = scmp.eq.s32.totalorder %s22, 1
      %p239 = scmp.ne.s32.totalorder %s234, %s236
      %p240 = scmp.eq.s32.totalorder %s22, 0
      %p241 = por %p239, %p240
      %p242 = scmp.ne.s32.totalorder %s234, %s236
      %p243 = scmp.eq.s32.totalorder %s27, 1
      %p244 = por %p242, %p243
      %p245 = scmp.ne.s32.totalorder %s236, %s237
      %p246 = scmp.eq.s32.totalorder %s27, 0
      %p247 = por %p245, %p246
      %p248 = scmp.ne.s32.totalorder %s236, %s237
      %p249 = scmp.eq.s32.totalorder %s28, 1
      %p250 = por %p248, %p249
      %p252 = scmp.ne.s32.totalorder %s237, %s251
      %p253 = scmp.eq.s32.totalorder %s28, 0
      %p254 = por %p252, %p253
      %s256 = sadd.s32 %s255, 1
      %p259 = scmp.eq.s32.totalorder %s22, 1
      %p260 = scmp.ne.s32.totalorder %s255, %s257
      %p261 = scmp.eq.s32.totalorder %s22, 0
      %p262 = por %p260, %p261
      %p263 = scmp.ne.s32.totalorder %s255, %s257
      %p264 = scmp.eq.s32.totalorder %s27, 1
      %p265 = por %p263, %p264
      %p266 = scmp.ne.s32.totalorder %s257, %s258
      %p267 = scmp.eq.s32.totalorder %s27, 0
      %p268 = por %p266, %p267
      %p269 = scmp.ne.s32.totalorder %s257, %s258
      %p270 = scmp.eq.s32.totalorder %s28, 1
      %p271 = por %p269, %p270
      %p273 = scmp.ne.s32.totalorder %s258, %s272
      %p274 = scmp.eq.s32.totalorder %s28, 0
      %p275 = por %p273, %p274
      %s277 = sadd.s32 %s276, 1
      %p280 = scmp.eq.s32.totalorder %s22, 1
      %p281 = scmp.ne.s32.totalorder %s276, %s278
      %p282 = scmp.eq.s32.totalorder %s22, 0
      %p283 = por %p281, %p282
      %p284 = scmp.ne.s32.totalorder %s276, %s278
      %p285 = scmp.eq.s32.totalorder %s27, 1
      %p286 = por %p284, %p285
      %p287 = scmp.ne.s32.totalorder %s278, %s279
      %p288 = scmp.eq.s32.totalorder %s27, 0
      %p289 = por %p287, %p288
      %p290 = scmp.ne.s32.totalorder %s278, %s279
      %p291 = scmp.eq.s32.totalorder %s28, 1
      %p292 = por %p290, %p291
      %p294 = scmp.ne.s32.totalorder %s279, %s293
      %p295 = scmp.eq.s32.totalorder %s28, 0
      %p296 = por %p294, %p295
      %s298 = sadd.s32 %s297, 1
      %p301 = scmp.eq.s32.totalorder %s22, 1
      %p302 = scmp.ne.s32.totalorder %s297, %s299
      %p303 = scmp.eq.s32.totalorder %s22, 0
      %p304 = por %p302, %p303
      %p305 = scmp.ne.s32.totalorder %s297, %s299
      %p306 = scmp.eq.s32.totalorder %s27, 1
      %p307 = por %p305, %p306
      %p308 = scmp.ne.s32.totalorder %s299, %s300
      %p309 = scmp.eq.s32.totalorder %s27, 0
      %p310 = por %p308, %p309
      %p311 = scmp.ne.s32.totalorder %s299, %s300
      %p312 = scmp.eq.s32.totalorder %s28, 1
      %p313 = por %p311, %p312
      %p315 = scmp.ne.s32.totalorder %s300, %s314
      %p316 = scmp.eq.s32.totalorder %s28, 0
      %p317 = por %p315, %p316
      %s318 = ssub.s32 %s22, %s29
      %p319 = scmp.eq.s32.totalorder %s318, 0
      %s321 = sadd.s32 %s320, 1
      %s322 = scalar_select %p319, %s320, %s321
      %p325 = pneg %p319
      %p326 = scmp.eq.s32.totalorder %s22, 1
      %p327 = por %p325, %p326
      %p328 = scmp.ne.s32.totalorder %s320, %s323
      %p329 = scmp.eq.s32.totalorder %s22, 0
      %p330 = por %p328, %p329
      %p331 = scmp.ne.s32.totalorder %s320, %s323
      %p332 = scmp.eq.s32.totalorder %s27, 1
      %p333 = por %p331, %p332
      %p334 = scmp.ne.s32.totalorder %s323, %s324
      %p335 = scmp.eq.s32.totalorder %s27, 0
      %p336 = por %p334, %p335
      %p337 = scmp.ne.s32.totalorder %s323, %s324
      %p338 = scmp.eq.s32.totalorder %s28, 1
      %p339 = por %p337, %p338
      %p341 = scmp.ne.s32.totalorder %s324, %s340
      %p342 = scmp.eq.s32.totalorder %s28, 0
      %p343 = por %p341, %p342
      %p344 = scmp.le.s32.totalorder 1, %s22
      %p345 = scmp.lt.s32.totalorder %s22, 3
      %p346 = pnand %p344, %p345
      %p347 = pneg %p346
      // Predicated region
      $region9: #{ella_forward.9} parent=5 // pred_check
        _
      $region10: #{ella_forward.9} parent=5 // pred_check_branch
        %349 = sbr.rel (%p346) target = $region12
      $region11: #{ella_forward.9} parent=5 // pred_region
        %s350 = ssub.s32 %s22, 1
        // Predicated region
        $region13: #{ella_forward.9} parent=11 // pred_check
          %p351 = pneg %p121
        $region14: #{ella_forward.9} parent=11 // pred_check_branch
          %353 = sbr.rel (%p351) target = $region16
        $region15: #{ella_forward.9} parent=11 // pred_region
          _
        $region16: #{ella_forward.9} parent=11 // pred_fallthru
          _
        // Predicated region
        $region17: #{ella_forward.9} parent=11 // pred_check
          %p354 = pneg %p142
        $region18: #{ella_forward.9} parent=11 // pred_check_branch
          %356 = sbr.rel (%p354) target = $region20
        $region19: #{ella_forward.9} parent=11 // pred_region
          _
        $region20: #{ella_forward.9} parent=11 // pred_fallthru
          _
        // Predicated region
        $region21: #{ella_forward.9} parent=11 // pred_check
          %p357 = pneg %p163
        $region22: #{ella_forward.9} parent=11 // pred_check_branch
          %359 = sbr.rel (%p357) target = $region24
        $region23: #{ella_forward.9} parent=11 // pred_region
          _
        $region24: #{ella_forward.9} parent=11 // pred_fallthru
          _
        // Predicated region
        $region25: #{ella_forward.9} parent=11 // pred_check
          %p360 = pneg %p184
        $region26: #{ella_forward.9} parent=11 // pred_check_branch
          %362 = sbr.rel (%p360) target = $region28
        $region27: #{ella_forward.9} parent=11 // pred_region
          _
        $region28: #{ella_forward.9} parent=11 // pred_fallthru
          _
        // Predicated region
        $region29: #{ella_forward.9} parent=11 // pred_check
          %p363 = pneg %p205
        $region30: #{ella_forward.9} parent=11 // pred_check_branch
          %365 = sbr.rel (%p363) target = $region32
        $region31: #{ella_forward.9} parent=11 // pred_region
          _
        $region32: #{ella_forward.9} parent=11 // pred_fallthru
          _
        // Predicated region
        $region33: #{ella_forward.9} parent=11 // pred_check
          %p366 = pneg %p226
        $region34: #{ella_forward.9} parent=11 // pred_check_branch
          %368 = sbr.rel (%p366) target = $region36
        $region35: #{ella_forward.9} parent=11 // pred_region
          _
        $region36: #{ella_forward.9} parent=11 // pred_fallthru
          _
        // Predicated region
        $region37: #{ella_forward.9} parent=11 // pred_check
          %p369 = pneg %p247
        $region38: #{ella_forward.9} parent=11 // pred_check_branch
          %371 = sbr.rel (%p369) target = $region40
        $region39: #{ella_forward.9} parent=11 // pred_region
          _
        $region40: #{ella_forward.9} parent=11 // pred_fallthru
          _
        // Predicated region
        $region41: #{ella_forward.9} parent=11 // pred_check
          %p372 = pneg %p268
        $region42: #{ella_forward.9} parent=11 // pred_check_branch
          %374 = sbr.rel (%p372) target = $region44
        $region43: #{ella_forward.9} parent=11 // pred_region
          _
        $region44: #{ella_forward.9} parent=11 // pred_fallthru
          _
        // Predicated region
        $region45: #{ella_forward.9} parent=11 // pred_check
          %p375 = pneg %p289
        $region46: #{ella_forward.9} parent=11 // pred_check_branch
          %377 = sbr.rel (%p375) target = $region48
        $region47: #{ella_forward.9} parent=11 // pred_region
          _
        $region48: #{ella_forward.9} parent=11 // pred_fallthru
          _
        // Predicated region
        $region49: #{ella_forward.9} parent=11 // pred_check
          %p378 = pneg %p310
        $region50: #{ella_forward.9} parent=11 // pred_check_branch
          %380 = sbr.rel (%p378) target = $region52
        $region51: #{ella_forward.9} parent=11 // pred_region
          _
        $region52: #{ella_forward.9} parent=11 // pred_fallthru
          _
      $region12: #{ella_forward.9} parent=5 // pred_fallthru
        _
      %p381 = scmp.lt.s32.totalorder %s22, 2
      // Predicated region
      $region53: #{ella_forward.9} parent=5 // pred_check
        %p382 = pneg %p381
      $region54: #{ella_forward.9} parent=5 // pred_check_branch
        %384 = sbr.rel (%p382) target = $region56
      $region55: #{ella_forward.9} parent=5 // pred_region
        // Predicated region
        $region57: #{ella_forward.9} parent=55 // pred_check
          %p385 = pneg %p42
        $region58: #{ella_forward.9} parent=55 // pred_check_branch
          %387 = sbr.rel (%p385) target = $region60
        $region59: #{ella_forward.9} parent=55 // pred_region
          %p388 = scmp.lt.s32.totalorder %s22, 1
          %s389 = scalar_select %p388, %s22, 1
          %s390 = smul.addr %s389, 8
          %s391 = scalar_lea.vmem %s0, %s390
        $region60: #{ella_forward.9} parent=55 // pred_fallthru
          _
        // Predicated region
        $region61: #{ella_forward.9} parent=55 // pred_check
          %p392 = pneg %p68
        $region62: #{ella_forward.9} parent=55 // pred_check_branch
          %394 = sbr.rel (%p392) target = $region64
        $region63: #{ella_forward.9} parent=55 // pred_region
          %p395 = scmp.lt.s32.totalorder %s22, 1
          %s396 = scalar_select %p395, %s22, 1
          %s397 = smul.addr %s396, 8
          %s398 = scalar_lea.vmem %s1, %s397
        $region64: #{ella_forward.9} parent=55 // pred_fallthru
          _
        // Predicated region
        $region65: #{ella_forward.9} parent=55 // pred_check
          %p399 = pneg %p94
        $region66: #{ella_forward.9} parent=55 // pred_check_branch
          %401 = sbr.rel (%p399) target = $region68
        $region67: #{ella_forward.9} parent=55 // pred_region
          %p402 = scmp.lt.s32.totalorder %s22, 1
          %s403 = scalar_select %p402, %s22, 1
          %s404 = smul.addr %s403, 8
          %s405 = scalar_lea.vmem %s2, %s404
        $region68: #{ella_forward.9} parent=55 // pred_fallthru
          _
      $region56: #{ella_forward.9} parent=5 // pred_fallthru
        _
      %p406 = scmp.le.s32.totalorder 1, %s22
      %p407 = scmp.lt.s32.totalorder %s22, 3
      %p408 = pnand %p406, %p407
      %p409 = pneg %p408
      // Predicated region
      $region69: #{ella_forward.9} parent=5 // pred_check
        _
      $region70: #{ella_forward.9} parent=5 // pred_check_branch
        %411 = sbr.rel (%p408) target = $region72
      $region71: #{ella_forward.9} parent=5 // pred_region
        %s412 = ssub.s32 %s22, 1
        %p413 = scmp.lt.s32.totalorder %s27, 1
        %s414 = scalar_select %p413, %s27, 1
        %s415 = smul.addr %s414, 8
        %s416 = scalar_lea.vmem %s0, %s415
        %p417 = pneg %p48
        %p418 = pneg %p45
        %p419 = scmp.lt.s32.totalorder %s27, 1
        %s420 = scalar_select %p419, %s27, 1
        %s421 = smul.addr %s420, 8
        %s422 = scalar_lea.vmem %s1, %s421
        %p423 = pneg %p74
        %p424 = pneg %p71
        %p425 = scmp.lt.s32.totalorder %s27, 1
        %s426 = scalar_select %p425, %s27, 1
        %s427 = smul.addr %s426, 8
        %s428 = scalar_lea.vmem %s2, %s427
        %p429 = pneg %p100
        %p430 = pneg %p97
        %p431 = pneg %p121
        %p432 = pneg %p118
        %p433 = pneg %p142
        %p434 = pneg %p139
        %p435 = pneg %p163
        %p436 = pneg %p160
        %p437 = pneg %p184
        %p438 = pneg %p181
        %p439 = pneg %p205
        %p440 = pneg %p202
        %p441 = pneg %p226
        %p442 = pneg %p223
        %p443 = pneg %p247
        %p444 = pneg %p244
        %p445 = pneg %p268
        %p446 = pneg %p265
        %p447 = pneg %p289
        %p448 = pneg %p286
        %p449 = pneg %p310
        %p450 = pneg %p307
        %p451 = pneg %p336
        %p452 = pneg %p333
        %s453 = sand.u32 %s323, 1
        %s454 = scalar_lea.sflag [#allocation4], %s453
        %s455 = sand.u32 %s323, 1
        %s456 = smul.addr %s455, 8
        %s457 = scalar_lea.vmem [#allocation3], %s456
        %p458 = scmp.lt.s32.totalorder %s27, 1
        %s459 = scalar_select %p458, %s27, 1
        %s460 = smul.addr %s459, 8
        %s461 = scalar_lea.vmem %s0, %s460
        %p462 = scmp.lt.s32.totalorder %s27, 1
        %s463 = scalar_select %p462, %s27, 1
        %s464 = smul.addr %s463, 8
        %s465 = scalar_lea.vmem %s1, %s464
        %p466 = scmp.lt.s32.totalorder %s27, 1
        %s467 = scalar_select %p466, %s27, 1
        %s468 = smul.addr %s467, 8
        %s469 = scalar_lea.vmem %s2, %s468
        %v471 = vld [vmem:[%s469] sm:$0xff]
        %v472 = vld [vmem:[%s465] sm:$0xff]
        %v473 = vld [vmem:[%s461] sm:$0x3f]
        %vm474 = vcmask 523264
        %v475 = vsel %vm474, %v471, 0.0
        %476 = vadd.xlane.f32.xlu0 %v475
        %v477 = vpop.xlane.xlu0 %476
        %v478 = vrcp.pop 64.0
        %v479 = vmul.f32 64.0, %v478
        %v480 = vsub.f32 1.0, %v479
        %v481 = vmul.f32 %v478, %v480
        %v482 = vadd.f32 %v478, %v481
        %vm483 = vweird.f32 %v478
        %v484 = vsel %vm483, %v478, %v482
        %v485 = vmul.f32 %v477, %v484
        %v486 = vsub.f32 %v471, %v485
        %v487 = vmul.f32 %v486, %v486
        %v488 = vsel %vm474, %v487, 0.0
        %489 = vadd.xlane.f32.xlu0 %v488
        %v490 = vpop.xlane.xlu0 %489
        %v491 = vmul.f32 %v490, %v484
        %v492 = vadd.f32 %v491, 1e-06
        %v493 = vrsqrt.pop %v492
        %v494 = vmul.f32 %v493, %v492
        %v495 = vmul.f32 %v494, %v493
        %v496 = vmul.f32 0.5, %v495
        %v497 = vsub.f32 1.5, %v496
        %v498 = vmul.f32 %v493, %v497
        %vm499 = vweird.f32 %v492
        %vm500 = vweird.f32 %v493
        %vm501 = vmor %vm499, %vm500
        %v502 = vsel %vm501, %v493, %v498
        %v503 = vmul.f32 %v486, %v502
        %v504 = vadd.f32 %v473, 1.0
        %v505 = vperm.slane %v504, 1
        %v506 = vmul.f32 %v503, %v505
        %v507 = vperm.slane %v473, 0
        %v508 = vadd.f32 %v506, %v507
        %v509 = vpack.c.bf16 %v508, %v508
        %v510 = vld [vmem:[%s3] sm:$0xff]
        %v511 = vld [vmem:[%s3 + $0x8] sm:$0xff]
        %v512 = vld [vmem:[%s3 + $0x10] sm:$0xff]
        %v513 = vld [vmem:[%s3 + $0x18] sm:$0xff]
        %v514 = vld [vmem:[%s3 + $0x20] sm:$0xff]
        %v515 = vld [vmem:[%s3 + $0x28] sm:$0xff]
        %v516 = vld [vmem:[%s3 + $0x30] sm:$0xff]
        %v517 = vld [vmem:[%s3 + $0x38] sm:$0xff]
        %v518 = vld [vmem:[%s4] sm:$0x3]
        %v520 = vperm.slane %v518, 0
        %v521 = vperm.slane %v518, 1
        %v532 = vunpack.c.l.b16 %v510
        %v533 = vunpack.c.h.b16 %v510
        %v534 = vunpack.c.l.b16 %v511
        %v535 = vunpack.c.h.b16 %v511
        %v536 = vunpack.c.l.b16 %v512
        %v537 = vunpack.c.h.b16 %v512
        %v538 = vunpack.c.l.b16 %v513
        %v539 = vunpack.c.h.b16 %v513
        %v540 = vunpack.c.l.b16 %v514
        %v541 = vunpack.c.h.b16 %v514
        %v542 = vunpack.c.l.b16 %v515
        %v543 = vunpack.c.h.b16 %v515
        %v544 = vunpack.c.l.b16 %v516
        %v545 = vunpack.c.h.b16 %v516
        %v546 = vunpack.c.l.b16 %v517
        %v547 = vunpack.c.h.b16 %v517
        %v548 = vpack.c.b16 %v534, %v532
        %v549 = vpack.c.b16 %v535, %v533
        %v550 = vpack.c.b16 %v538, %v536
        %v551 = vpack.c.b16 %v539, %v537
        %v552 = vpack.c.b16 %v542, %v540
        %v553 = vpack.c.b16 %v543, %v541
        %v554 = vpack.c.b16 %v546, %v544
        %v555 = vpack.c.b16 %v547, %v545
        %v565 = vsel %vm474, %v509, 0
        %567 = vmatpush.bf16.msra.mxu0 0
        %568 = vmatpush.bf16.msra.mxu0 0
        %569 = vmatpush.bf16.msra.mxu0 0
        %570 = vmatpush.bf16.msra.mxu0 0
        %571 = vmatpush.bf16.msra.mxu0 %v554
        %572 = vmatpush.bf16.msra.mxu0 %v552
        %573 = vmatpush.bf16.msra.mxu0 %v550
        %574 = vmatpush.bf16.msra.mxu0 %v548
        %575 = vmatmul.bf16.gmra.mxu0 %v565
        %v576 = vpop.f32.mrf.mxu0
        %v577 = vadd.f32 %v520, %v576
        %v578 = vpop.f32.mrf.mxu0
        %579 = vdwg.mxu0
        %580 = vmatpush.bf16.msra.mxu0 0
        %581 = vmatpush.bf16.msra.mxu0 0
        %582 = vmatpush.bf16.msra.mxu0 0
        %583 = vmatpush.bf16.msra.mxu0 0
        %584 = vmatpush.bf16.msra.mxu0 %v555
        %585 = vmatpush.bf16.msra.mxu0 %v553
        %586 = vmatpush.bf16.msra.mxu0 %v551
        %587 = vmatpush.bf16.msra.mxu0 %v549
        %588 = vmatmul.bf16.gmra.mxu0 %v565
        %v589 = vpop.f32.mrf.mxu0
        %v590 = vadd.f32 %v521, %v589
        %v591 = vpop.f32.mrf.mxu0
        %592 = vdwg.mxu0
        %v593 = vsel %vm474, %v472, 0.0
        %594 = vadd.xlane.f32.xlu0 %v593
        %v595 = vpop.xlane.xlu0 %594
        %v596 = vmul.f32 %v595, %v484
        %v597 = vsub.f32 %v472, %v596
        %v598 = vmul.f32 %v597, %v597
        %v599 = vsel %vm474, %v598, 0.0
        %600 = vadd.xlane.f32.xlu0 %v599
        %v601 = vpop.xlane.xlu0 %600
        %v602 = vmul.f32 %v601, %v484
        %v603 = vadd.f32 %v602, 1e-06
        %v604 = vrsqrt.pop %v603
        %v605 = vmul.f32 %v604, %v603
        %v606 = vmul.f32 %v605, %v604
        %v607 = vmul.f32 0.5, %v606
        %v608 = vsub.f32 1.5, %v607
        %v609 = vmul.f32 %v604, %v608
        %vm610 = vweird.f32 %v603
        %vm611 = vweird.f32 %v604
        %vm612 = vmor %vm610, %vm611
        %v613 = vsel %vm612, %v604, %v609
        %v614 = vmul.f32 %v597, %v613
        %v615 = vperm.slane %v504, 3
        %v616 = vmul.f32 %v614, %v615
        %v617 = vperm.slane %v473, 2
        %v618 = vadd.f32 %v616, %v617
        %v619 = vpack.c.bf16 %v618, %v618
        %v620 = vld [vmem:[%s5] sm:$0xf]
        %v621 = vld [vmem:[%s5 + $0x4] sm:$0xf]
        %v622 = vld [vmem:[%s5 + $0x8] sm:$0xf]
        %v623 = vld [vmem:[%s5 + $0xc] sm:$0xf]
        %v624 = vld [vmem:[%s5 + $0x10] sm:$0xf]
        %v625 = vld [vmem:[%s5 + $0x14] sm:$0xf]
        %v626 = vld [vmem:[%s5 + $0x18] sm:$0xf]
        %v627 = vld [vmem:[%s5 + $0x1c] sm:$0xf]
        %v628 = vld [vmem:[%s6] sm:$0x1]
        %v630 = vperm.slane %v628, 0
        %v640 = vunpack.c.l.b16 %v620
        %v641 = vunpack.c.l.b16 %v621
        %v642 = vunpack.c.l.b16 %v622
        %v643 = vunpack.c.l.b16 %v623
        %v644 = vunpack.c.l.b16 %v624
        %v645 = vunpack.c.l.b16 %v625
        %v646 = vunpack.c.l.b16 %v626
        %v647 = vunpack.c.l.b16 %v627
        %v648 = vpack.c.b16 %v641, %v640
        %v649 = vpack.c.b16 %v643, %v642
        %v650 = vpack.c.b16 %v645, %v644
        %v651 = vpack.c.b16 %v647, %v646
        %v657 = vsel %vm474, %v619, 0
        %659 = vmatpush.bf16.msra.mxu0 0
        %660 = vmatpush.bf16.msra.mxu0 0
        %661 = vmatpush.bf16.msra.mxu0 0
        %662 = vmatpush.bf16.msra.mxu0 0
        %663 = vmatpush.bf16.msra.mxu0 %v651
        %664 = vmatpush.bf16.msra.mxu0 %v650
        %665 = vmatpush.bf16.msra.mxu0 %v649
        %666 = vmatpush.bf16.msra.mxu0 %v648
        %667 = vmatmul.bf16.gmra.mxu0 %v657
        %v668 = vpop.f32.mrf.mxu0
        %v669 = vadd.f32 %v630, %v668
        %v670 = vpop.f32.mrf.mxu0
        %671 = vdwg.mxu0
        %v672 = vpack.c.bf16 %v577, %v577
        %674 = vrot.lane.b32.xlu0 %v669, 64
        %v675 = vpop.permute.xlu0 %674
        %v677 = vpack.c.bf16 %v675, %v675
        %v678 = vpack.c.bf16 %v590, %v590
        %v679 = vld [vmem:[%s7] sm:$0xf]
        %v680 = vld [vmem:[%s7 + $0x4] sm:$0xf]
        %v681 = vld [vmem:[%s7 + $0x8] sm:$0xf]
        %v682 = vld [vmem:[%s7 + $0xc] sm:$0xf]
        %v683 = vld [vmem:[%s7 + $0x10] sm:$0xf]
        %v684 = vld [vmem:[%s7 + $0x14] sm:$0xf]
        %v685 = vld [vmem:[%s7 + $0x18] sm:$0xf]
        %v686 = vld [vmem:[%s7 + $0x1c] sm:$0xf]
        %687 = vst.msk [vmem:[#allocation2] sm:$0xff] %vm474, 0.0
        %v690 = vunpack.c.l.b16 %v672
        %v691 = vunpack.c.l.b16 %v677
        %v692 = vpack.c.b16 %v691, %v690
        %693 = vrot.lane.b32.xlu0 %v692, 64
        %v694 = vpop.permute.xlu0 %693
        %vm695 = vcmask 130048
        %v697 = vsel %vm695, %v672, 0
        %v700 = vsel %vm695, %v694, 0
        %702 = vmatpush.bf16.xpose.msra.mxu0 0
        %703 = vmatpush.bf16.xpose.msra.mxu0 0
        %704 = vmatpush.bf16.xpose.msra.mxu0 0
        %705 = vmatpush.bf16.xpose.msra.mxu0 0
        %706 = vmatpush.bf16.xpose.msra.mxu0 0
        %707 = vmatpush.bf16.xpose.msra.mxu0 0
        %708 = vmatpush.bf16.xpose.msra.mxu0 0
        %709 = vmatpush.bf16.xpose.msra.mxu0 %v700
        %710 = vmatmul.bf16.gmra.mxu0 %v697
        %v711 = vpop.f32.mrf.mxu0
        %v712 = vadd.f32 0.0, %v711
        %v713 = vpop.f32.mrf.mxu0
        %714 = vdwg.mxu0
        %v715 = vmul.f32 %v712, 0.25
        %v716 = vsel %vm695, %v715, -inf
        %717 = vmax.xlane.f32.xlu0 %v716
        %v718 = vpop.xlane.xlu0 %717
        %v719 = vsub.f32 %v715, %v718
        %v720 = vmul.f32 %v719, 1.442695
        %v721 = vpow.pop %v720
        %v722 = vsel %vm695, %v721, 0.0
        %723 = vadd.xlane.f32.xlu0 %v722
        %v724 = vpop.xlane.xlu0 %723
        %v725 = vrcp.pop %v724
        %v726 = vmul.f32 %v721, %v725
        %v727 = vpack.c.bf16 %v726, %v726
        %v729 = vunpack.c.l.b16 %v678
        %v730 = vpack.c.b16 %v691, %v729
        %v733 = vsel %vm695, %v727, 0
        %735 = vmatpush.bf16.msra.mxu0 0
        %736 = vmatpush.bf16.msra.mxu0 0
        %737 = vmatpush.bf16.msra.mxu0 0
        %738 = vmatpush.bf16.msra.mxu0 0
        %739 = vmatpush.bf16.msra.mxu0 0
        %740 = vmatpush.bf16.msra.mxu0 0
        %741 = vmatpush.bf16.msra.mxu0 0
        %742 = vmatpush.bf16.msra.mxu0 %v730
        %743 = vmatmul.bf16.gmra.mxu0 %v733
        %v744 = vpop.f32.mrf.mxu0
        %v745 = vadd.f32 0.0, %v744
        %v746 = vpop.f32.mrf.mxu0
        %747 = vdwg.mxu0
        %v748 = vld [vmem:[#allocation2] sm:$0xff]
        %v749 = vpack.c.bf16 %v745, %v745
        %v752 = vunpack.c.l.b16 %v679
        %v753 = vunpack.c.l.b16 %v680
        %v754 = vpack.c.b16 %v753, %v752
        %v757 = vsel %vm695, %v749, 0
        %759 = vmatpush.bf16.msra.mxu0 0
        %760 = vmatpush.bf16.msra.mxu0 0
        %761 = vmatpush.bf16.msra.mxu0 0
        %762 = vmatpush.bf16.msra.mxu0 0
        %763 = vmatpush.bf16.msra.mxu0 0
        %764 = vmatpush.bf16.msra.mxu0 0
        %765 = vmatpush.bf16.msra.mxu0 0
        %766 = vmatpush.bf16.msra.mxu0 %v754
        %767 = vmatmul.bf16.gmra.mxu0 %v757
        %v768 = vpop.f32.mrf.mxu0
        %v769 = vadd.f32 0.0, %v768
        %v770 = vpop.f32.mrf.mxu0
        %771 = vdwg.mxu0
        %v772 = vadd.f32 %v748, %v769
        %773 = vst.msk [vmem:[#allocation2] sm:$0xff] %vm474, %v772
        %v774 = vpack.c.b16 %v690, %v690
        %775 = vrot.lane.b32.xlu0 %v774, 112
        %v776 = vpop.permute.xlu0 %775
        %777 = vrot.lane.b32.xlu0 %v692, 48
        %v778 = vpop.permute.xlu0 %777
        %v780 = vsel %vm695, %v776, 0
        %v783 = vsel %vm695, %v778, 0
        %785 = vmatpush.bf16.xpose.msra.mxu0 0
        %786 = vmatpush.bf16.xpose.msra.mxu0 0
        %787 = vmatpush.bf16.xpose.msra.mxu0 0
        %788 = vmatpush.bf16.xpose.msra.mxu0 0
        %789 = vmatpush.bf16.xpose.msra.mxu0 0
        %790 = vmatpush.bf16.xpose.msra.mxu0 0
        %791 = vmatpush.bf16.xpose.msra.mxu0 0
        %792 = vmatpush.bf16.xpose.msra.mxu0 %v783
        %793 = vmatmul.bf16.gmra.mxu0 %v780
        %v794 = vpop.f32.mrf.mxu0
        %v795 = vadd.f32 0.0, %v794
        %v796 = vpop.f32.mrf.mxu0
        %797 = vdwg.mxu0
        %v798 = vmul.f32 %v795, 0.25
        %v799 = vsel %vm695, %v798, -inf
        %800 = vmax.xlane.f32.xlu0 %v799
        %v801 = vpop.xlane.xlu0 %800
        %v802 = vsub.f32 %v798, %v801
        %v803 = vmul.f32 %v802, 1.442695
        %v804 = vpow.pop %v803
        %v805 = vsel %vm695, %v804, 0.0
        %806 = vadd.xlane.f32.xlu0 %v805
        %v807 = vpop.xlane.xlu0 %806
        %v808 = vrcp.pop %v807
        %v809 = vmul.f32 %v804, %v808
        %v810 = vpack.c.bf16 %v809, %v809
        %811 = vrot.lane.b32.xlu0 %v730, 112
        %v812 = vpop.permute.xlu0 %811
        %v815 = vsel %vm695, %v810, 0
        %817 = vmatpush.bf16.msra.mxu0 0
        %818 = vmatpush.bf16.msra.mxu0 0
        %819 = vmatpush.bf16.msra.mxu0 0
        %820 = vmatpush.bf16.msra.mxu0 0
        %821 = vmatpush.bf16.msra.mxu0 0
        %822 = vmatpush.bf16.msra.mxu0 0
        %823 = vmatpush.bf16.msra.mxu0 0
        %824 = vmatpush.bf16.msra.mxu0 %v812
        %825 = vmatmul.bf16.gmra.mxu0 %v815
        %v826 = vpop.f32.mrf.mxu0
        %v827 = vadd.f32 0.0, %v826
        %v828 = vpop.f32.mrf.mxu0
        %829 = vdwg.mxu0
        %v830 = vld [vmem:[#allocation2] sm:$0xff]
        %v831 = vpack.c.bf16 %v827, %v827
        %v834 = vunpack.c.l.b16 %v681
        %v835 = vunpack.c.l.b16 %v682
        %v836 = vpack.c.b16 %v835, %v834
        %v839 = vsel %vm695, %v831, 0
        %841 = vmatpush.bf16.msra.mxu0 0
        %842 = vmatpush.bf16.msra.mxu0 0
        %843 = vmatpush.bf16.msra.mxu0 0
        %844 = vmatpush.bf16.msra.mxu0 0
        %845 = vmatpush.bf16.msra.mxu0 0
        %846 = vmatpush.bf16.msra.mxu0 0
        %847 = vmatpush.bf16.msra.mxu0 0
        %848 = vmatpush.bf16.msra.mxu0 %v836
        %849 = vmatmul.bf16.gmra.mxu0 %v839
        %v850 = vpop.f32.mrf.mxu0
        %v851 = vadd.f32 0.0, %v850
        %v852 = vpop.f32.mrf.mxu0
        %853 = vdwg.mxu0
        %v854 = vadd.f32 %v830, %v851
        %855 = vst.msk [vmem:[#allocation2] sm:$0xff] %vm474, %v854
        %856 = vrot.lane.b32.xlu0 %v774, 96
        %v857 = vpop.permute.xlu0 %856
        %858 = vrot.lane.b32.xlu0 %v692, 32
        %v859 = vpop.permute.xlu0 %858
        %v861 = vsel %vm695, %v857, 0
        %v864 = vsel %vm695, %v859, 0
        %866 = vmatpush.bf16.xpose.msra.mxu0 0
        %867 = vmatpush.bf16.xpose.msra.mxu0 0
        %868 = vmatpush.bf16.xpose.msra.mxu0 0
        %869 = vmatpush.bf16.xpose.msra.mxu0 0
        %870 = vmatpush.bf16.xpose.msra.mxu0 0
        %871 = vmatpush.bf16.xpose.msra.mxu0 0
        %872 = vmatpush.bf16.xpose.msra.mxu0 0
        %873 = vmatpush.bf16.xpose.msra.mxu0 %v864
        %874 = vmatmul.bf16.gmra.mxu0 %v861
        %v875 = vpop.f32.mrf.mxu0
        %v876 = vadd.f32 0.0, %v875
        %v877 = vpop.f32.mrf.mxu0
        %878 = vdwg.mxu0
        %v879 = vmul.f32 %v876, 0.25
        %v880 = vsel %vm695, %v879, -inf
        %881 = vmax.xlane.f32.xlu0 %v880
        %v882 = vpop.xlane.xlu0 %881
        %v883 = vsub.f32 %v879, %v882
        %v884 = vmul.f32 %v883, 1.442695
        %v885 = vpow.pop %v884
        %v886 = vsel %vm695, %v885, 0.0
        %887 = vadd.xlane.f32.xlu0 %v886
        %v888 = vpop.xlane.xlu0 %887
        %v889 = vrcp.pop %v888
        %v890 = vmul.f32 %v885, %v889
        %v891 = vpack.c.bf16 %v890, %v890
        %892 = vrot.lane.b32.xlu0 %v730, 96
        %v893 = vpop.permute.xlu0 %892
        %v896 = vsel %vm695, %v891, 0
        %898 = vmatpush.bf16.msra.mxu0 0
        %899 = vmatpush.bf16.msra.mxu0 0
        %900 = vmatpush.bf16.msra.mxu0 0
        %901 = vmatpush.bf16.msra.mxu0 0
        %902 = vmatpush.bf16.msra.mxu0 0
        %903 = vmatpush.bf16.msra.mxu0 0
        %904 = vmatpush.bf16.msra.mxu0 0
        %905 = vmatpush.bf16.msra.mxu0 %v893
        %906 = vmatmul.bf16.gmra.mxu0 %v896
        %v907 = vpop.f32.mrf.mxu0
        %v908 = vadd.f32 0.0, %v907
        %v909 = vpop.f32.mrf.mxu0
        %910 = vdwg.mxu0
        %v911 = vld [vmem:[#allocation2] sm:$0xff]
        %v912 = vpack.c.bf16 %v908, %v908
        %v915 = vunpack.c.l.b16 %v683
        %v916 = vunpack.c.l.b16 %v684
        %v917 = vpack.c.b16 %v916, %v915
        %v920 = vsel %vm695, %v912, 0
        %922 = vmatpush.bf16.msra.mxu0 0
        %923 = vmatpush.bf16.msra.mxu0 0
        %924 = vmatpush.bf16.msra.mxu0 0
        %925 = vmatpush.bf16.msra.mxu0 0
        %926 = vmatpush.bf16.msra.mxu0 0
        %927 = vmatpush.bf16.msra.mxu0 0
        %928 = vmatpush.bf16.msra.mxu0 0
        %929 = vmatpush.bf16.msra.mxu0 %v917
        %930 = vmatmul.bf16.gmra.mxu0 %v920
        %v931 = vpop.f32.mrf.mxu0
        %v932 = vadd.f32 0.0, %v931
        %v933 = vpop.f32.mrf.mxu0
        %934 = vdwg.mxu0
        %v935 = vadd.f32 %v911, %v932
        %936 = vst.msk [vmem:[#allocation2] sm:$0xff] %vm474, %v935
        %937 = vrot.lane.b32.xlu0 %v774, 80
        %v938 = vpop.permute.xlu0 %937
        %939 = vrot.lane.b32.xlu0 %v692, 16
        %v940 = vpop.permute.xlu0 %939
        %v942 = vsel %vm695, %v938, 0
        %v945 = vsel %vm695, %v940, 0
        %947 = vmatpush.bf16.xpose.msra.mxu0 0
        %948 = vmatpush.bf16.xpose.msra.mxu0 0
        %949 = vmatpush.bf16.xpose.msra.mxu0 0
        %950 = vmatpush.bf16.xpose.msra.mxu0 0
        %951 = vmatpush.bf16.xpose.msra.mxu0 0
        %952 = vmatpush.bf16.xpose.msra.mxu0 0
        %953 = vmatpush.bf16.xpose.msra.mxu0 0
        %954 = vmatpush.bf16.xpose.msra.mxu0 %v945
        %955 = vmatmul.bf16.gmra.mxu0 %v942
        %v956 = vpop.f32.mrf.mxu0
        %v957 = vadd.f32 0.0, %v956
        %v958 = vpop.f32.mrf.mxu0
        %959 = vdwg.mxu0
        %v960 = vmul.f32 %v957, 0.25
        %v961 = vsel %vm695, %v960, -inf
        %962 = vmax.xlane.f32.xlu0 %v961
        %v963 = vpop.xlane.xlu0 %962
        %v964 = vsub.f32 %v960, %v963
        %v965 = vmul.f32 %v964, 1.442695
        %v966 = vpow.pop %v965
        %v967 = vsel %vm695, %v966, 0.0
        %968 = vadd.xlane.f32.xlu0 %v967
        %v969 = vpop.xlane.xlu0 %968
        %v970 = vrcp.pop %v969
        %v971 = vmul.f32 %v966, %v970
        %v972 = vpack.c.bf16 %v971, %v971
        %973 = vrot.lane.b32.xlu0 %v730, 80
        %v974 = vpop.permute.xlu0 %973
        %v977 = vsel %vm695, %v972, 0
        %979 = vmatpush.bf16.msra.mxu0 0
        %980 = vmatpush.bf16.msra.mxu0 0
        %981 = vmatpush.bf16.msra.mxu0 0
        %982 = vmatpush.bf16.msra.mxu0 0
        %983 = vmatpush.bf16.msra.mxu0 0
        %984 = vmatpush.bf16.msra.mxu0 0
        %985 = vmatpush.bf16.msra.mxu0 0
        %986 = vmatpush.bf16.msra.mxu0 %v974
        %987 = vmatmul.bf16.gmra.mxu0 %v977
        %v988 = vpop.f32.mrf.mxu0
        %v989 = vadd.f32 0.0, %v988
        %v990 = vpop.f32.mrf.mxu0
        %991 = vdwg.mxu0
        %v992 = vld [vmem:[#allocation2] sm:$0xff]
        %v993 = vpack.c.bf16 %v989, %v989
        %v996 = vunpack.c.l.b16 %v685
        %v997 = vunpack.c.l.b16 %v686
        %v998 = vpack.c.b16 %v997, %v996
        %v1001 = vsel %vm695, %v993, 0
        %1003 = vmatpush.bf16.msra.mxu0 0
        %1004 = vmatpush.bf16.msra.mxu0 0
        %1005 = vmatpush.bf16.msra.mxu0 0
        %1006 = vmatpush.bf16.msra.mxu0 0
        %1007 = vmatpush.bf16.msra.mxu0 0
        %1008 = vmatpush.bf16.msra.mxu0 0
        %1009 = vmatpush.bf16.msra.mxu0 0
        %1010 = vmatpush.bf16.msra.mxu0 %v998
        %1011 = vmatmul.bf16.gmra.mxu0 %v1001
        %v1012 = vpop.f32.mrf.mxu0
        %v1013 = vadd.f32 0.0, %v1012
        %v1014 = vpop.f32.mrf.mxu0
        %1015 = vdwg.mxu0
        %v1016 = vadd.f32 %v992, %v1013
        %1017 = vst.msk [vmem:[#allocation2] sm:$0xff] %vm474, %v1016
        %v1018 = vld [vmem:[#allocation2] sm:$0xff]
        %v1019 = vadd.f32 %v471, %v1018
        %v1020 = vld [vmem:[%s8] sm:$0x1]
        %v1022 = vperm.slane %v1020, 0
        %v1024 = vadd.f32 %v1019, %v1022
        %v1025 = vsel %vm474, %v1024, 0.0
        %1026 = vadd.xlane.f32.xlu0 %v1025
        %v1027 = vpop.xlane.xlu0 %1026
        %v1028 = vmul.f32 %v1027, %v484
        %v1029 = vsub.f32 %v1024, %v1028
        %v1030 = vmul.f32 %v1029, %v1029
        %v1031 = vsel %vm474, %v1030, 0.0
        %1032 = vadd.xlane.f32.xlu0 %v1031
        %v1033 = vpop.xlane.xlu0 %1032
        %v1034 = vmul.f32 %v1033, %v484
        %v1035 = vadd.f32 %v1034, 1e-06
        %v1036 = vrsqrt.pop %v1035
        %v1037 = vmul.f32 %v1036, %v1035
        %v1038 = vmul.f32 %v1037, %v1036
        %v1039 = vmul.f32 0.5, %v1038
        %v1040 = vsub.f32 1.5, %v1039
        %v1041 = vmul.f32 %v1036, %v1040
        %vm1042 = vweird.f32 %v1035
        %vm1043 = vweird.f32 %v1036
        %vm1044 = vmor %vm1042, %vm1043
        %v1045 = vsel %vm1044, %v1036, %v1041
        %v1046 = vmul.f32 %v1029, %v1045
        %v1047 = vperm.slane %v504, 5
        %v1048 = vmul.f32 %v1046, %v1047
        %v1049 = vperm.slane %v473, 4
        %v1050 = vadd.f32 %v1048, %v1049
        %v1051 = vpack.c.bf16 %v1050, %v1050
        %v1052 = vld [vmem:[%s9] sm:$0xff]
        %v1053 = vld [vmem:[%s9 + $0x8] sm:$0xff]
        %v1054 = vld [vmem:[%s9 + $0x10] sm:$0xff]
        %v1055 = vld [vmem:[%s9 + $0x18] sm:$0xff]
        %v1056 = vld [vmem:[%s9 + $0x20] sm:$0xff]
        %v1057 = vld [vmem:[%s9 + $0x28] sm:$0xff]
        %v1058 = vld [vmem:[%s9 + $0x30] sm:$0xff]
        %v1059 = vld [vmem:[%s9 + $0x38] sm:$0xff]
        %v1060 = vld [vmem:[%s10] sm:$0x3]
        %v1062 = vperm.slane %v1060, 0
        %v1063 = vperm.slane %v1060, 1
        %v1074 = vunpack.c.l.b16 %v1052
        %v1075 = vunpack.c.h.b16 %v1052
        %v1076 = vunpack.c.l.b16 %v1053
        %v1077 = vunpack.c.h.b16 %v1053
        %v1078 = vunpack.c.l.b16 %v1054
        %v1079 = vunpack.c.h.b16 %v1054
        %v1080 = vunpack.c.l.b16 %v1055
        %v1081 = vunpack.c.h.b16 %v1055
        %v1082 = vunpack.c.l.b16 %v1056
        %v1083 = vunpack.c.h.b16 %v1056
        %v1084 = vunpack.c.l.b16 %v1057
        %v1085 = vunpack.c.h.b16 %v1057
        %v1086 = vunpack.c.l.b16 %v1058
        %v1087 = vunpack.c.h.b16 %v1058
        %v1088 = vunpack.c.l.b16 %v1059
        %v1089 = vunpack.c.h.b16 %v1059
        %v1090 = vpack.c.b16 %v1076, %v1074
        %v1091 = vpack.c.b16 %v1077, %v1075
        %v1092 = vpack.c.b16 %v1080, %v1078
        %v1093 = vpack.c.b16 %v1081, %v1079
        %v1094 = vpack.c.b16 %v1084, %v1082
        %v1095 = vpack.c.b16 %v1085, %v1083
        %v1096 = vpack.c.b16 %v1088, %v1086
        %v1097 = vpack.c.b16 %v1089, %v1087
        %v1107 = vsel %vm474, %v1051, 0
        %1109 = vmatpush.bf16.msra.mxu0 0
        %1110 = vmatpush.bf16.msra.mxu0 0
        %1111 = vmatpush.bf16.msra.mxu0 0
        %1112 = vmatpush.bf16.msra.mxu0 0
        %1113 = vmatpush.bf16.msra.mxu0 %v1096
        %1114 = vmatpush.bf16.msra.mxu0 %v1094
        %1115 = vmatpush.bf16.msra.mxu0 %v1092
        %1116 = vmatpush.bf16.msra.mxu0 %v1090
        %1117 = vmatmul.bf16.gmra.mxu0 %v1107
        %v1118 = vpop.f32.mrf.mxu0
        %v1119 = vadd.f32 %v1062, %v1118
        %v1120 = vpop.f32.mrf.mxu0
        %1121 = vdwg.mxu0
        %1122 = vmatpush.bf16.msra.mxu0 0
        %1123 = vmatpush.bf16.msra.mxu0 0
        %1124 = vmatpush.bf16.msra.mxu0 0
        %1125 = vmatpush.bf16.msra.mxu0 0
        %1126 = vmatpush.bf16.msra.mxu0 %v1097
        %1127 = vmatpush.bf16.msra.mxu0 %v1095
        %1128 = vmatpush.bf16.msra.mxu0 %v1093
        %1129 = vmatpush.bf16.msra.mxu0 %v1091
        %1130 = vmatmul.bf16.gmra.mxu0 %v1107
        %v1131 = vpop.f32.mrf.mxu0
        %v1132 = vadd.f32 %v1063, %v1131
        %v1133 = vpop.f32.mrf.mxu0
        %1134 = vdwg.mxu0
        %v1135 = vmax.f32 %v1119, 0.0
        %v1136 = vmax.f32 %v1132, 0.0
        %v1137 = vmul.f32 %v1135, %v1135
        %v1138 = vmul.f32 %v1136, %v1136
        %v1139 = vpack.c.bf16 %v1137, %v1137
        %v1140 = vpack.c.bf16 %v1138, %v1138
        %v1141 = vld [vmem:[%s11] sm:$0xf]
        %v1142 = vld [vmem:[%s11 + $0x4] sm:$0xf]
        %v1143 = vld [vmem:[%s11 + $0x8] sm:$0xf]
        %v1144 = vld [vmem:[%s11 + $0xc] sm:$0xf]
        %v1145 = vld [vmem:[%s11 + $0x10] sm:$0xf]
        %v1146 = vld [vmem:[%s11 + $0x14] sm:$0xf]
        %v1147 = vld [vmem:[%s11 + $0x18] sm:$0xf]
        %v1148 = vld [vmem:[%s11 + $0x1c] sm:$0xf]
        %v1149 = vld [vmem:[%s11 + $0x20] sm:$0xf]
        %v1150 = vld [vmem:[%s11 + $0x24] sm:$0xf]
        %v1151 = vld [vmem:[%s11 + $0x28] sm:$0xf]
        %v1152 = vld [vmem:[%s11 + $0x2c] sm:$0xf]
        %v1153 = vld [vmem:[%s11 + $0x30] sm:$0xf]
        %v1154 = vld [vmem:[%s11 + $0x34] sm:$0xf]
        %v1155 = vld [vmem:[%s11 + $0x38] sm:$0xf]
        %v1156 = vld [vmem:[%s11 + $0x3c] sm:$0xf]
        %v1157 = vld [vmem:[%s11 + $0x40] sm:$0xf]
        %v1158 = vld [vmem:[%s11 + $0x44] sm:$0xf]
        %v1159 = vld [vmem:[%s11 + $0x48] sm:$0xf]
        %v1160 = vld [vmem:[%s11 + $0x4c] sm:$0xf]
        %v1161 = vld [vmem:[%s11 + $0x50] sm:$0xf]
        %v1162 = vld [vmem:[%s11 + $0x54] sm:$0xf]
        %v1163 = vld [vmem:[%s11 + $0x58] sm:$0xf]
        %v1164 = vld [vmem:[%s11 + $0x5c] sm:$0xf]
        %v1165 = vld [vmem:[%s11 + $0x60] sm:$0xf]
        %v1166 = vld [vmem:[%s11 + $0x64] sm:$0xf]
        %v1167 = vld [vmem:[%s11 + $0x68] sm:$0xf]
        %v1168 = vld [vmem:[%s11 + $0x6c] sm:$0xf]
        %v1169 = vld [vmem:[%s11 + $0x70] sm:$0xf]
        %v1170 = vld [vmem:[%s11 + $0x74] sm:$0xf]
        %v1171 = vld [vmem:[%s11 + $0x78] sm:$0xf]
        %v1172 = vld [vmem:[%s11 + $0x7c] sm:$0xf]
        %v1205 = vunpack.c.l.b16 %v1141
        %v1206 = vunpack.c.l.b16 %v1142
        %v1207 = vunpack.c.l.b16 %v1143
        %v1208 = vunpack.c.l.b16 %v1144
        %v1209 = vunpack.c.l.b16 %v1145
        %v1210 = vunpack.c.l.b16 %v1146
        %v1211 = vunpack.c.l.b16 %v1147
        %v1212 = vunpack.c.l.b16 %v1148
        %v1213 = vunpack.c.l.b16 %v1149
        %v1214 = vunpack.c.l.b16 %v1150
        %v1215 = vunpack.c.l.b16 %v1151
        %v1216 = vunpack.c.l.b16 %v1152
        %v1217 = vunpack.c.l.b16 %v1153
        %v1218 = vunpack.c.l.b16 %v1154
        %v1219 = vunpack.c.l.b16 %v1155
        %v1220 = vunpack.c.l.b16 %v1156
        %v1221 = vunpack.c.l.b16 %v1157
        %v1222 = vunpack.c.l.b16 %v1158
        %v1223 = vunpack.c.l.b16 %v1159
        %v1224 = vunpack.c.l.b16 %v1160
        %v1225 = vunpack.c.l.b16 %v1161
        %v1226 = vunpack.c.l.b16 %v1162
        %v1227 = vunpack.c.l.b16 %v1163
        %v1228 = vunpack.c.l.b16 %v1164
        %v1229 = vunpack.c.l.b16 %v1165
        %v1230 = vunpack.c.l.b16 %v1166
        %v1231 = vunpack.c.l.b16 %v1167
        %v1232 = vunpack.c.l.b16 %v1168
        %v1233 = vunpack.c.l.b16 %v1169
        %v1234 = vunpack.c.l.b16 %v1170
        %v1235 = vunpack.c.l.b16 %v1171
        %v1236 = vunpack.c.l.b16 %v1172
        %v1237 = vpack.c.b16 %v1206, %v1205
        %v1238 = vpack.c.b16 %v1208, %v1207
        %v1239 = vpack.c.b16 %v1210, %v1209
        %v1240 = vpack.c.b16 %v1212, %v1211
        %v1241 = vpack.c.b16 %v1214, %v1213
        %v1242 = vpack.c.b16 %v1216, %v1215
        %v1243 = vpack.c.b16 %v1218, %v1217
        %v1244 = vpack.c.b16 %v1220, %v1219
        %v1245 = vpack.c.b16 %v1222, %v1221
        %v1246 = vpack.c.b16 %v1224, %v1223
        %v1247 = vpack.c.b16 %v1226, %v1225
        %v1248 = vpack.c.b16 %v1228, %v1227
        %v1249 = vpack.c.b16 %v1230, %v1229
        %v1250 = vpack.c.b16 %v1232, %v1231
        %v1251 = vpack.c.b16 %v1234, %v1233
        %v1252 = vpack.c.b16 %v1236, %v1235
        %1269 = vmatpush.bf16.msra.mxu0 %v1244
        %1270 = vmatpush.bf16.msra.mxu0 %v1243
        %1271 = vmatpush.bf16.msra.mxu0 %v1242
        %1272 = vmatpush.bf16.msra.mxu0 %v1241
        %1273 = vmatpush.bf16.msra.mxu0 %v1240
        %1274 = vmatpush.bf16.msra.mxu0 %v1239
        %1275 = vmatpush.bf16.msra.mxu0 %v1238
        %1276 = vmatpush.bf16.msra.mxu0 %v1237
        %1277 = vmatmul.bf16.gmra.mxu0 %v1139
        %v1278 = vpop.f32.mrf.mxu0
        %v1279 = vadd.f32 0.0, %v1278
        %v1280 = vpop.f32.mrf.mxu0
        %1281 = vdwg.mxu0
        %1282 = vmatpush.bf16.msra.mxu0 %v1252
        %1283 = vmatpush.bf16.msra.mxu0 %v1251
        %1284 = vmatpush.bf16.msra.mxu0 %v1250
        %1285 = vmatpush.bf16.msra.mxu0 %v1249
        %1286 = vmatpush.bf16.msra.mxu0 %v1248
        %1287 = vmatpush.bf16.msra.mxu0 %v1247
        %1288 = vmatpush.bf16.msra.mxu0 %v1246
        %1289 = vmatpush.bf16.msra.mxu0 %v1245
        %1290 = vmatmul.bf16.gmra.mxu0 %v1140
        %v1291 = vpop.f32.mrf.mxu0
        %v1292 = vadd.f32 %v1279, %v1291
        %v1293 = vpop.f32.mrf.mxu0
        %1294 = vdwg.mxu0
        %v1295 = vadd.f32 %v1024, %v1292
        %v1296 = vld [vmem:[%s12] sm:$0x1]
        %v1298 = vperm.slane %v1296, 0
        %v1300 = vadd.f32 %v1295, %v1298
        %1301 = vst.msk [vmem:[%s457] sm:$0xff] %vm474, %v1300
        %s1302 = sand.u32 %s323, 1
        %s1303 = scalar_lea.sflag [#allocation4], %s1302
        %s1304 = sand.u32 %s323, 1
        %s1305 = smul.addr %s1304, 8
        %s1306 = scalar_lea.vmem [#allocation3], %s1305
        // Predicated region
        $region73: #{ella_forward.9} parent=71 // pred_check
          %p1307 = pneg %p333
        $region74: #{ella_forward.9} parent=71 // pred_check_branch
          %1309 = sbr.rel (%p1307) target = $region76
        $region75: #{ella_forward.9} parent=71 // pred_region
          %1311 = vsyncadd %s1303, 0
          %s1312 = smul.addr %s27, 8
          %s1313 = scalar_lea.hbm %s13, %s1312
          %s1315 = sshll.u32 %s1306, 4
          %s1316 = int_to_ptr.vmem [resolvable:$true] %s1315
          %s1317 = sshll.u32 %s1313, 4
          %s1318 = int_to_ptr.hbm [resolvable:$true] %s1317
          %1320 = dma.vmem_to_hbm [thread:$0]  %s1316, 128, %s1318, %s1303
        $region76: #{ella_forward.9} parent=71 // pred_fallthru
          _
      $region72: #{ella_forward.9} parent=5 // pred_fallthru
        _
      %p1321 = scmp.le.s32.totalorder 2, %s22
      // Predicated region
      $region77: #{ella_forward.9} parent=5 // pred_check
        %p1322 = pneg %p1321
      $region78: #{ella_forward.9} parent=5 // pred_check_branch
        %1324 = sbr.rel (%p1322) target = $region80
      $region79: #{ella_forward.9} parent=5 // pred_region
        %s1325 = ssub.s32 %s22, 2
        // Predicated region
        $region81: #{ella_forward.9} parent=79 // pred_check
          %p1326 = pneg %p339
        $region82: #{ella_forward.9} parent=79 // pred_check_branch
          %1328 = sbr.rel (%p1326) target = $region84
        $region83: #{ella_forward.9} parent=79 // pred_region
          %s1329 = sand.u32 %s324, 1
          %s1330 = scalar_lea.sflag [#allocation4], %s1329
          %s1331 = sand.u32 %s324, 1
          %s1332 = smul.addr %s1331, 8
          %s1333 = scalar_lea.vmem [#allocation3], %s1332
          %1335 = dma.done %s1330, 128
        $region84: #{ella_forward.9} parent=79 // pred_fallthru
          _
      $region80: #{ella_forward.9} parent=5 // pred_fallthru
        _
    $region6: #{ella_forward.9} parent=1 // loop_footer
      %s26 = sadd.s32 1, %s22
    $region7: #{ella_forward.9} parent=1 // loop_footer_branch
      %21 = sbr.rel target = $region3
    $region8: #{ella_forward.9} parent=1 // loop_exit
      _
    %1336 = vsyncpa [#allocation4], 1
    %s1337 = scalar_lea.sflag [#allocation4], 1
    %1338 = vsyncpa %s1337, 1

</llo_original>
